<compile_context>
chip_gen: v5e
topology: v5e:2x2
jax: 0.10.0
libtpu: 0.0.40
codegen_flags: <defaults>
</compile_context>

<pallas_src>
import jax
import jax.numpy as jnp
from jax.experimental import pallas as pl
from jax.experimental.pallas import tpu as pltpu


# ----------------------------------------------------------------------------
# Fused Pallas kernel: feature extraction + global max + classifier MLP
# ----------------------------------------------------------------------------
def _disc_kernel(x_ref, *args):
    """args = (w_i, scale_i, shift_i) * L, (w1,s1,b1,w2,s2,b2,w3,b3), out_ref, acc_ref."""
    acc_ref = args[-1]                      # VMEM scratch [8, C_last] f32
    out_ref = args[-2]                      # [1, 1] logits block
    param_refs = args[:-2]
    n_feat = (len(param_refs) - 8) // 3
    feat_refs = param_refs[: 3 * n_feat]
    (w1c, s1c, b1c, w2c, s2c, b2c, w3c, b3c) = param_refs[3 * n_feat:]

    t = pl.program_id(1)
    num_t = pl.num_programs(1)

    h = x_ref[...]                          # [TILE_N, D] f32
    for i in range(n_feat):
        w_ref = feat_refs[3 * i]
        scale = feat_refs[3 * i + 1][...]   # [1, C_out] f32
        shift = feat_refs[3 * i + 2][...]   # [1, C_out] f32
        if w_ref.shape[0] < 8:
            # Tiny contraction (point_dim=3): VPU broadcast-FMAs, skip the MXU.
            wf = w_ref[...].astype(jnp.float32)
            acc = h[:, 0:1] * wf[0:1, :]
            for k in range(1, w_ref.shape[0]):
                acc = acc + h[:, k:k + 1] * wf[k:k + 1, :]
            h = acc
        else:
            h = jnp.dot(h.astype(jnp.bfloat16), w_ref[...],
                        preferred_element_type=jnp.float32)
        h = h * scale + shift               # fused eval-mode BN + bias (f32)
        h = jnp.where(h >= 0, h, 0.2 * h)   # LeakyReLU(0.2)

    # Two-level max over points: [TILE_N, C] -> [8, C] stays on the VPU
    # (reshape keeps the (8, 128) tiling, reduce is over the major axis).
    tn, c = h.shape
    part = jnp.max(h.reshape(tn // 8, 8, c), axis=0)   # [8, C]

    @pl.when(t == 0)
    def _():
        acc_ref[...] = part

    @pl.when(t > 0)
    def _():
        acc_ref[...] = jnp.maximum(acc_ref[...], part)

    # Last tile for this batch: finish the reduce and run the classifier MLP.
    @pl.when(t == num_t - 1)
    def _():
        g = jnp.max(acc_ref[...], axis=0, keepdims=True)            # [1, C] (single XLU reduce)
        h1 = jnp.dot(g.astype(jnp.bfloat16), w1c[...],
                     preferred_element_type=jnp.float32) * s1c[...] + b1c[...]
        h1 = jnp.where(h1 >= 0, h1, 0.2 * h1)
        h2 = jnp.dot(h1.astype(jnp.bfloat16), w2c[...],
                     preferred_element_type=jnp.float32) * s2c[...] + b2c[...]
        h2 = jnp.where(h2 >= 0, h2, 0.2 * h2)
        out_ref[...] = jnp.dot(h2.astype(jnp.bfloat16), w3c[...],
                               preferred_element_type=jnp.float32) + b3c[...]


# ----------------------------------------------------------------------------
# Wrapper
# ----------------------------------------------------------------------------
def point_cloud_discriminator(x, feat_params, clf_params, tile_n=None):
    """x: [B, N, point_dim] -> logits [B, 1]."""
    B, N, D = x.shape
    if tile_n is None:
        tile_n = min(N, 1024)               # big tiles amortize per-step overhead
    assert N % tile_n == 0 and tile_n % 8 == 0, (N, tile_n)
    num_tiles = N // tile_n

    in_specs = [pl.BlockSpec((None, tile_n, D), lambda b, t: (b, t, 0))]
    args = [x]
    for (w, scale, shift) in feat_params:
        in_specs += [pl.BlockSpec(w.shape, lambda b, t: (0, 0)),
                     pl.BlockSpec(scale.shape, lambda b, t: (0, 0)),
                     pl.BlockSpec(shift.shape, lambda b, t: (0, 0))]
        args += [w, scale, shift]
    (w1, s1, b1), (w2, s2, b2), (w3, b3) = clf_params
    for p in (w1, s1, b1, w2, s2, b2, w3, b3):
        in_specs.append(pl.BlockSpec(p.shape, lambda b, t: (0, 0)))
        args.append(p)

    c_last = feat_params[-1][0].shape[1]

    # TODO(synk): if B == 1 on v7x, make the tile axis the "parallel" one (with
    # per-core partial maxes) so both TensorCores get work.
    out = pl.pallas_call(
        _disc_kernel,
        out_shape=jax.ShapeDtypeStruct((B, 1, 1), jnp.float32),
        grid=(B, num_tiles),
        in_specs=in_specs,
        out_specs=pl.BlockSpec((None, 1, 1), lambda b, t: (b, 0, 0)),
        scratch_shapes=[pltpu.VMEM((8, c_last), jnp.float32)],
        compiler_params=pltpu.CompilerParams(
            dimension_semantics=("parallel", "arbitrary")),
    )(*args)
    return out.reshape(B, 1)


# ----------------------------------------------------------------------------
# Deterministic parameter init (shapes follow the PyTorch __init__)
# ----------------------------------------------------------------------------
def _fused_affine(key, in_dim, out_dim, eps=1e-5, w_dtype=jnp.bfloat16):
    """Linear/Conv1d(k=1) weight + bias with eval-mode BatchNorm folded in."""
    k1, k2, k3, k4 = jax.random.split(key, 4)
    w = jax.random.normal(k1, (in_dim, out_dim), jnp.float32) * (in_dim ** -0.5)
    b = 0.1 * jax.random.normal(k2, (out_dim,), jnp.float32)
    gamma = 1.0 + 0.1 * jax.random.normal(k3, (out_dim,), jnp.float32)
    beta = 0.1 * jax.random.normal(k4, (out_dim,), jnp.float32)
    mean = jnp.zeros((out_dim,), jnp.float32)   # running stats (eval-mode BN)
    var = jnp.ones((out_dim,), jnp.float32)
    scale = gamma / jnp.sqrt(var + eps)
    shift = beta - mean * scale + b * scale
    return w.astype(w_dtype), scale.reshape(1, out_dim), shift.reshape(1, out_dim)


def init_params(key, point_dim, hidden_dims):
    feat_params = []
    in_dim = point_dim
    for li, out_dim in enumerate(hidden_dims):
        key, sub = jax.random.split(key)
        # First layer (K = point_dim = 3) runs as f32 VPU FMAs in the kernel;
        # the rest feed the MXU in bf16.
        w_dtype = jnp.float32 if in_dim < 8 else jnp.bfloat16
        feat_params.append(_fused_affine(sub, in_dim, out_dim, w_dtype=w_dtype))
        in_dim = out_dim

    # classifier: global_feat_dim -> 512 -> 256 -> 1 (as hard-coded in module)
    gfd = hidden_dims[-1]
    key, k1, k2, k3, k4 = jax.random.split(key, 5)
    l1 = _fused_affine(k1, gfd, 512)
    l2 = _fused_affine(k2, 512, 256)
    w3 = (jax.random.normal(k3, (256, 1), jnp.float32) * (256 ** -0.5)).astype(jnp.bfloat16)
    b3 = 0.1 * jax.random.normal(k4, (1, 1), jnp.float32)
    clf_params = (l1, l2, (w3, b3))
    return feat_params, clf_params


# ----------------------------------------------------------------------------
# Pure-JAX reference (same bf16-matmul / f32-accumulate math) for verification
# ----------------------------------------------------------------------------
def reference_forward(x, feat_params, clf_params):
    h = x
    for (w, scale, shift) in feat_params:
        if w.shape[0] < 8:
            h = jnp.einsum("bnd,de->bne", h, w.astype(jnp.float32),
                           precision=jax.lax.Precision.HIGHEST)
        else:
            h = jnp.einsum("bnd,de->bne", h.astype(jnp.bfloat16), w,
                           preferred_element_type=jnp.float32)
        h = h * scale + shift
        h = jnp.where(h >= 0, h, 0.2 * h)
    g = jnp.max(h, axis=1)                      # global max over points
    (w1, s1, b1), (w2, s2, b2), (w3, b3) = clf_params
    g = jnp.dot(g.astype(jnp.bfloat16), w1, preferred_element_type=jnp.float32) * s1 + b1
    g = jnp.where(g >= 0, g, 0.2 * g)
    g = jnp.dot(g.astype(jnp.bfloat16), w2, preferred_element_type=jnp.float32) * s2 + b2
    g = jnp.where(g >= 0, g, 0.2 * g)
    return jnp.dot(g.astype(jnp.bfloat16), w3, preferred_element_type=jnp.float32) + b3


# ----------------------------------------------------------------------------
if __name__ == "__main__":
    # Small shapes consistent with the module's forward:
    # x: [batch, num_points, point_dim]
    POINT_DIM = 3
    NUM_POINTS = 256
    BATCH = 2
    HIDDEN_DIMS = [32, 64, 128, 128, 256]

    key = jax.random.PRNGKey(0)
    key, kx, kp = jax.random.split(key, 3)
    x = jax.random.normal(kx, (BATCH, NUM_POINTS, POINT_DIM), jnp.float32)

    feat_params, clf_params = init_params(kp, POINT_DIM, HIDDEN_DIMS)

    # TODO(synk): BatchNorm uses eval-mode running statistics (mean=0, var=1)
    # folded into an affine; training-mode batch statistics are not computed.

    logits = point_cloud_discriminator(x, feat_params, clf_params)
    logits = jax.block_until_ready(logits)

    ref = reference_forward(x, feat_params, clf_params)
    assert logits.shape == (BATCH, 1), logits.shape
    assert jnp.allclose(logits, ref, atol=2e-2, rtol=2e-2), (logits, ref)

    print("KERNEL_OK")
</pallas_src>

<mosaic_0001>
module attributes {stable_mosaic.version = 11 : i64} {
  func.func @_disc_kernel(%arg0: i32, %arg1: i32, %arg2: memref<1x256x3xf32, #tpu.memory_space<vmem>>, %arg3: memref<3x32xf32, #tpu.memory_space<vmem>>, %arg4: memref<1x32xf32, #tpu.memory_space<vmem>>, %arg5: memref<1x32xf32, #tpu.memory_space<vmem>>, %arg6: memref<32x64xbf16, #tpu.memory_space<vmem>>, %arg7: memref<1x64xf32, #tpu.memory_space<vmem>>, %arg8: memref<1x64xf32, #tpu.memory_space<vmem>>, %arg9: memref<64x128xbf16, #tpu.memory_space<vmem>>, %arg10: memref<1x128xf32, #tpu.memory_space<vmem>>, %arg11: memref<1x128xf32, #tpu.memory_space<vmem>>, %arg12: memref<128x128xbf16, #tpu.memory_space<vmem>>, %arg13: memref<1x128xf32, #tpu.memory_space<vmem>>, %arg14: memref<1x128xf32, #tpu.memory_space<vmem>>, %arg15: memref<128x256xbf16, #tpu.memory_space<vmem>>, %arg16: memref<1x256xf32, #tpu.memory_space<vmem>>, %arg17: memref<1x256xf32, #tpu.memory_space<vmem>>, %arg18: memref<256x512xbf16, #tpu.memory_space<vmem>>, %arg19: memref<1x512xf32, #tpu.memory_space<vmem>>, %arg20: memref<1x512xf32, #tpu.memory_space<vmem>>, %arg21: memref<512x256xbf16, #tpu.memory_space<vmem>>, %arg22: memref<1x256xf32, #tpu.memory_space<vmem>>, %arg23: memref<1x256xf32, #tpu.memory_space<vmem>>, %arg24: memref<256x1xbf16, #tpu.memory_space<vmem>>, %arg25: memref<1x1xf32, #tpu.memory_space<vmem>>, %arg26: memref<1x1x1xf32, #tpu.memory_space<vmem>>, %arg27: memref<8x256xf32, #tpu.memory_space<vmem>>) attributes {dimension_semantics = [#tpu.dimension_semantics<parallel>, #tpu.dimension_semantics<arbitrary>], iteration_bounds = array<i64: 2, 1>, scalar_prefetch = 0 : i64, scratch_operands = 1 : i64, tpu.core_type = #tpu.core_type<tc>, window_params = [{transform_indices = @transform_0, window_bounds = array<i64: 1, 256, 3>}, {pipeline_mode = #tpu.pipeline_mode<synchronous>, transform_indices = @transform_1, window_bounds = array<i64: 3, 32>}, {pipeline_mode = #tpu.pipeline_mode<synchronous>, transform_indices = @transform_2, window_bounds = array<i64: 1, 32>}, {pipeline_mode = #tpu.pipeline_mode<synchronous>, transform_indices = @transform_3, window_bounds = array<i64: 1, 32>}, {pipeline_mode = #tpu.pipeline_mode<synchronous>, transform_indices = @transform_4, window_bounds = array<i64: 32, 64>}, {pipeline_mode = #tpu.pipeline_mode<synchronous>, transform_indices = @transform_5, window_bounds = array<i64: 1, 64>}, {pipeline_mode = #tpu.pipeline_mode<synchronous>, transform_indices = @transform_6, window_bounds = array<i64: 1, 64>}, {pipeline_mode = #tpu.pipeline_mode<synchronous>, transform_indices = @transform_7, window_bounds = array<i64: 64, 128>}, {pipeline_mode = #tpu.pipeline_mode<synchronous>, transform_indices = @transform_8, window_bounds = array<i64: 1, 128>}, {pipeline_mode = #tpu.pipeline_mode<synchronous>, transform_indices = @transform_9, window_bounds = array<i64: 1, 128>}, {pipeline_mode = #tpu.pipeline_mode<synchronous>, transform_indices = @transform_10, window_bounds = array<i64: 128, 128>}, {pipeline_mode = #tpu.pipeline_mode<synchronous>, transform_indices = @transform_11, window_bounds = array<i64: 1, 128>}, {pipeline_mode = #tpu.pipeline_mode<synchronous>, transform_indices = @transform_12, window_bounds = array<i64: 1, 128>}, {pipeline_mode = #tpu.pipeline_mode<synchronous>, transform_indices = @transform_13, window_bounds = array<i64: 128, 256>}, {pipeline_mode = #tpu.pipeline_mode<synchronous>, transform_indices = @transform_14, window_bounds = array<i64: 1, 256>}, {pipeline_mode = #tpu.pipeline_mode<synchronous>, transform_indices = @transform_15, window_bounds = array<i64: 1, 256>}, {pipeline_mode = #tpu.pipeline_mode<synchronous>, transform_indices = @transform_16, window_bounds = array<i64: 256, 512>}, {pipeline_mode = #tpu.pipeline_mode<synchronous>, transform_indices = @transform_17, window_bounds = array<i64: 1, 512>}, {pipeline_mode = #tpu.pipeline_mode<synchronous>, transform_indices = @transform_18, window_bounds = array<i64: 1, 512>}, {pipeline_mode = #tpu.pipeline_mode<synchronous>, transform_indices = @transform_19, window_bounds = array<i64: 512, 256>}, {pipeline_mode = #tpu.pipeline_mode<synchronous>, transform_indices = @transform_20, window_bounds = array<i64: 1, 256>}, {pipeline_mode = #tpu.pipeline_mode<synchronous>, transform_indices = @transform_21, window_bounds = array<i64: 1, 256>}, {pipeline_mode = #tpu.pipeline_mode<synchronous>, transform_indices = @transform_22, window_bounds = array<i64: 256, 1>}, {pipeline_mode = #tpu.pipeline_mode<synchronous>, transform_indices = @transform_23, window_bounds = array<i64: 1, 1>}, {transform_indices = @transform_24, window_bounds = array<i64: 1, 1, 1>}]} {
    %c0 = arith.constant 0 : index
    %c0_0 = arith.constant 0 : index
    %c0_1 = arith.constant 0 : index
    %0 = vector.load %arg2[%c0, %c0_0, %c0_1] : memref<1x256x3xf32, #tpu.memory_space<vmem>>, vector<1x256x3xf32>
    %1 = vector.shape_cast %0 : vector<1x256x3xf32> to vector<256x3xf32>
    %c0_2 = arith.constant 0 : index
    %c0_3 = arith.constant 0 : index
    %2 = vector.load %arg4[%c0_2, %c0_3] : memref<1x32xf32, #tpu.memory_space<vmem>>, vector<1x32xf32>
    %c0_4 = arith.constant 0 : index
    %c0_5 = arith.constant 0 : index
    %3 = vector.load %arg5[%c0_4, %c0_5] : memref<1x32xf32, #tpu.memory_space<vmem>>, vector<1x32xf32>
    %c0_6 = arith.constant 0 : index
    %c0_7 = arith.constant 0 : index
    %4 = vector.load %arg3[%c0_6, %c0_7] : memref<3x32xf32, #tpu.memory_space<vmem>>, vector<3x32xf32>
    %5 = vector.extract_strided_slice %1 {offsets = [0, 0], sizes = [256, 1], strides = [1, 1]} : vector<256x3xf32> to vector<256x1xf32>
    %6 = vector.extract_strided_slice %4 {offsets = [0, 0], sizes = [1, 32], strides = [1, 1]} : vector<3x32xf32> to vector<1x32xf32>
    %7 = vector.broadcast %5 : vector<256x1xf32> to vector<256x32xf32>
    %8 = vector.broadcast %6 : vector<1x32xf32> to vector<256x32xf32>
    %9 = arith.mulf %7, %8 : vector<256x32xf32>
    %10 = vector.extract_strided_slice %1 {offsets = [0, 1], sizes = [256, 1], strides = [1, 1]} : vector<256x3xf32> to vector<256x1xf32>
    %11 = vector.extract_strided_slice %4 {offsets = [1, 0], sizes = [1, 32], strides = [1, 1]} : vector<3x32xf32> to vector<1x32xf32>
    %12 = vector.broadcast %10 : vector<256x1xf32> to vector<256x32xf32>
    %13 = vector.broadcast %11 : vector<1x32xf32> to vector<256x32xf32>
    %14 = arith.mulf %12, %13 : vector<256x32xf32>
    %15 = arith.addf %9, %14 : vector<256x32xf32>
    %16 = vector.extract_strided_slice %1 {offsets = [0, 2], sizes = [256, 1], strides = [1, 1]} : vector<256x3xf32> to vector<256x1xf32>
    %17 = vector.extract_strided_slice %4 {offsets = [2, 0], sizes = [1, 32], strides = [1, 1]} : vector<3x32xf32> to vector<1x32xf32>
    %18 = vector.broadcast %16 : vector<256x1xf32> to vector<256x32xf32>
    %19 = vector.broadcast %17 : vector<1x32xf32> to vector<256x32xf32>
    %20 = arith.mulf %18, %19 : vector<256x32xf32>
    %21 = arith.addf %15, %20 : vector<256x32xf32>
    %22 = vector.broadcast %2 : vector<1x32xf32> to vector<256x32xf32>
    %23 = arith.mulf %21, %22 : vector<256x32xf32>
    %24 = vector.broadcast %3 : vector<1x32xf32> to vector<256x32xf32>
    %25 = arith.addf %23, %24 : vector<256x32xf32>
    %cst = arith.constant 0.000000e+00 : f32
    %26 = vector.broadcast %cst : f32 to vector<256x32xf32>
    %27 = arith.cmpf oge, %25, %26 : vector<256x32xf32>
    %cst_8 = arith.constant 2.000000e-01 : f32
    %28 = vector.broadcast %cst_8 : f32 to vector<256x32xf32>
    %29 = arith.mulf %28, %25 : vector<256x32xf32>
    %30 = arith.select %27, %25, %29 : vector<256x32xi1>, vector<256x32xf32>
    %c0_9 = arith.constant 0 : index
    %c0_10 = arith.constant 0 : index
    %31 = vector.load %arg7[%c0_9, %c0_10] : memref<1x64xf32, #tpu.memory_space<vmem>>, vector<1x64xf32>
    %c0_11 = arith.constant 0 : index
    %c0_12 = arith.constant 0 : index
    %32 = vector.load %arg8[%c0_11, %c0_12] : memref<1x64xf32, #tpu.memory_space<vmem>>, vector<1x64xf32>
    %33 = arith.truncf %30 : vector<256x32xf32> to vector<256x32xbf16>
    %c0_13 = arith.constant 0 : index
    %c0_14 = arith.constant 0 : index
    %34 = vector.load %arg6[%c0_13, %c0_14] : memref<32x64xbf16, #tpu.memory_space<vmem>>, vector<32x64xbf16>
    %cst_15 = arith.constant dense<0.000000e+00> : vector<256x64xf32>
    %35 = tpu.matmul %33, %34, %cst_15 {dimension_numbers = #tpu.dot_dimension_numbers<[1], [0], [0], [1], [0, 0, 1, 1], [], []>} : vector<256x32xbf16>, vector<32x64xbf16>, vector<256x64xf32> -> vector<256x64xf32>
    %36 = vector.broadcast %31 : vector<1x64xf32> to vector<256x64xf32>
    %37 = arith.mulf %35, %36 : vector<256x64xf32>
    %38 = vector.broadcast %32 : vector<1x64xf32> to vector<256x64xf32>
    %39 = arith.addf %37, %38 : vector<256x64xf32>
    %cst_16 = arith.constant 0.000000e+00 : f32
    %40 = vector.broadcast %cst_16 : f32 to vector<256x64xf32>
    %41 = arith.cmpf oge, %39, %40 : vector<256x64xf32>
    %cst_17 = arith.constant 2.000000e-01 : f32
    %42 = vector.broadcast %cst_17 : f32 to vector<256x64xf32>
    %43 = arith.mulf %42, %39 : vector<256x64xf32>
    %44 = arith.select %41, %39, %43 : vector<256x64xi1>, vector<256x64xf32>
    %c0_18 = arith.constant 0 : index
    %c0_19 = arith.constant 0 : index
    %45 = vector.load %arg10[%c0_18, %c0_19] : memref<1x128xf32, #tpu.memory_space<vmem>>, vector<1x128xf32>
    %c0_20 = arith.constant 0 : index
    %c0_21 = arith.constant 0 : index
    %46 = vector.load %arg11[%c0_20, %c0_21] : memref<1x128xf32, #tpu.memory_space<vmem>>, vector<1x128xf32>
    %47 = arith.truncf %44 : vector<256x64xf32> to vector<256x64xbf16>
    %c0_22 = arith.constant 0 : index
    %c0_23 = arith.constant 0 : index
    %48 = vector.load %arg9[%c0_22, %c0_23] : memref<64x128xbf16, #tpu.memory_space<vmem>>, vector<64x128xbf16>
    %cst_24 = arith.constant dense<0.000000e+00> : vector<256x128xf32>
    %49 = tpu.matmul %47, %48, %cst_24 {dimension_numbers = #tpu.dot_dimension_numbers<[1], [0], [0], [1], [0, 0, 1, 1], [], []>} : vector<256x64xbf16>, vector<64x128xbf16>, vector<256x128xf32> -> vector<256x128xf32>
    %50 = vector.broadcast %45 : vector<1x128xf32> to vector<256x128xf32>
    %51 = arith.mulf %49, %50 : vector<256x128xf32>
    %52 = vector.broadcast %46 : vector<1x128xf32> to vector<256x128xf32>
    %53 = arith.addf %51, %52 : vector<256x128xf32>
    %cst_25 = arith.constant 0.000000e+00 : f32
    %54 = vector.broadcast %cst_25 : f32 to vector<256x128xf32>
    %55 = arith.cmpf oge, %53, %54 : vector<256x128xf32>
    %cst_26 = arith.constant 2.000000e-01 : f32
    %56 = vector.broadcast %cst_26 : f32 to vector<256x128xf32>
    %57 = arith.mulf %56, %53 : vector<256x128xf32>
    %58 = arith.select %55, %53, %57 : vector<256x128xi1>, vector<256x128xf32>
    %c0_27 = arith.constant 0 : index
    %c0_28 = arith.constant 0 : index
    %59 = vector.load %arg13[%c0_27, %c0_28] : memref<1x128xf32, #tpu.memory_space<vmem>>, vector<1x128xf32>
    %c0_29 = arith.constant 0 : index
    %c0_30 = arith.constant 0 : index
    %60 = vector.load %arg14[%c0_29, %c0_30] : memref<1x128xf32, #tpu.memory_space<vmem>>, vector<1x128xf32>
    %61 = arith.truncf %58 : vector<256x128xf32> to vector<256x128xbf16>
    %c0_31 = arith.constant 0 : index
    %c0_32 = arith.constant 0 : index
    %62 = vector.load %arg12[%c0_31, %c0_32] : memref<128x128xbf16, #tpu.memory_space<vmem>>, vector<128x128xbf16>
    %cst_33 = arith.constant dense<0.000000e+00> : vector<256x128xf32>
    %63 = tpu.matmul %61, %62, %cst_33 {dimension_numbers = #tpu.dot_dimension_numbers<[1], [0], [0], [1], [0, 0, 1, 1], [], []>} : vector<256x128xbf16>, vector<128x128xbf16>, vector<256x128xf32> -> vector<256x128xf32>
    %64 = vector.broadcast %59 : vector<1x128xf32> to vector<256x128xf32>
    %65 = arith.mulf %63, %64 : vector<256x128xf32>
    %66 = vector.broadcast %60 : vector<1x128xf32> to vector<256x128xf32>
    %67 = arith.addf %65, %66 : vector<256x128xf32>
    %cst_34 = arith.constant 0.000000e+00 : f32
    %68 = vector.broadcast %cst_34 : f32 to vector<256x128xf32>
    %69 = arith.cmpf oge, %67, %68 : vector<256x128xf32>
    %cst_35 = arith.constant 2.000000e-01 : f32
    %70 = vector.broadcast %cst_35 : f32 to vector<256x128xf32>
    %71 = arith.mulf %70, %67 : vector<256x128xf32>
    %72 = arith.select %69, %67, %71 : vector<256x128xi1>, vector<256x128xf32>
    %c0_36 = arith.constant 0 : index
    %c0_37 = arith.constant 0 : index
    %73 = vector.load %arg16[%c0_36, %c0_37] : memref<1x256xf32, #tpu.memory_space<vmem>>, vector<1x256xf32>
    %c0_38 = arith.constant 0 : index
    %c0_39 = arith.constant 0 : index
    %74 = vector.load %arg17[%c0_38, %c0_39] : memref<1x256xf32, #tpu.memory_space<vmem>>, vector<1x256xf32>
    %75 = arith.truncf %72 : vector<256x128xf32> to vector<256x128xbf16>
    %c0_40 = arith.constant 0 : index
    %c0_41 = arith.constant 0 : index
    %76 = vector.load %arg15[%c0_40, %c0_41] : memref<128x256xbf16, #tpu.memory_space<vmem>>, vector<128x256xbf16>
    %cst_42 = arith.constant dense<0.000000e+00> : vector<256x256xf32>
    %77 = tpu.matmul %75, %76, %cst_42 {dimension_numbers = #tpu.dot_dimension_numbers<[1], [0], [0], [1], [0, 0, 1, 1], [], []>} : vector<256x128xbf16>, vector<128x256xbf16>, vector<256x256xf32> -> vector<256x256xf32>
    %78 = vector.broadcast %73 : vector<1x256xf32> to vector<256x256xf32>
    %79 = arith.mulf %77, %78 : vector<256x256xf32>
    %80 = vector.broadcast %74 : vector<1x256xf32> to vector<256x256xf32>
    %81 = arith.addf %79, %80 : vector<256x256xf32>
    %cst_43 = arith.constant 0.000000e+00 : f32
    %82 = vector.broadcast %cst_43 : f32 to vector<256x256xf32>
    %83 = arith.cmpf oge, %81, %82 : vector<256x256xf32>
    %cst_44 = arith.constant 2.000000e-01 : f32
    %84 = vector.broadcast %cst_44 : f32 to vector<256x256xf32>
    %85 = arith.mulf %84, %81 : vector<256x256xf32>
    %86 = arith.select %83, %81, %85 : vector<256x256xi1>, vector<256x256xf32>
    %87 = vector.shape_cast %86 : vector<256x256xf32> to vector<32x8x256xf32>
    %cst_45 = arith.constant dense<0xFF800000> : vector<8x256xf32>
    %88 = vector.multi_reduction <maximumf>, %87, %cst_45 [0] : vector<32x8x256xf32> to vector<8x256xf32>
    %c0_i32 = arith.constant 0 : i32
    %89 = arith.cmpi eq, %arg1, %c0_i32 : i32
    %90 = arith.extui %89 : i1 to i32
    %c0_i32_46 = arith.constant 0 : i32
    %91 = arith.cmpi ne, %90, %c0_i32_46 : i32
    scf.if %91 {
      %c0_51 = arith.constant 0 : index
      %c0_52 = arith.constant 0 : index
      %98 = vector.load %arg27[%c0_51, %c0_52] : memref<8x256xf32, #tpu.memory_space<vmem>>, vector<8x256xf32>
      tpu.vector_store %arg27[%c0_51, %c0_52], %88 {strides = array<i32>} : memref<8x256xf32, #tpu.memory_space<vmem>>, vector<8x256xf32>,
    } else {
    }
    %c0_i32_47 = arith.constant 0 : i32
    %92 = arith.cmpi sgt, %arg1, %c0_i32_47 : i32
    %93 = arith.extui %92 : i1 to i32
    %c0_i32_48 = arith.constant 0 : i32
    %94 = arith.cmpi ne, %93, %c0_i32_48 : i32
    scf.if %94 {
      %c0_51 = arith.constant 0 : index
      %c0_52 = arith.constant 0 : index
      %98 = vector.load %arg27[%c0_51, %c0_52] : memref<8x256xf32, #tpu.memory_space<vmem>>, vector<8x256xf32>
      %99 = arith.maximumf %98, %88 : vector<8x256xf32>
      %c0_53 = arith.constant 0 : index
      %c0_54 = arith.constant 0 : index
      %100 = vector.load %arg27[%c0_53, %c0_54] : memref<8x256xf32, #tpu.memory_space<vmem>>, vector<8x256xf32>
      tpu.vector_store %arg27[%c0_53, %c0_54], %99 {strides = array<i32>} : memref<8x256xf32, #tpu.memory_space<vmem>>, vector<8x256xf32>,
    } else {
    }
    %c0_i32_49 = arith.constant 0 : i32
    %95 = arith.cmpi eq, %arg1, %c0_i32_49 : i32
    %96 = arith.extui %95 : i1 to i32
    %c0_i32_50 = arith.constant 0 : i32
    %97 = arith.cmpi ne, %96, %c0_i32_50 : i32
    scf.if %97 {
      %c0_51 = arith.constant 0 : index
      %c0_52 = arith.constant 0 : index
      %98 = vector.load %arg27[%c0_51, %c0_52] : memref<8x256xf32, #tpu.memory_space<vmem>>, vector<8x256xf32>
      %cst_53 = arith.constant dense<0xFF800000> : vector<256xf32>
      %99 = vector.multi_reduction <maximumf>, %98, %cst_53 [0] : vector<8x256xf32> to vector<256xf32>
      %100 = vector.shape_cast %99 : vector<256xf32> to vector<1x256xf32>
      %101 = arith.truncf %100 : vector<1x256xf32> to vector<1x256xbf16>
      %c0_54 = arith.constant 0 : index
      %c0_55 = arith.constant 0 : index
      %102 = vector.load %arg18[%c0_54, %c0_55] : memref<256x512xbf16, #tpu.memory_space<vmem>>, vector<256x512xbf16>
      %cst_56 = arith.constant dense<0.000000e+00> : vector<1x512xf32>
      %103 = tpu.matmul %101, %102, %cst_56 {dimension_numbers = #tpu.dot_dimension_numbers<[1], [0], [0], [1], [0, 0, 1, 1], [], []>} : vector<1x256xbf16>, vector<256x512xbf16>, vector<1x512xf32> -> vector<1x512xf32>
      %c0_57 = arith.constant 0 : index
      %c0_58 = arith.constant 0 : index
      %104 = vector.load %arg19[%c0_57, %c0_58] : memref<1x512xf32, #tpu.memory_space<vmem>>, vector<1x512xf32>
      %105 = arith.mulf %103, %104 : vector<1x512xf32>
      %c0_59 = arith.constant 0 : index
      %c0_60 = arith.constant 0 : index
      %106 = vector.load %arg20[%c0_59, %c0_60] : memref<1x512xf32, #tpu.memory_space<vmem>>, vector<1x512xf32>
      %107 = arith.addf %105, %106 : vector<1x512xf32>
      %cst_61 = arith.constant 0.000000e+00 : f32
      %108 = vector.broadcast %cst_61 : f32 to vector<1x512xf32>
      %109 = arith.cmpf oge, %107, %108 : vector<1x512xf32>
      %cst_62 = arith.constant 2.000000e-01 : f32
      %110 = vector.broadcast %cst_62 : f32 to vector<1x512xf32>
      %111 = arith.mulf %110, %107 : vector<1x512xf32>
      %112 = arith.select %109, %107, %111 : vector<1x512xi1>, vector<1x512xf32>
      %113 = arith.truncf %112 : vector<1x512xf32> to vector<1x512xbf16>
      %c0_63 = arith.constant 0 : index
      %c0_64 = arith.constant 0 : index
      %114 = vector.load %arg21[%c0_63, %c0_64] : memref<512x256xbf16, #tpu.memory_space<vmem>>, vector<512x256xbf16>
      %cst_65 = arith.constant dense<0.000000e+00> : vector<1x256xf32>
      %115 = tpu.matmul %113, %114, %cst_65 {dimension_numbers = #tpu.dot_dimension_numbers<[1], [0], [0], [1], [0, 0, 1, 1], [], []>} : vector<1x512xbf16>, vector<512x256xbf16>, vector<1x256xf32> -> vector<1x256xf32>
      %c0_66 = arith.constant 0 : index
      %c0_67 = arith.constant 0 : index
      %116 = vector.load %arg22[%c0_66, %c0_67] : memref<1x256xf32, #tpu.memory_space<vmem>>, vector<1x256xf32>
      %117 = arith.mulf %115, %116 : vector<1x256xf32>
      %c0_68 = arith.constant 0 : index
      %c0_69 = arith.constant 0 : index
      %118 = vector.load %arg23[%c0_68, %c0_69] : memref<1x256xf32, #tpu.memory_space<vmem>>, vector<1x256xf32>
      %119 = arith.addf %117, %118 : vector<1x256xf32>
      %cst_70 = arith.constant 0.000000e+00 : f32
      %120 = vector.broadcast %cst_70 : f32 to vector<1x256xf32>
      %121 = arith.cmpf oge, %119, %120 : vector<1x256xf32>
      %cst_71 = arith.constant 2.000000e-01 : f32
      %122 = vector.broadcast %cst_71 : f32 to vector<1x256xf32>
      %123 = arith.mulf %122, %119 : vector<1x256xf32>
      %124 = arith.select %121, %119, %123 : vector<1x256xi1>, vector<1x256xf32>
      %125 = arith.truncf %124 : vector<1x256xf32> to vector<1x256xbf16>
      %c0_72 = arith.constant 0 : index
      %c0_73 = arith.constant 0 : index
      %126 = vector.load %arg24[%c0_72, %c0_73] : memref<256x1xbf16, #tpu.memory_space<vmem>>, vector<256x1xbf16>
      %cst_74 = arith.constant dense<0.000000e+00> : vector<1x1xf32>
      %127 = tpu.matmul %125, %126, %cst_74 {dimension_numbers = #tpu.dot_dimension_numbers<[1], [0], [0], [1], [0, 0, 1, 1], [], []>} : vector<1x256xbf16>, vector<256x1xbf16>, vector<1x1xf32> -> vector<1x1xf32>
      %c0_75 = arith.constant 0 : index
      %c0_76 = arith.constant 0 : index
      %128 = vector.load %arg25[%c0_75, %c0_76] : memref<1x1xf32, #tpu.memory_space<vmem>>, vector<1x1xf32>
      %129 = arith.addf %127, %128 : vector<1x1xf32>
      %c0_77 = arith.constant 0 : index
      %c0_78 = arith.constant 0 : index
      %c0_79 = arith.constant 0 : index
      %130 = vector.load %arg26[%c0_77, %c0_78, %c0_79] : memref<1x1x1xf32, #tpu.memory_space<vmem>>, vector<1x1x1xf32>
      %131 = vector.shape_cast %130 : vector<1x1x1xf32> to vector<1x1xf32>
      %132 = vector.shape_cast %129 : vector<1x1xf32> to vector<1x1x1xf32>
      tpu.vector_store %arg26[%c0_77, %c0_78, %c0_79], %132 {strides = array<i32>} : memref<1x1x1xf32, #tpu.memory_space<vmem>>, vector<1x1x1xf32>,
    } else {
    }
    return
  }
  func.func @transform_0(%arg0: i32, %arg1: i32) -> (i32, i32, i32) {
    %c0_i32 = arith.constant 0 : i32
    %c0_i32_0 = arith.constant 0 : i32
    return %arg0, %arg1, %c0_i32 : i32, i32, i32
  }
  func.func @transform_1(%arg0: i32, %arg1: i32) -> (i32, i32) {
    %c0_i32 = arith.constant 0 : i32
    %c0_i32_0 = arith.constant 0 : i32
    %c0_i32_1 = arith.constant 0 : i32
    return %c0_i32, %c0_i32_0 : i32, i32
  }
  func.func @transform_2(%arg0: i32, %arg1: i32) -> (i32, i32) {
    %c0_i32 = arith.constant 0 : i32
    %c0_i32_0 = arith.constant 0 : i32
    %c0_i32_1 = arith.constant 0 : i32
    return %c0_i32, %c0_i32_0 : i32, i32
  }
  func.func @transform_3(%arg0: i32, %arg1: i32) -> (i32, i32) {
    %c0_i32 = arith.constant 0 : i32
    %c0_i32_0 = arith.constant 0 : i32
    %c0_i32_1 = arith.constant 0 : i32
    return %c0_i32, %c0_i32_0 : i32, i32
  }
  func.func @transform_4(%arg0: i32, %arg1: i32) -> (i32, i32) {
    %c0_i32 = arith.constant 0 : i32
    %c0_i32_0 = arith.constant 0 : i32
    %c0_i32_1 = arith.constant 0 : i32
    return %c0_i32, %c0_i32_0 : i32, i32
  }
  func.func @transform_5(%arg0: i32, %arg1: i32) -> (i32, i32) {
    %c0_i32 = arith.constant 0 : i32
    %c0_i32_0 = arith.constant 0 : i32
    %c0_i32_1 = arith.constant 0 : i32
    return %c0_i32, %c0_i32_0 : i32, i32
  }
  func.func @transform_6(%arg0: i32, %arg1: i32) -> (i32, i32) {
    %c0_i32 = arith.constant 0 : i32
    %c0_i32_0 = arith.constant 0 : i32
    %c0_i32_1 = arith.constant 0 : i32
    return %c0_i32, %c0_i32_0 : i32, i32
  }
  func.func @transform_7(%arg0: i32, %arg1: i32) -> (i32, i32) {
    %c0_i32 = arith.constant 0 : i32
    %c0_i32_0 = arith.constant 0 : i32
    %c0_i32_1 = arith.constant 0 : i32
    return %c0_i32, %c0_i32_0 : i32, i32
  }
  func.func @transform_8(%arg0: i32, %arg1: i32) -> (i32, i32) {
    %c0_i32 = arith.constant 0 : i32
    %c0_i32_0 = arith.constant 0 : i32
    %c0_i32_1 = arith.constant 0 : i32
    return %c0_i32, %c0_i32_0 : i32, i32
  }
  func.func @transform_9(%arg0: i32, %arg1: i32) -> (i32, i32) {
    %c0_i32 = arith.constant 0 : i32
    %c0_i32_0 = arith.constant 0 : i32
    %c0_i32_1 = arith.constant 0 : i32
    return %c0_i32, %c0_i32_0 : i32, i32
  }
  func.func @transform_10(%arg0: i32, %arg1: i32) -> (i32, i32) {
    %c0_i32 = arith.constant 0 : i32
    %c0_i32_0 = arith.constant 0 : i32
    %c0_i32_1 = arith.constant 0 : i32
    return %c0_i32, %c0_i32_0 : i32, i32
  }
  func.func @transform_11(%arg0: i32, %arg1: i32) -> (i32, i32) {
    %c0_i32 = arith.constant 0 : i32
    %c0_i32_0 = arith.constant 0 : i32
    %c0_i32_1 = arith.constant 0 : i32
    return %c0_i32, %c0_i32_0 : i32, i32
  }
  func.func @transform_12(%arg0: i32, %arg1: i32) -> (i32, i32) {
    %c0_i32 = arith.constant 0 : i32
    %c0_i32_0 = arith.constant 0 : i32
    %c0_i32_1 = arith.constant 0 : i32
    return %c0_i32, %c0_i32_0 : i32, i32
  }
  func.func @transform_13(%arg0: i32, %arg1: i32) -> (i32, i32) {
    %c0_i32 = arith.constant 0 : i32
    %c0_i32_0 = arith.constant 0 : i32
    %c0_i32_1 = arith.constant 0 : i32
    return %c0_i32, %c0_i32_0 : i32, i32
  }
  func.func @transform_14(%arg0: i32, %arg1: i32) -> (i32, i32) {
    %c0_i32 = arith.constant 0 : i32
    %c0_i32_0 = arith.constant 0 : i32
    %c0_i32_1 = arith.constant 0 : i32
    return %c0_i32, %c0_i32_0 : i32, i32
  }
  func.func @transform_15(%arg0: i32, %arg1: i32) -> (i32, i32) {
    %c0_i32 = arith.constant 0 : i32
    %c0_i32_0 = arith.constant 0 : i32
    %c0_i32_1 = arith.constant 0 : i32
    return %c0_i32, %c0_i32_0 : i32, i32
  }
  func.func @transform_16(%arg0: i32, %arg1: i32) -> (i32, i32) {
    %c0_i32 = arith.constant 0 : i32
    %c0_i32_0 = arith.constant 0 : i32
    %c0_i32_1 = arith.constant 0 : i32
    return %c0_i32, %c0_i32_0 : i32, i32
  }
  func.func @transform_17(%arg0: i32, %arg1: i32) -> (i32, i32) {
    %c0_i32 = arith.constant 0 : i32
    %c0_i32_0 = arith.constant 0 : i32
    %c0_i32_1 = arith.constant 0 : i32
    return %c0_i32, %c0_i32_0 : i32, i32
  }
  func.func @transform_18(%arg0: i32, %arg1: i32) -> (i32, i32) {
    %c0_i32 = arith.constant 0 : i32
    %c0_i32_0 = arith.constant 0 : i32
    %c0_i32_1 = arith.constant 0 : i32
    return %c0_i32, %c0_i32_0 : i32, i32
  }
  func.func @transform_19(%arg0: i32, %arg1: i32) -> (i32, i32) {
    %c0_i32 = arith.constant 0 : i32
    %c0_i32_0 = arith.constant 0 : i32
    %c0_i32_1 = arith.constant 0 : i32
    return %c0_i32, %c0_i32_0 : i32, i32
  }
  func.func @transform_20(%arg0: i32, %arg1: i32) -> (i32, i32) {
    %c0_i32 = arith.constant 0 : i32
    %c0_i32_0 = arith.constant 0 : i32
    %c0_i32_1 = arith.constant 0 : i32
    return %c0_i32, %c0_i32_0 : i32, i32
  }
  func.func @transform_21(%arg0: i32, %arg1: i32) -> (i32, i32) {
    %c0_i32 = arith.constant 0 : i32
    %c0_i32_0 = arith.constant 0 : i32
    %c0_i32_1 = arith.constant 0 : i32
    return %c0_i32, %c0_i32_0 : i32, i32
  }
  func.func @transform_22(%arg0: i32, %arg1: i32) -> (i32, i32) {
    %c0_i32 = arith.constant 0 : i32
    %c0_i32_0 = arith.constant 0 : i32
    %c0_i32_1 = arith.constant 0 : i32
    return %c0_i32, %c0_i32_0 : i32, i32
  }
  func.func @transform_23(%arg0: i32, %arg1: i32) -> (i32, i32) {
    %c0_i32 = arith.constant 0 : i32
    %c0_i32_0 = arith.constant 0 : i32
    %c0_i32_1 = arith.constant 0 : i32
    return %c0_i32, %c0_i32_0 : i32, i32
  }
  func.func @transform_24(%arg0: i32, %arg1: i32) -> (i32, i32, i32) {
    %c0_i32 = arith.constant 0 : i32
    %c0_i32_0 = arith.constant 0 : i32
    %c0_i32_1 = arith.constant 0 : i32
    return %arg0, %c0_i32, %c0_i32_0 : i32, i32, i32
  }
}

</mosaic_0001>

<llo_original>
// kernel: tpu_custom_call.1
$region0: #{tpu_custom_call.1}
  #allocation0 [shape = 'u32[]', space=smem, size = 0x4, offset = 0x4, fixed_abs, tag = 'smem constant byte address 0x4 - core index']
  #allocation1 [shape = 'u32[72,128]{1,0:T(1,128)}', space=vmem, size = 0x9000, scoped, tag = 'internal scratch']
  #allocation2 [shape = 'f32[8,256]{1,0:T(8,128)}', space=vmem, size = 0x2000, scoped, tag = 'scratch operand']
  #allocation3 [shape = 'f32[1,1]{1,0:T(1,128)S(1)}', space=vmem, size = 0x200, scoped, tag = 'scoped memory for tpu_custom_call.1']
  %s0 = inlined_call_operand.vmem [shape: f32[2,256,3], index: 0, kind: input, shape index: {}]
  %s1 = inlined_call_operand.hbm [shape: f32[3,32], index: 1, kind: input, shape index: {}]
  %s2 = inlined_call_operand.hbm [shape: f32[1,32], index: 2, kind: input, shape index: {}]
  %s3 = inlined_call_operand.hbm [shape: f32[1,32], index: 3, kind: input, shape index: {}]
  %s4 = inlined_call_operand.hbm [shape: bf16[32,64], index: 4, kind: input, shape index: {}]
  %s5 = inlined_call_operand.hbm [shape: f32[1,64], index: 5, kind: input, shape index: {}]
  %s6 = inlined_call_operand.hbm [shape: f32[1,64], index: 6, kind: input, shape index: {}]
  %s7 = inlined_call_operand.hbm [shape: bf16[64,128], index: 7, kind: input, shape index: {}]
  %s8 = inlined_call_operand.hbm [shape: f32[1,128], index: 8, kind: input, shape index: {}]
  %s9 = inlined_call_operand.hbm [shape: f32[1,128], index: 9, kind: input, shape index: {}]
  %s10 = inlined_call_operand.hbm [shape: bf16[128,128], index: 10, kind: input, shape index: {}]
  %s11 = inlined_call_operand.hbm [shape: f32[1,128], index: 11, kind: input, shape index: {}]
  %s12 = inlined_call_operand.hbm [shape: f32[1,128], index: 12, kind: input, shape index: {}]
  %s13 = inlined_call_operand.vmem [shape: bf16[128,256], index: 13, kind: input, shape index: {}]
  %s14 = inlined_call_operand.vmem [shape: f32[1,256], index: 14, kind: input, shape index: {}]
  %s15 = inlined_call_operand.vmem [shape: f32[1,256], index: 15, kind: input, shape index: {}]
  %s16 = inlined_call_operand.vmem [shape: bf16[256,512], index: 16, kind: input, shape index: {}]
  %s17 = inlined_call_operand.vmem [shape: f32[1,512], index: 17, kind: input, shape index: {}]
  %s18 = inlined_call_operand.vmem [shape: f32[1,512], index: 18, kind: input, shape index: {}]
  %s19 = inlined_call_operand.hbm [shape: bf16[512,256], index: 19, kind: input, shape index: {}]
  %s20 = inlined_call_operand.vmem [shape: f32[1,256], index: 20, kind: input, shape index: {}]
  %s21 = inlined_call_operand.vmem [shape: f32[1,256], index: 21, kind: input, shape index: {}]
  %s22 = inlined_call_operand.vmem [shape: bf16[256,1], index: 22, kind: input, shape index: {}]
  %s23 = inlined_call_operand.<no memory space> [shape: f32[1,1], index: 23, kind: input, shape index: {}]
  %s24 = inlined_call_operand.vmem [shape: f32[2,1,1], index: 24, kind: output, shape index: {}]
  %s25 = sld [smem:[#allocation0]]
  $region193: #{tpu_custom_call.1} parent=0
    _
  %s27 = ssub.s32 1, %s25
  %s28 = scalar_select 0, %s27, %s25
  %v29 = vstv %s23
  %30 = vst [vmem:[#allocation3] sm:$0x1] %v29
  $region1: #{tpu_custom_call.1} parent=0
    #allocation4 [shape = 'u8[2048]{0}', space=vmem, size = 0x800, scoped, tag = 'input window, operand 1, single buffered']
    #allocation5 [shape = 's32[2]{0}', space=sflag, size = 0x8, scoped, tag = 'scoped memory for tpu_custom_call.1']
    #allocation6 [shape = 'u8[512]{0}', space=vmem, size = 0x400, scoped, tag = 'input window, operand 2, single buffered']
    #allocation7 [shape = 's32[1]{0}', space=sflag, size = 0x4, scoped, tag = 'scoped memory for tpu_custom_call.1']
    #allocation8 [shape = 'u8[512]{0}', space=vmem, size = 0x400, scoped, tag = 'input window, operand 3, single buffered']
    #allocation9 [shape = 'u8[8192]{0}', space=vmem, size = 0x2000, scoped, tag = 'input window, operand 4, single buffered']
    #allocation10 [shape = 's32[1]{0}', space=sflag, size = 0x4, scoped, tag = 'scoped memory for tpu_custom_call.1']
    #allocation11 [shape = 'u8[512]{0}', space=vmem, size = 0x400, scoped, tag = 'input window, operand 5, single buffered']
    #allocation12 [shape = 'u8[512]{0}', space=vmem, size = 0x400, scoped, tag = 'input window, operand 6, single buffered']
    #allocation13 [shape = 's32[1]{0}', space=sflag, size = 0x4, scoped, tag = 'scoped memory for tpu_custom_call.1']
    #allocation14 [shape = 'u8[16384]{0}', space=vmem, size = 0x4000, scoped, tag = 'input window, operand 7, single buffered']
    #allocation15 [shape = 'u8[512]{0}', space=vmem, size = 0x400, scoped, tag = 'input window, operand 8, single buffered']
    #allocation16 [shape = 's32[1]{0}', space=sflag, size = 0x4, scoped, tag = 'scoped memory for tpu_custom_call.1']
    #allocation17 [shape = 'u8[512]{0}', space=vmem, size = 0x400, scoped, tag = 'input window, operand 9, single buffered']
    #allocation18 [shape = 'u8[32768]{0}', space=vmem, size = 0x8000, scoped, tag = 'input window, operand 10, single buffered']
    #allocation19 [shape = 's32[1]{0}', space=sflag, size = 0x4, scoped, tag = 'scoped memory for tpu_custom_call.1']
    #allocation20 [shape = 'u8[512]{0}', space=vmem, size = 0x400, scoped, tag = 'input window, operand 11, single buffered']
    #allocation21 [shape = 'u8[512]{0}', space=vmem, size = 0x400, scoped, tag = 'input window, operand 12, single buffered']
    #allocation22 [shape = 's32[1]{0}', space=sflag, size = 0x4, scoped, tag = 'scoped memory for tpu_custom_call.1']
    #allocation23 [shape = 'u8[262144]{0}', space=vmem, size = 0x40000, scoped, tag = 'input window, operand 19, single buffered']
    %31 = vsyncpa [#allocation5], 0
    %32 = vsyncpa [#allocation7], 0
    %33 = vsyncpa [#allocation10], 0
    %34 = vsyncpa [#allocation13], 0
    %35 = vsyncpa [#allocation16], 0
    %36 = vsyncpa [#allocation19], 0
    %37 = vsyncpa [#allocation22], 0
    loop: start=0, step=1, limit=4
    $region2: #{tpu_custom_call.1} parent=1 // loop_pre_header
      _
    $region3: #{tpu_custom_call.1} parent=1 // loop_header
      %s39 = sphi 0, %s43
      %p40 = scmp.ge.s32.totalorder %s39, 4
      %s46 = sphi 0, %s58
      %s47 = sphi 0, %s54
      %s48 = sphi 0, %s46
      %s49 = sphi 0, %s47
      %s50 = sphi 0, %s48
      %s51 = sphi 0, %s49
      %s63 = sphi 0, %s65
      %s66 = sphi 0, %s63
      %s67 = sphi 0, %s66
      %s83 = sphi 0, %s67
      %s87 = sphi 0, %s87
      %s89 = sphi 0, %s87
      %s90 = sphi 0, %s89
      %s104 = sphi 0, %s90
      %s108 = sphi 0, %s108
      %s110 = sphi 0, %s108
      %s111 = sphi 0, %s110
      %s125 = sphi 0, %s111
      %s129 = sphi 0, %s129
      %s131 = sphi 0, %s129
      %s132 = sphi 0, %s131
      %s146 = sphi 0, %s132
      %s150 = sphi 0, %s150
      %s152 = sphi 0, %s150
      %s153 = sphi 0, %s152
      %s167 = sphi 0, %s153
      %s171 = sphi 0, %s171
      %s173 = sphi 0, %s171
      %s174 = sphi 0, %s173
      %s188 = sphi 0, %s174
      %s192 = sphi 0, %s192
      %s194 = sphi 0, %s192
      %s195 = sphi 0, %s194
      %s209 = sphi 0, %s195
      %s213 = sphi 0, %s213
      %s215 = sphi 0, %s213
      %s216 = sphi 0, %s215
      %s230 = sphi 0, %s216
      %s234 = sphi 0, %s234
      %s236 = sphi 0, %s234
      %s237 = sphi 0, %s236
      %s251 = sphi 0, %s237
      %s255 = sphi 0, %s255
      %s257 = sphi 0, %s255
      %s258 = sphi 0, %s257
      %s272 = sphi 0, %s258
      %s276 = sphi 0, %s276
      %s278 = sphi 0, %s276
      %s279 = sphi 0, %s278
      %s293 = sphi 0, %s279
      %s297 = sphi 0, %s297
      %s299 = sphi 0, %s297
      %s300 = sphi 0, %s299
      %s314 = sphi 0, %s300
      %s318 = sphi 0, %s318
      %s320 = sphi 0, %s318
      %s321 = sphi 0, %s320
      %s335 = sphi 0, %s321
      %s339 = sphi 0, %s339
      %s341 = sphi 0, %s339
      %s342 = sphi 0, %s341
      %s356 = sphi 0, %s342
      %s360 = sphi 0, %s360
      %s362 = sphi 0, %s360
      %s363 = sphi 0, %s362
      %s377 = sphi 0, %s363
      %s381 = sphi 0, %s381
      %s383 = sphi 0, %s381
      %s384 = sphi 0, %s383
      %s398 = sphi 0, %s384
      %s402 = sphi 0, %s402
      %s404 = sphi 0, %s402
      %s405 = sphi 0, %s404
      %s419 = sphi 0, %s405
      %s423 = sphi 0, %s423
      %s425 = sphi 0, %s423
      %s426 = sphi 0, %s425
      %s440 = sphi 0, %s426
      %s444 = sphi 0, %s444
      %s446 = sphi 0, %s444
      %s447 = sphi 0, %s446
      %s461 = sphi 0, %s447
      %s465 = sphi 0, %s465
      %s467 = sphi 0, %s465
      %s468 = sphi 0, %s467
      %s482 = sphi 0, %s468
      %s486 = sphi 0, %s486
      %s488 = sphi 0, %s486
      %s489 = sphi 0, %s488
      %s503 = sphi 0, %s489
      %s507 = sphi 0, %s507
      %s509 = sphi 0, %s507
      %s510 = sphi 0, %s509
      %s524 = sphi 0, %s510
      %s528 = sphi 0, %s528
      %s530 = sphi 0, %s528
      %s531 = sphi 0, %s530
      %s545 = sphi 0, %s531
      %s549 = sphi 0, %s549
      %s551 = sphi 0, %s549
      %s552 = sphi 0, %s551
      %s566 = sphi 0, %s552
      %s572 = sphi 0, %s574
      %s575 = sphi 0, %s572
      %s576 = sphi 0, %s575
      %s592 = sphi 0, %s576
    $region4: #{tpu_custom_call.1} parent=1 // loop_header_branch
      %42 = sbr.rel (%p40) target = $region8
    $region5: #{tpu_custom_call.1} parent=1 // loop_body
      %s44 = ssub.s32 %s39, 1
      %s45 = ssub.s32 %s39, 2
      %s52 = sadd.s32 1, %s47
      %p53 = scmp.ge.s32.totalorder %s52, 1
      %s54 = scalar_select %p53, 0, %s52
      %s55 = sadd.s32 1, %s46
      %s56 = scalar_select %p53, %s55, %s46
      %p57 = scmp.ge.s32.totalorder %s56, 2
      %s58 = scalar_select %p57, 0, %s56
      %s59 = ssub.s32 %s46, %s58
      %s60 = ssub.s32 %s47, %s54
      %s61 = sor.u32 %s59, %s60
      %p62 = scmp.eq.s32.totalorder %s61, 0
      %s64 = sadd.s32 %s63, 1
      %s65 = scalar_select %p62, %s63, %s64
      %p68 = pneg %p62
      %p69 = scmp.eq.s32.totalorder %s39, 1
      %p70 = por %p68, %p69
      %p71 = scmp.ne.s32.totalorder %s63, %s66
      %p72 = scmp.eq.s32.totalorder %s39, 0
      %p73 = por %p71, %p72
      %p74 = scmp.ne.s32.totalorder %s63, %s66
      %p75 = scmp.eq.s32.totalorder %s44, 1
      %p76 = por %p74, %p75
      %p77 = scmp.ne.s32.totalorder %s66, %s67
      %p78 = scmp.eq.s32.totalorder %s44, 0
      %p79 = por %p77, %p78
      %p80 = scmp.ne.s32.totalorder %s66, %s67
      %p81 = scmp.eq.s32.totalorder %s45, 1
      %p82 = por %p80, %p81
      %p84 = scmp.ne.s32.totalorder %s67, %s83
      %p85 = scmp.eq.s32.totalorder %s45, 0
      %p86 = por %p84, %p85
      %s88 = sadd.s32 %s87, 1
      %p91 = scmp.eq.s32.totalorder %s39, 1
      %p92 = scmp.ne.s32.totalorder %s87, %s89
      %p93 = scmp.eq.s32.totalorder %s39, 0
      %p94 = por %p92, %p93
      %p95 = scmp.ne.s32.totalorder %s87, %s89
      %p96 = scmp.eq.s32.totalorder %s44, 1
      %p97 = por %p95, %p96
      %p98 = scmp.ne.s32.totalorder %s89, %s90
      %p99 = scmp.eq.s32.totalorder %s44, 0
      %p100 = por %p98, %p99
      %p101 = scmp.ne.s32.totalorder %s89, %s90
      %p102 = scmp.eq.s32.totalorder %s45, 1
      %p103 = por %p101, %p102
      %p105 = scmp.ne.s32.totalorder %s90, %s104
      %p106 = scmp.eq.s32.totalorder %s45, 0
      %p107 = por %p105, %p106
      %s109 = sadd.s32 %s108, 1
      %p112 = scmp.eq.s32.totalorder %s39, 1
      %p113 = scmp.ne.s32.totalorder %s108, %s110
      %p114 = scmp.eq.s32.totalorder %s39, 0
      %p115 = por %p113, %p114
      %p116 = scmp.ne.s32.totalorder %s108, %s110
      %p117 = scmp.eq.s32.totalorder %s44, 1
      %p118 = por %p116, %p117
      %p119 = scmp.ne.s32.totalorder %s110, %s111
      %p120 = scmp.eq.s32.totalorder %s44, 0
      %p121 = por %p119, %p120
      %p122 = scmp.ne.s32.totalorder %s110, %s111
      %p123 = scmp.eq.s32.totalorder %s45, 1
      %p124 = por %p122, %p123
      %p126 = scmp.ne.s32.totalorder %s111, %s125
      %p127 = scmp.eq.s32.totalorder %s45, 0
      %p128 = por %p126, %p127
      %s130 = sadd.s32 %s129, 1
      %p133 = scmp.eq.s32.totalorder %s39, 1
      %p134 = scmp.ne.s32.totalorder %s129, %s131
      %p135 = scmp.eq.s32.totalorder %s39, 0
      %p136 = por %p134, %p135
      %p137 = scmp.ne.s32.totalorder %s129, %s131
      %p138 = scmp.eq.s32.totalorder %s44, 1
      %p139 = por %p137, %p138
      %p140 = scmp.ne.s32.totalorder %s131, %s132
      %p141 = scmp.eq.s32.totalorder %s44, 0
      %p142 = por %p140, %p141
      %p143 = scmp.ne.s32.totalorder %s131, %s132
      %p144 = scmp.eq.s32.totalorder %s45, 1
      %p145 = por %p143, %p144
      %p147 = scmp.ne.s32.totalorder %s132, %s146
      %p148 = scmp.eq.s32.totalorder %s45, 0
      %p149 = por %p147, %p148
      %s151 = sadd.s32 %s150, 1
      %p154 = scmp.eq.s32.totalorder %s39, 1
      %p155 = scmp.ne.s32.totalorder %s150, %s152
      %p156 = scmp.eq.s32.totalorder %s39, 0
      %p157 = por %p155, %p156
      %p158 = scmp.ne.s32.totalorder %s150, %s152
      %p159 = scmp.eq.s32.totalorder %s44, 1
      %p160 = por %p158, %p159
      %p161 = scmp.ne.s32.totalorder %s152, %s153
      %p162 = scmp.eq.s32.totalorder %s44, 0
      %p163 = por %p161, %p162
      %p164 = scmp.ne.s32.totalorder %s152, %s153
      %p165 = scmp.eq.s32.totalorder %s45, 1
      %p166 = por %p164, %p165
      %p168 = scmp.ne.s32.totalorder %s153, %s167
      %p169 = scmp.eq.s32.totalorder %s45, 0
      %p170 = por %p168, %p169
      %s172 = sadd.s32 %s171, 1
      %p175 = scmp.eq.s32.totalorder %s39, 1
      %p176 = scmp.ne.s32.totalorder %s171, %s173
      %p177 = scmp.eq.s32.totalorder %s39, 0
      %p178 = por %p176, %p177
      %p179 = scmp.ne.s32.totalorder %s171, %s173
      %p180 = scmp.eq.s32.totalorder %s44, 1
      %p181 = por %p179, %p180
      %p182 = scmp.ne.s32.totalorder %s173, %s174
      %p183 = scmp.eq.s32.totalorder %s44, 0
      %p184 = por %p182, %p183
      %p185 = scmp.ne.s32.totalorder %s173, %s174
      %p186 = scmp.eq.s32.totalorder %s45, 1
      %p187 = por %p185, %p186
      %p189 = scmp.ne.s32.totalorder %s174, %s188
      %p190 = scmp.eq.s32.totalorder %s45, 0
      %p191 = por %p189, %p190
      %s193 = sadd.s32 %s192, 1
      %p196 = scmp.eq.s32.totalorder %s39, 1
      %p197 = scmp.ne.s32.totalorder %s192, %s194
      %p198 = scmp.eq.s32.totalorder %s39, 0
      %p199 = por %p197, %p198
      %p200 = scmp.ne.s32.totalorder %s192, %s194
      %p201 = scmp.eq.s32.totalorder %s44, 1
      %p202 = por %p200, %p201
      %p203 = scmp.ne.s32.totalorder %s194, %s195
      %p204 = scmp.eq.s32.totalorder %s44, 0
      %p205 = por %p203, %p204
      %p206 = scmp.ne.s32.totalorder %s194, %s195
      %p207 = scmp.eq.s32.totalorder %s45, 1
      %p208 = por %p206, %p207
      %p210 = scmp.ne.s32.totalorder %s195, %s209
      %p211 = scmp.eq.s32.totalorder %s45, 0
      %p212 = por %p210, %p211
      %s214 = sadd.s32 %s213, 1
      %p217 = scmp.eq.s32.totalorder %s39, 1
      %p218 = scmp.ne.s32.totalorder %s213, %s215
      %p219 = scmp.eq.s32.totalorder %s39, 0
      %p220 = por %p218, %p219
      %p221 = scmp.ne.s32.totalorder %s213, %s215
      %p222 = scmp.eq.s32.totalorder %s44, 1
      %p223 = por %p221, %p222
      %p224 = scmp.ne.s32.totalorder %s215, %s216
      %p225 = scmp.eq.s32.totalorder %s44, 0
      %p226 = por %p224, %p225
      %p227 = scmp.ne.s32.totalorder %s215, %s216
      %p228 = scmp.eq.s32.totalorder %s45, 1
      %p229 = por %p227, %p228
      %p231 = scmp.ne.s32.totalorder %s216, %s230
      %p232 = scmp.eq.s32.totalorder %s45, 0
      %p233 = por %p231, %p232
      %s235 = sadd.s32 %s234, 1
      %p238 = scmp.eq.s32.totalorder %s39, 1
      %p239 = scmp.ne.s32.totalorder %s234, %s236
      %p240 = scmp.eq.s32.totalorder %s39, 0
      %p241 = por %p239, %p240
      %p242 = scmp.ne.s32.totalorder %s234, %s236
      %p243 = scmp.eq.s32.totalorder %s44, 1
      %p244 = por %p242, %p243
      %p245 = scmp.ne.s32.totalorder %s236, %s237
      %p246 = scmp.eq.s32.totalorder %s44, 0
      %p247 = por %p245, %p246
      %p248 = scmp.ne.s32.totalorder %s236, %s237
      %p249 = scmp.eq.s32.totalorder %s45, 1
      %p250 = por %p248, %p249
      %p252 = scmp.ne.s32.totalorder %s237, %s251
      %p253 = scmp.eq.s32.totalorder %s45, 0
      %p254 = por %p252, %p253
      %s256 = sadd.s32 %s255, 1
      %p259 = scmp.eq.s32.totalorder %s39, 1
      %p260 = scmp.ne.s32.totalorder %s255, %s257
      %p261 = scmp.eq.s32.totalorder %s39, 0
      %p262 = por %p260, %p261
      %p263 = scmp.ne.s32.totalorder %s255, %s257
      %p264 = scmp.eq.s32.totalorder %s44, 1
      %p265 = por %p263, %p264
      %p266 = scmp.ne.s32.totalorder %s257, %s258
      %p267 = scmp.eq.s32.totalorder %s44, 0
      %p268 = por %p266, %p267
      %p269 = scmp.ne.s32.totalorder %s257, %s258
      %p270 = scmp.eq.s32.totalorder %s45, 1
      %p271 = por %p269, %p270
      %p273 = scmp.ne.s32.totalorder %s258, %s272
      %p274 = scmp.eq.s32.totalorder %s45, 0
      %p275 = por %p273, %p274
      %s277 = sadd.s32 %s276, 1
      %p280 = scmp.eq.s32.totalorder %s39, 1
      %p281 = scmp.ne.s32.totalorder %s276, %s278
      %p282 = scmp.eq.s32.totalorder %s39, 0
      %p283 = por %p281, %p282
      %p284 = scmp.ne.s32.totalorder %s276, %s278
      %p285 = scmp.eq.s32.totalorder %s44, 1
      %p286 = por %p284, %p285
      %p287 = scmp.ne.s32.totalorder %s278, %s279
      %p288 = scmp.eq.s32.totalorder %s44, 0
      %p289 = por %p287, %p288
      %p290 = scmp.ne.s32.totalorder %s278, %s279
      %p291 = scmp.eq.s32.totalorder %s45, 1
      %p292 = por %p290, %p291
      %p294 = scmp.ne.s32.totalorder %s279, %s293
      %p295 = scmp.eq.s32.totalorder %s45, 0
      %p296 = por %p294, %p295
      %s298 = sadd.s32 %s297, 1
      %p301 = scmp.eq.s32.totalorder %s39, 1
      %p302 = scmp.ne.s32.totalorder %s297, %s299
      %p303 = scmp.eq.s32.totalorder %s39, 0
      %p304 = por %p302, %p303
      %p305 = scmp.ne.s32.totalorder %s297, %s299
      %p306 = scmp.eq.s32.totalorder %s44, 1
      %p307 = por %p305, %p306
      %p308 = scmp.ne.s32.totalorder %s299, %s300
      %p309 = scmp.eq.s32.totalorder %s44, 0
      %p310 = por %p308, %p309
      %p311 = scmp.ne.s32.totalorder %s299, %s300
      %p312 = scmp.eq.s32.totalorder %s45, 1
      %p313 = por %p311, %p312
      %p315 = scmp.ne.s32.totalorder %s300, %s314
      %p316 = scmp.eq.s32.totalorder %s45, 0
      %p317 = por %p315, %p316
      %s319 = sadd.s32 %s318, 1
      %p322 = scmp.eq.s32.totalorder %s39, 1
      %p323 = scmp.ne.s32.totalorder %s318, %s320
      %p324 = scmp.eq.s32.totalorder %s39, 0
      %p325 = por %p323, %p324
      %p326 = scmp.ne.s32.totalorder %s318, %s320
      %p327 = scmp.eq.s32.totalorder %s44, 1
      %p328 = por %p326, %p327
      %p329 = scmp.ne.s32.totalorder %s320, %s321
      %p330 = scmp.eq.s32.totalorder %s44, 0
      %p331 = por %p329, %p330
      %p332 = scmp.ne.s32.totalorder %s320, %s321
      %p333 = scmp.eq.s32.totalorder %s45, 1
      %p334 = por %p332, %p333
      %p336 = scmp.ne.s32.totalorder %s321, %s335
      %p337 = scmp.eq.s32.totalorder %s45, 0
      %p338 = por %p336, %p337
      %s340 = sadd.s32 %s339, 1
      %p343 = scmp.eq.s32.totalorder %s39, 1
      %p344 = scmp.ne.s32.totalorder %s339, %s341
      %p345 = scmp.eq.s32.totalorder %s39, 0
      %p346 = por %p344, %p345
      %p347 = scmp.ne.s32.totalorder %s339, %s341
      %p348 = scmp.eq.s32.totalorder %s44, 1
      %p349 = por %p347, %p348
      %p350 = scmp.ne.s32.totalorder %s341, %s342
      %p351 = scmp.eq.s32.totalorder %s44, 0
      %p352 = por %p350, %p351
      %p353 = scmp.ne.s32.totalorder %s341, %s342
      %p354 = scmp.eq.s32.totalorder %s45, 1
      %p355 = por %p353, %p354
      %p357 = scmp.ne.s32.totalorder %s342, %s356
      %p358 = scmp.eq.s32.totalorder %s45, 0
      %p359 = por %p357, %p358
      %s361 = sadd.s32 %s360, 1
      %p364 = scmp.eq.s32.totalorder %s39, 1
      %p365 = scmp.ne.s32.totalorder %s360, %s362
      %p366 = scmp.eq.s32.totalorder %s39, 0
      %p367 = por %p365, %p366
      %p368 = scmp.ne.s32.totalorder %s360, %s362
      %p369 = scmp.eq.s32.totalorder %s44, 1
      %p370 = por %p368, %p369
      %p371 = scmp.ne.s32.totalorder %s362, %s363
      %p372 = scmp.eq.s32.totalorder %s44, 0
      %p373 = por %p371, %p372
      %p374 = scmp.ne.s32.totalorder %s362, %s363
      %p375 = scmp.eq.s32.totalorder %s45, 1
      %p376 = por %p374, %p375
      %p378 = scmp.ne.s32.totalorder %s363, %s377
      %p379 = scmp.eq.s32.totalorder %s45, 0
      %p380 = por %p378, %p379
      %s382 = sadd.s32 %s381, 1
      %p385 = scmp.eq.s32.totalorder %s39, 1
      %p386 = scmp.ne.s32.totalorder %s381, %s383
      %p387 = scmp.eq.s32.totalorder %s39, 0
      %p388 = por %p386, %p387
      %p389 = scmp.ne.s32.totalorder %s381, %s383
      %p390 = scmp.eq.s32.totalorder %s44, 1
      %p391 = por %p389, %p390
      %p392 = scmp.ne.s32.totalorder %s383, %s384
      %p393 = scmp.eq.s32.totalorder %s44, 0
      %p394 = por %p392, %p393
      %p395 = scmp.ne.s32.totalorder %s383, %s384
      %p396 = scmp.eq.s32.totalorder %s45, 1
      %p397 = por %p395, %p396
      %p399 = scmp.ne.s32.totalorder %s384, %s398
      %p400 = scmp.eq.s32.totalorder %s45, 0
      %p401 = por %p399, %p400
      %s403 = sadd.s32 %s402, 1
      %p406 = scmp.eq.s32.totalorder %s39, 1
      %p407 = scmp.ne.s32.totalorder %s402, %s404
      %p408 = scmp.eq.s32.totalorder %s39, 0
      %p409 = por %p407, %p408
      %p410 = scmp.ne.s32.totalorder %s402, %s404
      %p411 = scmp.eq.s32.totalorder %s44, 1
      %p412 = por %p410, %p411
      %p413 = scmp.ne.s32.totalorder %s404, %s405
      %p414 = scmp.eq.s32.totalorder %s44, 0
      %p415 = por %p413, %p414
      %p416 = scmp.ne.s32.totalorder %s404, %s405
      %p417 = scmp.eq.s32.totalorder %s45, 1
      %p418 = por %p416, %p417
      %p420 = scmp.ne.s32.totalorder %s405, %s419
      %p421 = scmp.eq.s32.totalorder %s45, 0
      %p422 = por %p420, %p421
      %s424 = sadd.s32 %s423, 1
      %p427 = scmp.eq.s32.totalorder %s39, 1
      %p428 = scmp.ne.s32.totalorder %s423, %s425
      %p429 = scmp.eq.s32.totalorder %s39, 0
      %p430 = por %p428, %p429
      %p431 = scmp.ne.s32.totalorder %s423, %s425
      %p432 = scmp.eq.s32.totalorder %s44, 1
      %p433 = por %p431, %p432
      %p434 = scmp.ne.s32.totalorder %s425, %s426
      %p435 = scmp.eq.s32.totalorder %s44, 0
      %p436 = por %p434, %p435
      %p437 = scmp.ne.s32.totalorder %s425, %s426
      %p438 = scmp.eq.s32.totalorder %s45, 1
      %p439 = por %p437, %p438
      %p441 = scmp.ne.s32.totalorder %s426, %s440
      %p442 = scmp.eq.s32.totalorder %s45, 0
      %p443 = por %p441, %p442
      %s445 = sadd.s32 %s444, 1
      %p448 = scmp.eq.s32.totalorder %s39, 1
      %p449 = scmp.ne.s32.totalorder %s444, %s446
      %p450 = scmp.eq.s32.totalorder %s39, 0
      %p451 = por %p449, %p450
      %p452 = scmp.ne.s32.totalorder %s444, %s446
      %p453 = scmp.eq.s32.totalorder %s44, 1
      %p454 = por %p452, %p453
      %p455 = scmp.ne.s32.totalorder %s446, %s447
      %p456 = scmp.eq.s32.totalorder %s44, 0
      %p457 = por %p455, %p456
      %p458 = scmp.ne.s32.totalorder %s446, %s447
      %p459 = scmp.eq.s32.totalorder %s45, 1
      %p460 = por %p458, %p459
      %p462 = scmp.ne.s32.totalorder %s447, %s461
      %p463 = scmp.eq.s32.totalorder %s45, 0
      %p464 = por %p462, %p463
      %s466 = sadd.s32 %s465, 1
      %p469 = scmp.eq.s32.totalorder %s39, 1
      %p470 = scmp.ne.s32.totalorder %s465, %s467
      %p471 = scmp.eq.s32.totalorder %s39, 0
      %p472 = por %p470, %p471
      %p473 = scmp.ne.s32.totalorder %s465, %s467
      %p474 = scmp.eq.s32.totalorder %s44, 1
      %p475 = por %p473, %p474
      %p476 = scmp.ne.s32.totalorder %s467, %s468
      %p477 = scmp.eq.s32.totalorder %s44, 0
      %p478 = por %p476, %p477
      %p479 = scmp.ne.s32.totalorder %s467, %s468
      %p480 = scmp.eq.s32.totalorder %s45, 1
      %p481 = por %p479, %p480
      %p483 = scmp.ne.s32.totalorder %s468, %s482
      %p484 = scmp.eq.s32.totalorder %s45, 0
      %p485 = por %p483, %p484
      %s487 = sadd.s32 %s486, 1
      %p490 = scmp.eq.s32.totalorder %s39, 1
      %p491 = scmp.ne.s32.totalorder %s486, %s488
      %p492 = scmp.eq.s32.totalorder %s39, 0
      %p493 = por %p491, %p492
      %p494 = scmp.ne.s32.totalorder %s486, %s488
      %p495 = scmp.eq.s32.totalorder %s44, 1
      %p496 = por %p494, %p495
      %p497 = scmp.ne.s32.totalorder %s488, %s489
      %p498 = scmp.eq.s32.totalorder %s44, 0
      %p499 = por %p497, %p498
      %p500 = scmp.ne.s32.totalorder %s488, %s489
      %p501 = scmp.eq.s32.totalorder %s45, 1
      %p502 = por %p500, %p501
      %p504 = scmp.ne.s32.totalorder %s489, %s503
      %p505 = scmp.eq.s32.totalorder %s45, 0
      %p506 = por %p504, %p505
      %s508 = sadd.s32 %s507, 1
      %p511 = scmp.eq.s32.totalorder %s39, 1
      %p512 = scmp.ne.s32.totalorder %s507, %s509
      %p513 = scmp.eq.s32.totalorder %s39, 0
      %p514 = por %p512, %p513
      %p515 = scmp.ne.s32.totalorder %s507, %s509
      %p516 = scmp.eq.s32.totalorder %s44, 1
      %p517 = por %p515, %p516
      %p518 = scmp.ne.s32.totalorder %s509, %s510
      %p519 = scmp.eq.s32.totalorder %s44, 0
      %p520 = por %p518, %p519
      %p521 = scmp.ne.s32.totalorder %s509, %s510
      %p522 = scmp.eq.s32.totalorder %s45, 1
      %p523 = por %p521, %p522
      %p525 = scmp.ne.s32.totalorder %s510, %s524
      %p526 = scmp.eq.s32.totalorder %s45, 0
      %p527 = por %p525, %p526
      %s529 = sadd.s32 %s528, 1
      %p532 = scmp.eq.s32.totalorder %s39, 1
      %p533 = scmp.ne.s32.totalorder %s528, %s530
      %p534 = scmp.eq.s32.totalorder %s39, 0
      %p535 = por %p533, %p534
      %p536 = scmp.ne.s32.totalorder %s528, %s530
      %p537 = scmp.eq.s32.totalorder %s44, 1
      %p538 = por %p536, %p537
      %p539 = scmp.ne.s32.totalorder %s530, %s531
      %p540 = scmp.eq.s32.totalorder %s44, 0
      %p541 = por %p539, %p540
      %p542 = scmp.ne.s32.totalorder %s530, %s531
      %p543 = scmp.eq.s32.totalorder %s45, 1
      %p544 = por %p542, %p543
      %p546 = scmp.ne.s32.totalorder %s531, %s545
      %p547 = scmp.eq.s32.totalorder %s45, 0
      %p548 = por %p546, %p547
      %s550 = sadd.s32 %s549, 1
      %p553 = scmp.eq.s32.totalorder %s39, 1
      %p554 = scmp.ne.s32.totalorder %s549, %s551
      %p555 = scmp.eq.s32.totalorder %s39, 0
      %p556 = por %p554, %p555
      %p557 = scmp.ne.s32.totalorder %s549, %s551
      %p558 = scmp.eq.s32.totalorder %s44, 1
      %p559 = por %p557, %p558
      %p560 = scmp.ne.s32.totalorder %s551, %s552
      %p561 = scmp.eq.s32.totalorder %s44, 0
      %p562 = por %p560, %p561
      %p563 = scmp.ne.s32.totalorder %s551, %s552
      %p564 = scmp.eq.s32.totalorder %s45, 1
      %p565 = por %p563, %p564
      %p567 = scmp.ne.s32.totalorder %s552, %s566
      %p568 = scmp.eq.s32.totalorder %s45, 0
      %p569 = por %p567, %p568
      %s570 = ssub.s32 %s46, %s58
      %p571 = scmp.eq.s32.totalorder %s570, 0
      %s573 = sadd.s32 %s572, 1
      %s574 = scalar_select %p571, %s572, %s573
      %p577 = pneg %p571
      %p578 = scmp.eq.s32.totalorder %s39, 1
      %p579 = por %p577, %p578
      %p580 = scmp.ne.s32.totalorder %s572, %s575
      %p581 = scmp.eq.s32.totalorder %s39, 0
      %p582 = por %p580, %p581
      %p583 = scmp.ne.s32.totalorder %s572, %s575
      %p584 = scmp.eq.s32.totalorder %s44, 1
      %p585 = por %p583, %p584
      %p586 = scmp.ne.s32.totalorder %s575, %s576
      %p587 = scmp.eq.s32.totalorder %s44, 0
      %p588 = por %p586, %p587
      %p589 = scmp.ne.s32.totalorder %s575, %s576
      %p590 = scmp.eq.s32.totalorder %s45, 1
      %p591 = por %p589, %p590
      %p593 = scmp.ne.s32.totalorder %s576, %s592
      %p594 = scmp.eq.s32.totalorder %s45, 0
      %p595 = por %p593, %p594
      %p596 = scmp.le.s32.totalorder 1, %s39
      %p597 = scmp.lt.s32.totalorder %s39, 3
      %p598 = pnand %p596, %p597
      %p599 = pneg %p598
      // Predicated region
      $region9: #{tpu_custom_call.1} parent=5 // pred_check
        _
      $region10: #{tpu_custom_call.1} parent=5 // pred_check_branch
        %601 = sbr.rel (%p598) target = $region12
      $region11: #{tpu_custom_call.1} parent=5 // pred_region
        %s602 = ssub.s32 %s39, 1
        // Predicated region
        $region13: #{tpu_custom_call.1} parent=11 // pred_check
          %p603 = pneg %p100
        $region14: #{tpu_custom_call.1} parent=11 // pred_check_branch
          %605 = sbr.rel (%p603) target = $region16
        $region15: #{tpu_custom_call.1} parent=11 // pred_region
          %607 = vsyncadd [#allocation5], 0
          %s609 = sshll.u32 %s1, 4
          %s610 = int_to_ptr.hbm [resolvable:$true] %s609
          %s611 = sshll.u32 [#allocation4], 4
          %s612 = int_to_ptr.vmem [resolvable:$true] %s611
          %614 = dma.hbm_to_vmem [thread:$0]  %s610, 64, %s612, [#allocation5]
        $region16: #{tpu_custom_call.1} parent=11 // pred_fallthru
          _
        // Predicated region
        $region17: #{tpu_custom_call.1} parent=11 // pred_check
          %p615 = pneg %p121
        $region18: #{tpu_custom_call.1} parent=11 // pred_check_branch
          %617 = sbr.rel (%p615) target = $region20
        $region19: #{tpu_custom_call.1} parent=11 // pred_region
          %619 = vsyncadd [#allocation7], 0
          %s621 = sshll.u32 %s2, 4
          %s622 = int_to_ptr.hbm [resolvable:$true] %s621
          %s623 = sshll.u32 [#allocation6], 4
          %s624 = int_to_ptr.vmem [resolvable:$true] %s623
          %626 = dma.hbm_to_vmem [thread:$0]  %s622, 16, %s624, [#allocation7]
        $region20: #{tpu_custom_call.1} parent=11 // pred_fallthru
          _
        // Predicated region
        $region21: #{tpu_custom_call.1} parent=11 // pred_check
          %p627 = pneg %p142
        $region22: #{tpu_custom_call.1} parent=11 // pred_check_branch
          %629 = sbr.rel (%p627) target = $region24
        $region23: #{tpu_custom_call.1} parent=11 // pred_region
          %631 = vsyncadd [#allocation7], 0
          %s633 = sshll.u32 %s3, 4
          %s634 = int_to_ptr.hbm [resolvable:$true] %s633
          %s635 = sshll.u32 [#allocation8], 4
          %s636 = int_to_ptr.vmem [resolvable:$true] %s635
          %638 = dma.hbm_to_vmem [thread:$0]  %s634, 16, %s636, [#allocation7]
        $region24: #{tpu_custom_call.1} parent=11 // pred_fallthru
          _
        // Predicated region
        $region25: #{tpu_custom_call.1} parent=11 // pred_check
          %p639 = pneg %p163
        $region26: #{tpu_custom_call.1} parent=11 // pred_check_branch
          %641 = sbr.rel (%p639) target = $region28
        $region27: #{tpu_custom_call.1} parent=11 // pred_region
          %643 = vsyncadd [#allocation10], 0
          %s644 = sshll.u32 %s4, 4
          %s645 = int_to_ptr.hbm [resolvable:$true] %s644
          %s646 = sshll.u32 [#allocation9], 4
          %s647 = int_to_ptr.vmem [resolvable:$true] %s646
          %652 = dma.hbm_to_vmem [thread:$0]  %s645, 256, %s647, [#allocation10], 64, 64, 4
        $region28: #{tpu_custom_call.1} parent=11 // pred_fallthru
          _
        // Predicated region
        $region29: #{tpu_custom_call.1} parent=11 // pred_check
          %p653 = pneg %p184
        $region30: #{tpu_custom_call.1} parent=11 // pred_check_branch
          %655 = sbr.rel (%p653) target = $region32
        $region31: #{tpu_custom_call.1} parent=11 // pred_region
          %657 = vsyncadd [#allocation10], 0
          %s659 = sshll.u32 %s5, 4
          %s660 = int_to_ptr.hbm [resolvable:$true] %s659
          %s661 = sshll.u32 [#allocation11], 4
          %s662 = int_to_ptr.vmem [resolvable:$true] %s661
          %664 = dma.hbm_to_vmem [thread:$0]  %s660, 16, %s662, [#allocation10]
        $region32: #{tpu_custom_call.1} parent=11 // pred_fallthru
          _
        // Predicated region
        $region33: #{tpu_custom_call.1} parent=11 // pred_check
          %p665 = pneg %p205
        $region34: #{tpu_custom_call.1} parent=11 // pred_check_branch
          %667 = sbr.rel (%p665) target = $region36
        $region35: #{tpu_custom_call.1} parent=11 // pred_region
          %669 = vsyncadd [#allocation13], 0
          %s671 = sshll.u32 %s6, 4
          %s672 = int_to_ptr.hbm [resolvable:$true] %s671
          %s673 = sshll.u32 [#allocation12], 4
          %s674 = int_to_ptr.vmem [resolvable:$true] %s673
          %676 = dma.hbm_to_vmem [thread:$0]  %s672, 16, %s674, [#allocation13]
        $region36: #{tpu_custom_call.1} parent=11 // pred_fallthru
          _
        // Predicated region
        $region37: #{tpu_custom_call.1} parent=11 // pred_check
          %p677 = pneg %p226
        $region38: #{tpu_custom_call.1} parent=11 // pred_check_branch
          %679 = sbr.rel (%p677) target = $region40
        $region39: #{tpu_custom_call.1} parent=11 // pred_region
          %681 = vsyncadd [#allocation13], 0
          %s682 = sshll.u32 %s7, 4
          %s683 = int_to_ptr.hbm [resolvable:$true] %s682
          %s684 = sshll.u32 [#allocation14], 4
          %s685 = int_to_ptr.vmem [resolvable:$true] %s684
          %690 = dma.hbm_to_vmem [thread:$0]  %s683, 512, %s685, [#allocation13], 64, 64, 4
        $region40: #{tpu_custom_call.1} parent=11 // pred_fallthru
          _
        // Predicated region
        $region41: #{tpu_custom_call.1} parent=11 // pred_check
          %p691 = pneg %p247
        $region42: #{tpu_custom_call.1} parent=11 // pred_check_branch
          %693 = sbr.rel (%p691) target = $region44
        $region43: #{tpu_custom_call.1} parent=11 // pred_region
          %695 = vsyncadd [#allocation16], 0
          %s697 = sshll.u32 %s8, 4
          %s698 = int_to_ptr.hbm [resolvable:$true] %s697
          %s699 = sshll.u32 [#allocation15], 4
          %s700 = int_to_ptr.vmem [resolvable:$true] %s699
          %702 = dma.hbm_to_vmem [thread:$0]  %s698, 16, %s700, [#allocation16]
        $region44: #{tpu_custom_call.1} parent=11 // pred_fallthru
          _
        // Predicated region
        $region45: #{tpu_custom_call.1} parent=11 // pred_check
          %p703 = pneg %p268
        $region46: #{tpu_custom_call.1} parent=11 // pred_check_branch
          %705 = sbr.rel (%p703) target = $region48
        $region47: #{tpu_custom_call.1} parent=11 // pred_region
          %707 = vsyncadd [#allocation16], 0
          %s709 = sshll.u32 %s9, 4
          %s710 = int_to_ptr.hbm [resolvable:$true] %s709
          %s711 = sshll.u32 [#allocation17], 4
          %s712 = int_to_ptr.vmem [resolvable:$true] %s711
          %714 = dma.hbm_to_vmem [thread:$0]  %s710, 16, %s712, [#allocation16]
        $region48: #{tpu_custom_call.1} parent=11 // pred_fallthru
          _
        // Predicated region
        $region49: #{tpu_custom_call.1} parent=11 // pred_check
          %p715 = pneg %p289
        $region50: #{tpu_custom_call.1} parent=11 // pred_check_branch
          %717 = sbr.rel (%p715) target = $region52
        $region51: #{tpu_custom_call.1} parent=11 // pred_region
          %719 = vsyncadd [#allocation19], 0
          %s720 = sshll.u32 %s10, 4
          %s721 = int_to_ptr.hbm [resolvable:$true] %s720
          %s722 = sshll.u32 [#allocation18], 4
          %s723 = int_to_ptr.vmem [resolvable:$true] %s722
          %728 = dma.hbm_to_vmem [thread:$0]  %s721, 1024, %s723, [#allocation19], 64, 64, 4
        $region52: #{tpu_custom_call.1} parent=11 // pred_fallthru
          _
        // Predicated region
        $region53: #{tpu_custom_call.1} parent=11 // pred_check
          %p729 = pneg %p310
        $region54: #{tpu_custom_call.1} parent=11 // pred_check_branch
          %731 = sbr.rel (%p729) target = $region56
        $region55: #{tpu_custom_call.1} parent=11 // pred_region
          %733 = vsyncadd [#allocation19], 0
          %s735 = sshll.u32 %s11, 4
          %s736 = int_to_ptr.hbm [resolvable:$true] %s735
          %s737 = sshll.u32 [#allocation20], 4
          %s738 = int_to_ptr.vmem [resolvable:$true] %s737
          %740 = dma.hbm_to_vmem [thread:$0]  %s736, 16, %s738, [#allocation19]
        $region56: #{tpu_custom_call.1} parent=11 // pred_fallthru
          _
        // Predicated region
        $region57: #{tpu_custom_call.1} parent=11 // pred_check
          %p741 = pneg %p331
        $region58: #{tpu_custom_call.1} parent=11 // pred_check_branch
          %743 = sbr.rel (%p741) target = $region60
        $region59: #{tpu_custom_call.1} parent=11 // pred_region
          %745 = vsyncadd [#allocation22], 0
          %s747 = sshll.u32 %s12, 4
          %s748 = int_to_ptr.hbm [resolvable:$true] %s747
          %s749 = sshll.u32 [#allocation21], 4
          %s750 = int_to_ptr.vmem [resolvable:$true] %s749
          %752 = dma.hbm_to_vmem [thread:$0]  %s748, 16, %s750, [#allocation22]
        $region60: #{tpu_custom_call.1} parent=11 // pred_fallthru
          _
        // Predicated region
        $region61: #{tpu_custom_call.1} parent=11 // pred_check
          %p753 = pneg %p352
        $region62: #{tpu_custom_call.1} parent=11 // pred_check_branch
          %755 = sbr.rel (%p753) target = $region64
        $region63: #{tpu_custom_call.1} parent=11 // pred_region
          _
        $region64: #{tpu_custom_call.1} parent=11 // pred_fallthru
          _
        // Predicated region
        $region65: #{tpu_custom_call.1} parent=11 // pred_check
          %p756 = pneg %p373
        $region66: #{tpu_custom_call.1} parent=11 // pred_check_branch
          %758 = sbr.rel (%p756) target = $region68
        $region67: #{tpu_custom_call.1} parent=11 // pred_region
          _
        $region68: #{tpu_custom_call.1} parent=11 // pred_fallthru
          _
        // Predicated region
        $region69: #{tpu_custom_call.1} parent=11 // pred_check
          %p759 = pneg %p394
        $region70: #{tpu_custom_call.1} parent=11 // pred_check_branch
          %761 = sbr.rel (%p759) target = $region72
        $region71: #{tpu_custom_call.1} parent=11 // pred_region
          _
        $region72: #{tpu_custom_call.1} parent=11 // pred_fallthru
          _
        // Predicated region
        $region73: #{tpu_custom_call.1} parent=11 // pred_check
          %p762 = pneg %p415
        $region74: #{tpu_custom_call.1} parent=11 // pred_check_branch
          %764 = sbr.rel (%p762) target = $region76
        $region75: #{tpu_custom_call.1} parent=11 // pred_region
          _
        $region76: #{tpu_custom_call.1} parent=11 // pred_fallthru
          _
        // Predicated region
        $region77: #{tpu_custom_call.1} parent=11 // pred_check
          %p765 = pneg %p436
        $region78: #{tpu_custom_call.1} parent=11 // pred_check_branch
          %767 = sbr.rel (%p765) target = $region80
        $region79: #{tpu_custom_call.1} parent=11 // pred_region
          _
        $region80: #{tpu_custom_call.1} parent=11 // pred_fallthru
          _
        // Predicated region
        $region81: #{tpu_custom_call.1} parent=11 // pred_check
          %p768 = pneg %p457
        $region82: #{tpu_custom_call.1} parent=11 // pred_check_branch
          %770 = sbr.rel (%p768) target = $region84
        $region83: #{tpu_custom_call.1} parent=11 // pred_region
          _
        $region84: #{tpu_custom_call.1} parent=11 // pred_fallthru
          _
        // Predicated region
        $region85: #{tpu_custom_call.1} parent=11 // pred_check
          %p771 = pneg %p478
        $region86: #{tpu_custom_call.1} parent=11 // pred_check_branch
          %773 = sbr.rel (%p771) target = $region88
        $region87: #{tpu_custom_call.1} parent=11 // pred_region
          %775 = vsyncadd [#allocation22], 0
          %s776 = sshll.u32 %s19, 4
          %s777 = int_to_ptr.hbm [resolvable:$true] %s776
          %s778 = sshll.u32 [#allocation23], 4
          %s779 = int_to_ptr.vmem [resolvable:$true] %s778
          %784 = dma.hbm_to_vmem [thread:$0]  %s777, 8192, %s779, [#allocation22], 128, 128, 8
        $region88: #{tpu_custom_call.1} parent=11 // pred_fallthru
          _
        // Predicated region
        $region89: #{tpu_custom_call.1} parent=11 // pred_check
          %p785 = pneg %p499
        $region90: #{tpu_custom_call.1} parent=11 // pred_check_branch
          %787 = sbr.rel (%p785) target = $region92
        $region91: #{tpu_custom_call.1} parent=11 // pred_region
          _
        $region92: #{tpu_custom_call.1} parent=11 // pred_fallthru
          _
        // Predicated region
        $region93: #{tpu_custom_call.1} parent=11 // pred_check
          %p788 = pneg %p520
        $region94: #{tpu_custom_call.1} parent=11 // pred_check_branch
          %790 = sbr.rel (%p788) target = $region96
        $region95: #{tpu_custom_call.1} parent=11 // pred_region
          _
        $region96: #{tpu_custom_call.1} parent=11 // pred_fallthru
          _
        // Predicated region
        $region97: #{tpu_custom_call.1} parent=11 // pred_check
          %p791 = pneg %p541
        $region98: #{tpu_custom_call.1} parent=11 // pred_check_branch
          %793 = sbr.rel (%p791) target = $region100
        $region99: #{tpu_custom_call.1} parent=11 // pred_region
          _
        $region100: #{tpu_custom_call.1} parent=11 // pred_fallthru
          _
        // Predicated region
        $region101: #{tpu_custom_call.1} parent=11 // pred_check
          %p794 = pneg %p562
        $region102: #{tpu_custom_call.1} parent=11 // pred_check_branch
          %796 = sbr.rel (%p794) target = $region104
        $region103: #{tpu_custom_call.1} parent=11 // pred_region
          _
        $region104: #{tpu_custom_call.1} parent=11 // pred_fallthru
          _
      $region12: #{tpu_custom_call.1} parent=5 // pred_fallthru
        _
      %p797 = scmp.lt.s32.totalorder %s39, 2
      // Predicated region
      $region105: #{tpu_custom_call.1} parent=5 // pred_check
        %p798 = pneg %p797
      $region106: #{tpu_custom_call.1} parent=5 // pred_check_branch
        %800 = sbr.rel (%p798) target = $region108
      $region107: #{tpu_custom_call.1} parent=5 // pred_region
        // Predicated region
        $region109: #{tpu_custom_call.1} parent=107 // pred_check
          %p801 = pneg %p73
        $region110: #{tpu_custom_call.1} parent=107 // pred_check_branch
          %803 = sbr.rel (%p801) target = $region112
        $region111: #{tpu_custom_call.1} parent=107 // pred_region
          %s804 = smul.u32 32, %s47
          %p805 = scmp.lt.s32.totalorder %s46, 1
          %s806 = scalar_select %p805, %s46, 1
          %p807 = scmp.lt.s32.totalorder %s804, 31
          %s808 = scalar_select %p807, %s804, 31
          %s809 = smul.addr %s806, 32
          %s810 = sadd.s32 %s808, %s809
          %s811 = smul.addr %s810, 8
          %s812 = scalar_lea.vmem %s0, %s811
          %s813 = smul.u32 32, %s47
        $region112: #{tpu_custom_call.1} parent=107 // pred_fallthru
          _
      $region108: #{tpu_custom_call.1} parent=5 // pred_fallthru
        _
      %p814 = scmp.le.s32.totalorder 1, %s39
      %p815 = scmp.lt.s32.totalorder %s39, 3
      %p816 = pnand %p814, %p815
      %p817 = pneg %p816
      // Predicated region
      $region113: #{tpu_custom_call.1} parent=5 // pred_check
        _
      $region114: #{tpu_custom_call.1} parent=5 // pred_check_branch
        %819 = sbr.rel (%p816) target = $region116
      $region115: #{tpu_custom_call.1} parent=5 // pred_region
        %s820 = ssub.s32 %s39, 1
        // Predicated region
        $region117: #{tpu_custom_call.1} parent=115 // pred_check
          %p821 = pneg %p100
        $region118: #{tpu_custom_call.1} parent=115 // pred_check_branch
          %823 = sbr.rel (%p821) target = $region120
        $region119: #{tpu_custom_call.1} parent=115 // pred_region
          %825 = dma.done [#allocation5], 64
        $region120: #{tpu_custom_call.1} parent=115 // pred_fallthru
          _
        // Predicated region
        $region121: #{tpu_custom_call.1} parent=115 // pred_check
          %p826 = pneg %p121
        $region122: #{tpu_custom_call.1} parent=115 // pred_check_branch
          %828 = sbr.rel (%p826) target = $region124
        $region123: #{tpu_custom_call.1} parent=115 // pred_region
          %830 = dma.done [#allocation7], 16
        $region124: #{tpu_custom_call.1} parent=115 // pred_fallthru
          _
        // Predicated region
        $region125: #{tpu_custom_call.1} parent=115 // pred_check
          %p831 = pneg %p142
        $region126: #{tpu_custom_call.1} parent=115 // pred_check_branch
          %833 = sbr.rel (%p831) target = $region128
        $region127: #{tpu_custom_call.1} parent=115 // pred_region
          %835 = dma.done [#allocation7], 16
        $region128: #{tpu_custom_call.1} parent=115 // pred_fallthru
          _
        // Predicated region
        $region129: #{tpu_custom_call.1} parent=115 // pred_check
          %p836 = pneg %p163
        $region130: #{tpu_custom_call.1} parent=115 // pred_check_branch
          %838 = sbr.rel (%p836) target = $region132
        $region131: #{tpu_custom_call.1} parent=115 // pred_region
          %840 = dma.done [#allocation10], 256
        $region132: #{tpu_custom_call.1} parent=115 // pred_fallthru
          _
        // Predicated region
        $region133: #{tpu_custom_call.1} parent=115 // pred_check
          %p841 = pneg %p184
        $region134: #{tpu_custom_call.1} parent=115 // pred_check_branch
          %843 = sbr.rel (%p841) target = $region136
        $region135: #{tpu_custom_call.1} parent=115 // pred_region
          %845 = dma.done [#allocation10], 16
        $region136: #{tpu_custom_call.1} parent=115 // pred_fallthru
          _
        // Predicated region
        $region137: #{tpu_custom_call.1} parent=115 // pred_check
          %p846 = pneg %p205
        $region138: #{tpu_custom_call.1} parent=115 // pred_check_branch
          %848 = sbr.rel (%p846) target = $region140
        $region139: #{tpu_custom_call.1} parent=115 // pred_region
          %850 = dma.done [#allocation13], 16
        $region140: #{tpu_custom_call.1} parent=115 // pred_fallthru
          _
        // Predicated region
        $region141: #{tpu_custom_call.1} parent=115 // pred_check
          %p851 = pneg %p226
        $region142: #{tpu_custom_call.1} parent=115 // pred_check_branch
          %853 = sbr.rel (%p851) target = $region144
        $region143: #{tpu_custom_call.1} parent=115 // pred_region
          %855 = dma.done [#allocation13], 512
        $region144: #{tpu_custom_call.1} parent=115 // pred_fallthru
          _
        // Predicated region
        $region145: #{tpu_custom_call.1} parent=115 // pred_check
          %p856 = pneg %p247
        $region146: #{tpu_custom_call.1} parent=115 // pred_check_branch
          %858 = sbr.rel (%p856) target = $region148
        $region147: #{tpu_custom_call.1} parent=115 // pred_region
          %860 = dma.done [#allocation16], 16
        $region148: #{tpu_custom_call.1} parent=115 // pred_fallthru
          _
        // Predicated region
        $region149: #{tpu_custom_call.1} parent=115 // pred_check
          %p861 = pneg %p268
        $region150: #{tpu_custom_call.1} parent=115 // pred_check_branch
          %863 = sbr.rel (%p861) target = $region152
        $region151: #{tpu_custom_call.1} parent=115 // pred_region
          %865 = dma.done [#allocation16], 16
        $region152: #{tpu_custom_call.1} parent=115 // pred_fallthru
          _
        // Predicated region
        $region153: #{tpu_custom_call.1} parent=115 // pred_check
          %p866 = pneg %p289
        $region154: #{tpu_custom_call.1} parent=115 // pred_check_branch
          %868 = sbr.rel (%p866) target = $region156
        $region155: #{tpu_custom_call.1} parent=115 // pred_region
          %870 = dma.done [#allocation19], 1024
        $region156: #{tpu_custom_call.1} parent=115 // pred_fallthru
          _
        // Predicated region
        $region157: #{tpu_custom_call.1} parent=115 // pred_check
          %p871 = pneg %p310
        $region158: #{tpu_custom_call.1} parent=115 // pred_check_branch
          %873 = sbr.rel (%p871) target = $region160
        $region159: #{tpu_custom_call.1} parent=115 // pred_region
          %875 = dma.done [#allocation19], 16
        $region160: #{tpu_custom_call.1} parent=115 // pred_fallthru
          _
        // Predicated region
        $region161: #{tpu_custom_call.1} parent=115 // pred_check
          %p876 = pneg %p331
        $region162: #{tpu_custom_call.1} parent=115 // pred_check_branch
          %878 = sbr.rel (%p876) target = $region164
        $region163: #{tpu_custom_call.1} parent=115 // pred_region
          %880 = dma.done [#allocation22], 16
        $region164: #{tpu_custom_call.1} parent=115 // pred_fallthru
          _
        // Predicated region
        $region165: #{tpu_custom_call.1} parent=115 // pred_check
          %p881 = pneg %p478
        $region166: #{tpu_custom_call.1} parent=115 // pred_check_branch
          %883 = sbr.rel (%p881) target = $region168
        $region167: #{tpu_custom_call.1} parent=115 // pred_region
          %885 = dma.done [#allocation22], 8192
        $region168: #{tpu_custom_call.1} parent=115 // pred_fallthru
          _
        %s886 = smul.u32 32, %s49
        %p887 = scmp.lt.s32.totalorder %s48, 1
        %s888 = scalar_select %p887, %s48, 1
        %p889 = scmp.lt.s32.totalorder %s886, 31
        %s890 = scalar_select %p889, %s886, 31
        %s891 = smul.addr %s888, 32
        %s892 = sadd.s32 %s890, %s891
        %s893 = smul.addr %s892, 8
        %s894 = scalar_lea.vmem %s0, %s893
        %p895 = pneg %p79
        %p896 = pneg %p76
        %p897 = pneg %p100
        %p898 = pneg %p97
        %p899 = pneg %p121
        %p900 = pneg %p118
        %p901 = pneg %p142
        %p902 = pneg %p139
        %p903 = pneg %p163
        %p904 = pneg %p160
        %p905 = pneg %p184
        %p906 = pneg %p181
        %p907 = pneg %p205
        %p908 = pneg %p202
        %p909 = pneg %p226
        %p910 = pneg %p223
        %p911 = pneg %p247
        %p912 = pneg %p244
        %p913 = pneg %p268
        %p914 = pneg %p265
        %p915 = pneg %p289
        %p916 = pneg %p286
        %p917 = pneg %p310
        %p918 = pneg %p307
        %p919 = pneg %p331
        %p920 = pneg %p328
        %p921 = pneg %p352
        %p922 = pneg %p349
        %p923 = pneg %p373
        %p924 = pneg %p370
        %p925 = pneg %p394
        %p926 = pneg %p391
        %p927 = pneg %p415
        %p928 = pneg %p412
        %p929 = pneg %p436
        %p930 = pneg %p433
        %p931 = pneg %p457
        %p932 = pneg %p454
        %p933 = pneg %p478
        %p934 = pneg %p475
        %p935 = pneg %p499
        %p936 = pneg %p496
        %p937 = pneg %p520
        %p938 = pneg %p517
        %p939 = pneg %p541
        %p940 = pneg %p538
        %p941 = pneg %p562
        %p942 = pneg %p559
        %p943 = pneg %p588
        %p944 = pneg %p585
        %p945 = scmp.lt.s32.totalorder %s48, 1
        %s946 = scalar_select %p945, %s48, 1
        %s947 = scalar_lea.vmem %s24, %s946
        %s948 = smul.u32 32, %s49
        %p949 = scmp.lt.s32.totalorder %s48, 1
        %s950 = scalar_select %p949, %s48, 1
        %p951 = scmp.lt.s32.totalorder %s948, 31
        %s952 = scalar_select %p951, %s948, 31
        %s953 = smul.addr %s950, 32
        %s954 = sadd.s32 %s952, %s953
        %s955 = smul.addr %s954, 8
        %s956 = scalar_lea.vmem %s0, %s955
        %s957 = smul.u32 32, %s49
        %p958 = scmp.lt.s32.totalorder %s48, 1
        %s959 = scalar_select %p958, %s48, 1
        %s960 = scalar_lea.vmem %s24, %s959
        %v962 = vld [vmem:[%s956] sm:$0xff]
        %v963 = vld [vmem:[%s956 + $0x8] sm:$0xff]
        %v964 = vld [vmem:[%s956 + $0x10] sm:$0xff]
        %v965 = vld [vmem:[%s956 + $0x18] sm:$0xff]
        %v966 = vld [vmem:[%s956 + $0x20] sm:$0xff]
        %v967 = vld [vmem:[%s956 + $0x28] sm:$0xff]
        %v968 = vld [vmem:[%s956 + $0x30] sm:$0xff]
        %v969 = vld [vmem:[%s956 + $0x38] sm:$0xff]
        %v970 = vld [vmem:[%s956 + $0x40] sm:$0xff]
        %v971 = vld [vmem:[%s956 + $0x48] sm:$0xff]
        %v972 = vld [vmem:[%s956 + $0x50] sm:$0xff]
        %v973 = vld [vmem:[%s956 + $0x58] sm:$0xff]
        %v974 = vld [vmem:[%s956 + $0x60] sm:$0xff]
        %v975 = vld [vmem:[%s956 + $0x68] sm:$0xff]
        %v976 = vld [vmem:[%s956 + $0x70] sm:$0xff]
        %v977 = vld [vmem:[%s956 + $0x78] sm:$0xff]
        %v978 = vld [vmem:[%s956 + $0x80] sm:$0xff]
        %v979 = vld [vmem:[%s956 + $0x88] sm:$0xff]
        %v980 = vld [vmem:[%s956 + $0x90] sm:$0xff]
        %v981 = vld [vmem:[%s956 + $0x98] sm:$0xff]
        %v982 = vld [vmem:[%s956 + $0xa0] sm:$0xff]
        %v983 = vld [vmem:[%s956 + $0xa8] sm:$0xff]
        %v984 = vld [vmem:[%s956 + $0xb0] sm:$0xff]
        %v985 = vld [vmem:[%s956 + $0xb8] sm:$0xff]
        %v986 = vld [vmem:[%s956 + $0xc0] sm:$0xff]
        %v987 = vld [vmem:[%s956 + $0xc8] sm:$0xff]
        %v988 = vld [vmem:[%s956 + $0xd0] sm:$0xff]
        %v989 = vld [vmem:[%s956 + $0xd8] sm:$0xff]
        %v990 = vld [vmem:[%s956 + $0xe0] sm:$0xff]
        %v991 = vld [vmem:[%s956 + $0xe8] sm:$0xff]
        %v992 = vld [vmem:[%s956 + $0xf0] sm:$0xff]
        %v993 = vld [vmem:[%s956 + $0xf8] sm:$0xff]
        %v994 = vld [vmem:[#allocation6] sm:$0x1]
        %v995 = vld [vmem:[#allocation8] sm:$0x1]
        %v996 = vld [vmem:[#allocation4] sm:$0x7]
        %998 = vset.pattern.permute.xlu0 0
        %999 = vperm.xlu0 %998, %v962
        %v1000 = vpop.permute.xlu0 %999
        %1003 = vset.pattern.permute.xlu0 0
        %1004 = vperm.xlu0 %1003, %v963
        %v1005 = vpop.permute.xlu0 %1004
        %1008 = vset.pattern.permute.xlu0 0
        %1009 = vperm.xlu0 %1008, %v964
        %v1010 = vpop.permute.xlu0 %1009
        %1013 = vset.pattern.permute.xlu0 0
        %1014 = vperm.xlu0 %1013, %v965
        %v1015 = vpop.permute.xlu0 %1014
        %1018 = vset.pattern.permute.xlu0 0
        %1019 = vperm.xlu0 %1018, %v966
        %v1020 = vpop.permute.xlu0 %1019
        %1023 = vset.pattern.permute.xlu0 0
        %1024 = vperm.xlu0 %1023, %v967
        %v1025 = vpop.permute.xlu0 %1024
        %1028 = vset.pattern.permute.xlu0 0
        %1029 = vperm.xlu0 %1028, %v968
        %v1030 = vpop.permute.xlu0 %1029
        %1033 = vset.pattern.permute.xlu0 0
        %1034 = vperm.xlu0 %1033, %v969
        %v1035 = vpop.permute.xlu0 %1034
        %1038 = vset.pattern.permute.xlu0 0
        %1039 = vperm.xlu0 %1038, %v970
        %v1040 = vpop.permute.xlu0 %1039
        %1043 = vset.pattern.permute.xlu0 0
        %1044 = vperm.xlu0 %1043, %v971
        %v1045 = vpop.permute.xlu0 %1044
        %1048 = vset.pattern.permute.xlu0 0
        %1049 = vperm.xlu0 %1048, %v972
        %v1050 = vpop.permute.xlu0 %1049
        %1053 = vset.pattern.permute.xlu0 0
        %1054 = vperm.xlu0 %1053, %v973
        %v1055 = vpop.permute.xlu0 %1054
        %1058 = vset.pattern.permute.xlu0 0
        %1059 = vperm.xlu0 %1058, %v974
        %v1060 = vpop.permute.xlu0 %1059
        %1063 = vset.pattern.permute.xlu0 0
        %1064 = vperm.xlu0 %1063, %v975
        %v1065 = vpop.permute.xlu0 %1064
        %1068 = vset.pattern.permute.xlu0 0
        %1069 = vperm.xlu0 %1068, %v976
        %v1070 = vpop.permute.xlu0 %1069
        %1073 = vset.pattern.permute.xlu0 0
        %1074 = vperm.xlu0 %1073, %v977
        %v1075 = vpop.permute.xlu0 %1074
        %1078 = vset.pattern.permute.xlu0 0
        %1079 = vperm.xlu0 %1078, %v978
        %v1080 = vpop.permute.xlu0 %1079
        %1083 = vset.pattern.permute.xlu0 0
        %1084 = vperm.xlu0 %1083, %v979
        %v1085 = vpop.permute.xlu0 %1084
        %1088 = vset.pattern.permute.xlu0 0
        %1089 = vperm.xlu0 %1088, %v980
        %v1090 = vpop.permute.xlu0 %1089
        %1093 = vset.pattern.permute.xlu0 0
        %1094 = vperm.xlu0 %1093, %v981
        %v1095 = vpop.permute.xlu0 %1094
        %1098 = vset.pattern.permute.xlu0 0
        %1099 = vperm.xlu0 %1098, %v982
        %v1100 = vpop.permute.xlu0 %1099
        %1103 = vset.pattern.permute.xlu0 0
        %1104 = vperm.xlu0 %1103, %v983
        %v1105 = vpop.permute.xlu0 %1104
        %1108 = vset.pattern.permute.xlu0 0
        %1109 = vperm.xlu0 %1108, %v984
        %v1110 = vpop.permute.xlu0 %1109
        %1113 = vset.pattern.permute.xlu0 0
        %1114 = vperm.xlu0 %1113, %v985
        %v1115 = vpop.permute.xlu0 %1114
        %1118 = vset.pattern.permute.xlu0 0
        %1119 = vperm.xlu0 %1118, %v986
        %v1120 = vpop.permute.xlu0 %1119
        %1123 = vset.pattern.permute.xlu0 0
        %1124 = vperm.xlu0 %1123, %v987
        %v1125 = vpop.permute.xlu0 %1124
        %1128 = vset.pattern.permute.xlu0 0
        %1129 = vperm.xlu0 %1128, %v988
        %v1130 = vpop.permute.xlu0 %1129
        %1133 = vset.pattern.permute.xlu0 0
        %1134 = vperm.xlu0 %1133, %v989
        %v1135 = vpop.permute.xlu0 %1134
        %1138 = vset.pattern.permute.xlu0 0
        %1139 = vperm.xlu0 %1138, %v990
        %v1140 = vpop.permute.xlu0 %1139
        %1143 = vset.pattern.permute.xlu0 0
        %1144 = vperm.xlu0 %1143, %v991
        %v1145 = vpop.permute.xlu0 %1144
        %1148 = vset.pattern.permute.xlu0 0
        %1149 = vperm.xlu0 %1148, %v992
        %v1150 = vpop.permute.xlu0 %1149
        %1153 = vset.pattern.permute.xlu0 0
        %1154 = vperm.xlu0 %1153, %v993
        %v1155 = vpop.permute.xlu0 %1154
        %v1157 = vperm.slane %v996, 0
        %v1158 = vmul.f32 %v1000, %v1157
        %v1159 = vmul.f32 %v1005, %v1157
        %v1160 = vmul.f32 %v1010, %v1157
        %v1161 = vmul.f32 %v1015, %v1157
        %v1162 = vmul.f32 %v1020, %v1157
        %v1163 = vmul.f32 %v1025, %v1157
        %v1164 = vmul.f32 %v1030, %v1157
        %v1165 = vmul.f32 %v1035, %v1157
        %v1166 = vmul.f32 %v1040, %v1157
        %v1167 = vmul.f32 %v1045, %v1157
        %v1168 = vmul.f32 %v1050, %v1157
        %v1169 = vmul.f32 %v1055, %v1157
        %v1170 = vmul.f32 %v1060, %v1157
        %v1171 = vmul.f32 %v1065, %v1157
        %v1172 = vmul.f32 %v1070, %v1157
        %v1173 = vmul.f32 %v1075, %v1157
        %v1174 = vmul.f32 %v1080, %v1157
        %v1175 = vmul.f32 %v1085, %v1157
        %v1176 = vmul.f32 %v1090, %v1157
        %v1177 = vmul.f32 %v1095, %v1157
        %v1178 = vmul.f32 %v1100, %v1157
        %v1179 = vmul.f32 %v1105, %v1157
        %v1180 = vmul.f32 %v1110, %v1157
        %v1181 = vmul.f32 %v1115, %v1157
        %v1182 = vmul.f32 %v1120, %v1157
        %v1183 = vmul.f32 %v1125, %v1157
        %v1184 = vmul.f32 %v1130, %v1157
        %v1185 = vmul.f32 %v1135, %v1157
        %v1186 = vmul.f32 %v1140, %v1157
        %v1187 = vmul.f32 %v1145, %v1157
        %v1188 = vmul.f32 %v1150, %v1157
        %v1189 = vmul.f32 %v1155, %v1157
        %1190 = vset.pattern.permute.xlu0 1
        %1191 = vperm.xlu0 %1190, %v962
        %v1192 = vpop.permute.xlu0 %1191
        %1194 = vset.pattern.permute.xlu0 1
        %1195 = vperm.xlu0 %1194, %v963
        %v1196 = vpop.permute.xlu0 %1195
        %1198 = vset.pattern.permute.xlu0 1
        %1199 = vperm.xlu0 %1198, %v964
        %v1200 = vpop.permute.xlu0 %1199
        %1202 = vset.pattern.permute.xlu0 1
        %1203 = vperm.xlu0 %1202, %v965
        %v1204 = vpop.permute.xlu0 %1203
        %1206 = vset.pattern.permute.xlu0 1
        %1207 = vperm.xlu0 %1206, %v966
        %v1208 = vpop.permute.xlu0 %1207
        %1210 = vset.pattern.permute.xlu0 1
        %1211 = vperm.xlu0 %1210, %v967
        %v1212 = vpop.permute.xlu0 %1211
        %1214 = vset.pattern.permute.xlu0 1
        %1215 = vperm.xlu0 %1214, %v968
        %v1216 = vpop.permute.xlu0 %1215
        %1218 = vset.pattern.permute.xlu0 1
        %1219 = vperm.xlu0 %1218, %v969
        %v1220 = vpop.permute.xlu0 %1219
        %1222 = vset.pattern.permute.xlu0 1
        %1223 = vperm.xlu0 %1222, %v970
        %v1224 = vpop.permute.xlu0 %1223
        %1226 = vset.pattern.permute.xlu0 1
        %1227 = vperm.xlu0 %1226, %v971
        %v1228 = vpop.permute.xlu0 %1227
        %1230 = vset.pattern.permute.xlu0 1
        %1231 = vperm.xlu0 %1230, %v972
        %v1232 = vpop.permute.xlu0 %1231
        %1234 = vset.pattern.permute.xlu0 1
        %1235 = vperm.xlu0 %1234, %v973
        %v1236 = vpop.permute.xlu0 %1235
        %1238 = vset.pattern.permute.xlu0 1
        %1239 = vperm.xlu0 %1238, %v974
        %v1240 = vpop.permute.xlu0 %1239
        %1242 = vset.pattern.permute.xlu0 1
        %1243 = vperm.xlu0 %1242, %v975
        %v1244 = vpop.permute.xlu0 %1243
        %1246 = vset.pattern.permute.xlu0 1
        %1247 = vperm.xlu0 %1246, %v976
        %v1248 = vpop.permute.xlu0 %1247
        %1250 = vset.pattern.permute.xlu0 1
        %1251 = vperm.xlu0 %1250, %v977
        %v1252 = vpop.permute.xlu0 %1251
        %1254 = vset.pattern.permute.xlu0 1
        %1255 = vperm.xlu0 %1254, %v978
        %v1256 = vpop.permute.xlu0 %1255
        %1258 = vset.pattern.permute.xlu0 1
        %1259 = vperm.xlu0 %1258, %v979
        %v1260 = vpop.permute.xlu0 %1259
        %1262 = vset.pattern.permute.xlu0 1
        %1263 = vperm.xlu0 %1262, %v980
        %v1264 = vpop.permute.xlu0 %1263
        %1266 = vset.pattern.permute.xlu0 1
        %1267 = vperm.xlu0 %1266, %v981
        %v1268 = vpop.permute.xlu0 %1267
        %1270 = vset.pattern.permute.xlu0 1
        %1271 = vperm.xlu0 %1270, %v982
        %v1272 = vpop.permute.xlu0 %1271
        %1274 = vset.pattern.permute.xlu0 1
        %1275 = vperm.xlu0 %1274, %v983
        %v1276 = vpop.permute.xlu0 %1275
        %1278 = vset.pattern.permute.xlu0 1
        %1279 = vperm.xlu0 %1278, %v984
        %v1280 = vpop.permute.xlu0 %1279
        %1282 = vset.pattern.permute.xlu0 1
        %1283 = vperm.xlu0 %1282, %v985
        %v1284 = vpop.permute.xlu0 %1283
        %1286 = vset.pattern.permute.xlu0 1
        %1287 = vperm.xlu0 %1286, %v986
        %v1288 = vpop.permute.xlu0 %1287
        %1290 = vset.pattern.permute.xlu0 1
        %1291 = vperm.xlu0 %1290, %v987
        %v1292 = vpop.permute.xlu0 %1291
        %1294 = vset.pattern.permute.xlu0 1
        %1295 = vperm.xlu0 %1294, %v988
        %v1296 = vpop.permute.xlu0 %1295
        %1298 = vset.pattern.permute.xlu0 1
        %1299 = vperm.xlu0 %1298, %v989
        %v1300 = vpop.permute.xlu0 %1299
        %1302 = vset.pattern.permute.xlu0 1
        %1303 = vperm.xlu0 %1302, %v990
        %v1304 = vpop.permute.xlu0 %1303
        %1306 = vset.pattern.permute.xlu0 1
        %1307 = vperm.xlu0 %1306, %v991
        %v1308 = vpop.permute.xlu0 %1307
        %1310 = vset.pattern.permute.xlu0 1
        %1311 = vperm.xlu0 %1310, %v992
        %v1312 = vpop.permute.xlu0 %1311
        %1314 = vset.pattern.permute.xlu0 1
        %1315 = vperm.xlu0 %1314, %v993
        %v1316 = vpop.permute.xlu0 %1315
        %v1318 = vperm.slane %v996, 1
        %v1319 = vmul.f32 %v1192, %v1318
        %v1320 = vmul.f32 %v1196, %v1318
        %v1321 = vmul.f32 %v1200, %v1318
        %v1322 = vmul.f32 %v1204, %v1318
        %v1323 = vmul.f32 %v1208, %v1318
        %v1324 = vmul.f32 %v1212, %v1318
        %v1325 = vmul.f32 %v1216, %v1318
        %v1326 = vmul.f32 %v1220, %v1318
        %v1327 = vmul.f32 %v1224, %v1318
        %v1328 = vmul.f32 %v1228, %v1318
        %v1329 = vmul.f32 %v1232, %v1318
        %v1330 = vmul.f32 %v1236, %v1318
        %v1331 = vmul.f32 %v1240, %v1318
        %v1332 = vmul.f32 %v1244, %v1318
        %v1333 = vmul.f32 %v1248, %v1318
        %v1334 = vmul.f32 %v1252, %v1318
        %v1335 = vmul.f32 %v1256, %v1318
        %v1336 = vmul.f32 %v1260, %v1318
        %v1337 = vmul.f32 %v1264, %v1318
        %v1338 = vmul.f32 %v1268, %v1318
        %v1339 = vmul.f32 %v1272, %v1318
        %v1340 = vmul.f32 %v1276, %v1318
        %v1341 = vmul.f32 %v1280, %v1318
        %v1342 = vmul.f32 %v1284, %v1318
        %v1343 = vmul.f32 %v1288, %v1318
        %v1344 = vmul.f32 %v1292, %v1318
        %v1345 = vmul.f32 %v1296, %v1318
        %v1346 = vmul.f32 %v1300, %v1318
        %v1347 = vmul.f32 %v1304, %v1318
        %v1348 = vmul.f32 %v1308, %v1318
        %v1349 = vmul.f32 %v1312, %v1318
        %v1350 = vmul.f32 %v1316, %v1318
        %v1351 = vadd.f32 %v1158, %v1319
        %v1352 = vadd.f32 %v1159, %v1320
        %v1353 = vadd.f32 %v1160, %v1321
        %v1354 = vadd.f32 %v1161, %v1322
        %v1355 = vadd.f32 %v1162, %v1323
        %v1356 = vadd.f32 %v1163, %v1324
        %v1357 = vadd.f32 %v1164, %v1325
        %v1358 = vadd.f32 %v1165, %v1326
        %v1359 = vadd.f32 %v1166, %v1327
        %v1360 = vadd.f32 %v1167, %v1328
        %v1361 = vadd.f32 %v1168, %v1329
        %v1362 = vadd.f32 %v1169, %v1330
        %v1363 = vadd.f32 %v1170, %v1331
        %v1364 = vadd.f32 %v1171, %v1332
        %v1365 = vadd.f32 %v1172, %v1333
        %v1366 = vadd.f32 %v1173, %v1334
        %v1367 = vadd.f32 %v1174, %v1335
        %v1368 = vadd.f32 %v1175, %v1336
        %v1369 = vadd.f32 %v1176, %v1337
        %v1370 = vadd.f32 %v1177, %v1338
        %v1371 = vadd.f32 %v1178, %v1339
        %v1372 = vadd.f32 %v1179, %v1340
        %v1373 = vadd.f32 %v1180, %v1341
        %v1374 = vadd.f32 %v1181, %v1342
        %v1375 = vadd.f32 %v1182, %v1343
        %v1376 = vadd.f32 %v1183, %v1344
        %v1377 = vadd.f32 %v1184, %v1345
        %v1378 = vadd.f32 %v1185, %v1346
        %v1379 = vadd.f32 %v1186, %v1347
        %v1380 = vadd.f32 %v1187, %v1348
        %v1381 = vadd.f32 %v1188, %v1349
        %v1382 = vadd.f32 %v1189, %v1350
        %1383 = vset.pattern.permute.xlu0 2
        %1384 = vperm.xlu0 %1383, %v962
        %v1385 = vpop.permute.xlu0 %1384
        %1387 = vset.pattern.permute.xlu0 2
        %1388 = vperm.xlu0 %1387, %v963
        %v1389 = vpop.permute.xlu0 %1388
        %1391 = vset.pattern.permute.xlu0 2
        %1392 = vperm.xlu0 %1391, %v964
        %v1393 = vpop.permute.xlu0 %1392
        %1395 = vset.pattern.permute.xlu0 2
        %1396 = vperm.xlu0 %1395, %v965
        %v1397 = vpop.permute.xlu0 %1396
        %1399 = vset.pattern.permute.xlu0 2
        %1400 = vperm.xlu0 %1399, %v966
        %v1401 = vpop.permute.xlu0 %1400
        %1403 = vset.pattern.permute.xlu0 2
        %1404 = vperm.xlu0 %1403, %v967
        %v1405 = vpop.permute.xlu0 %1404
        %1407 = vset.pattern.permute.xlu0 2
        %1408 = vperm.xlu0 %1407, %v968
        %v1409 = vpop.permute.xlu0 %1408
        %1411 = vset.pattern.permute.xlu0 2
        %1412 = vperm.xlu0 %1411, %v969
        %v1413 = vpop.permute.xlu0 %1412
        %1415 = vset.pattern.permute.xlu0 2
        %1416 = vperm.xlu0 %1415, %v970
        %v1417 = vpop.permute.xlu0 %1416
        %1419 = vset.pattern.permute.xlu0 2
        %1420 = vperm.xlu0 %1419, %v971
        %v1421 = vpop.permute.xlu0 %1420
        %1423 = vset.pattern.permute.xlu0 2
        %1424 = vperm.xlu0 %1423, %v972
        %v1425 = vpop.permute.xlu0 %1424
        %1427 = vset.pattern.permute.xlu0 2
        %1428 = vperm.xlu0 %1427, %v973
        %v1429 = vpop.permute.xlu0 %1428
        %1431 = vset.pattern.permute.xlu0 2
        %1432 = vperm.xlu0 %1431, %v974
        %v1433 = vpop.permute.xlu0 %1432
        %1435 = vset.pattern.permute.xlu0 2
        %1436 = vperm.xlu0 %1435, %v975
        %v1437 = vpop.permute.xlu0 %1436
        %1439 = vset.pattern.permute.xlu0 2
        %1440 = vperm.xlu0 %1439, %v976
        %v1441 = vpop.permute.xlu0 %1440
        %1443 = vset.pattern.permute.xlu0 2
        %1444 = vperm.xlu0 %1443, %v977
        %v1445 = vpop.permute.xlu0 %1444
        %1447 = vset.pattern.permute.xlu0 2
        %1448 = vperm.xlu0 %1447, %v978
        %v1449 = vpop.permute.xlu0 %1448
        %1451 = vset.pattern.permute.xlu0 2
        %1452 = vperm.xlu0 %1451, %v979
        %v1453 = vpop.permute.xlu0 %1452
        %1455 = vset.pattern.permute.xlu0 2
        %1456 = vperm.xlu0 %1455, %v980
        %v1457 = vpop.permute.xlu0 %1456
        %1459 = vset.pattern.permute.xlu0 2
        %1460 = vperm.xlu0 %1459, %v981
        %v1461 = vpop.permute.xlu0 %1460
        %1463 = vset.pattern.permute.xlu0 2
        %1464 = vperm.xlu0 %1463, %v982
        %v1465 = vpop.permute.xlu0 %1464
        %1467 = vset.pattern.permute.xlu0 2
        %1468 = vperm.xlu0 %1467, %v983
        %v1469 = vpop.permute.xlu0 %1468
        %1471 = vset.pattern.permute.xlu0 2
        %1472 = vperm.xlu0 %1471, %v984
        %v1473 = vpop.permute.xlu0 %1472
        %1475 = vset.pattern.permute.xlu0 2
        %1476 = vperm.xlu0 %1475, %v985
        %v1477 = vpop.permute.xlu0 %1476
        %1479 = vset.pattern.permute.xlu0 2
        %1480 = vperm.xlu0 %1479, %v986
        %v1481 = vpop.permute.xlu0 %1480
        %1483 = vset.pattern.permute.xlu0 2
        %1484 = vperm.xlu0 %1483, %v987
        %v1485 = vpop.permute.xlu0 %1484
        %1487 = vset.pattern.permute.xlu0 2
        %1488 = vperm.xlu0 %1487, %v988
        %v1489 = vpop.permute.xlu0 %1488
        %1491 = vset.pattern.permute.xlu0 2
        %1492 = vperm.xlu0 %1491, %v989
        %v1493 = vpop.permute.xlu0 %1492
        %1495 = vset.pattern.permute.xlu0 2
        %1496 = vperm.xlu0 %1495, %v990
        %v1497 = vpop.permute.xlu0 %1496
        %1499 = vset.pattern.permute.xlu0 2
        %1500 = vperm.xlu0 %1499, %v991
        %v1501 = vpop.permute.xlu0 %1500
        %1503 = vset.pattern.permute.xlu0 2
        %1504 = vperm.xlu0 %1503, %v992
        %v1505 = vpop.permute.xlu0 %1504
        %1507 = vset.pattern.permute.xlu0 2
        %1508 = vperm.xlu0 %1507, %v993
        %v1509 = vpop.permute.xlu0 %1508
        %v1511 = vperm.slane %v996, 2
        %v1512 = vmul.f32 %v1385, %v1511
        %v1513 = vmul.f32 %v1389, %v1511
        %v1514 = vmul.f32 %v1393, %v1511
        %v1515 = vmul.f32 %v1397, %v1511
        %v1516 = vmul.f32 %v1401, %v1511
        %v1517 = vmul.f32 %v1405, %v1511
        %v1518 = vmul.f32 %v1409, %v1511
        %v1519 = vmul.f32 %v1413, %v1511
        %v1520 = vmul.f32 %v1417, %v1511
        %v1521 = vmul.f32 %v1421, %v1511
        %v1522 = vmul.f32 %v1425, %v1511
        %v1523 = vmul.f32 %v1429, %v1511
        %v1524 = vmul.f32 %v1433, %v1511
        %v1525 = vmul.f32 %v1437, %v1511
        %v1526 = vmul.f32 %v1441, %v1511
        %v1527 = vmul.f32 %v1445, %v1511
        %v1528 = vmul.f32 %v1449, %v1511
        %v1529 = vmul.f32 %v1453, %v1511
        %v1530 = vmul.f32 %v1457, %v1511
        %v1531 = vmul.f32 %v1461, %v1511
        %v1532 = vmul.f32 %v1465, %v1511
        %v1533 = vmul.f32 %v1469, %v1511
        %v1534 = vmul.f32 %v1473, %v1511
        %v1535 = vmul.f32 %v1477, %v1511
        %v1536 = vmul.f32 %v1481, %v1511
        %v1537 = vmul.f32 %v1485, %v1511
        %v1538 = vmul.f32 %v1489, %v1511
        %v1539 = vmul.f32 %v1493, %v1511
        %v1540 = vmul.f32 %v1497, %v1511
        %v1541 = vmul.f32 %v1501, %v1511
        %v1542 = vmul.f32 %v1505, %v1511
        %v1543 = vmul.f32 %v1509, %v1511
        %v1544 = vadd.f32 %v1351, %v1512
        %v1545 = vadd.f32 %v1352, %v1513
        %v1546 = vadd.f32 %v1353, %v1514
        %v1547 = vadd.f32 %v1354, %v1515
        %v1548 = vadd.f32 %v1355, %v1516
        %v1549 = vadd.f32 %v1356, %v1517
        %v1550 = vadd.f32 %v1357, %v1518
        %v1551 = vadd.f32 %v1358, %v1519
        %v1552 = vadd.f32 %v1359, %v1520
        %v1553 = vadd.f32 %v1360, %v1521
        %v1554 = vadd.f32 %v1361, %v1522
        %v1555 = vadd.f32 %v1362, %v1523
        %v1556 = vadd.f32 %v1363, %v1524
        %v1557 = vadd.f32 %v1364, %v1525
        %v1558 = vadd.f32 %v1365, %v1526
        %v1559 = vadd.f32 %v1366, %v1527
        %v1560 = vadd.f32 %v1367, %v1528
        %v1561 = vadd.f32 %v1368, %v1529
        %v1562 = vadd.f32 %v1369, %v1530
        %v1563 = vadd.f32 %v1370, %v1531
        %v1564 = vadd.f32 %v1371, %v1532
        %v1565 = vadd.f32 %v1372, %v1533
        %v1566 = vadd.f32 %v1373, %v1534
        %v1567 = vadd.f32 %v1374, %v1535
        %v1568 = vadd.f32 %v1375, %v1536
        %v1569 = vadd.f32 %v1376, %v1537
        %v1570 = vadd.f32 %v1377, %v1538
        %v1571 = vadd.f32 %v1378, %v1539
        %v1572 = vadd.f32 %v1379, %v1540
        %v1573 = vadd.f32 %v1380, %v1541
        %v1574 = vadd.f32 %v1381, %v1542
        %v1575 = vadd.f32 %v1382, %v1543
        %v1577 = vperm.slane %v994, 0
        %v1579 = vmul.f32 %v1544, %v1577
        %v1580 = vmul.f32 %v1545, %v1577
        %v1581 = vmul.f32 %v1546, %v1577
        %v1582 = vmul.f32 %v1547, %v1577
        %v1583 = vmul.f32 %v1548, %v1577
        %v1584 = vmul.f32 %v1549, %v1577
        %v1585 = vmul.f32 %v1550, %v1577
        %v1586 = vmul.f32 %v1551, %v1577
        %v1587 = vmul.f32 %v1552, %v1577
        %v1588 = vmul.f32 %v1553, %v1577
        %v1589 = vmul.f32 %v1554, %v1577
        %v1590 = vmul.f32 %v1555, %v1577
        %v1591 = vmul.f32 %v1556, %v1577
        %v1592 = vmul.f32 %v1557, %v1577
        %v1593 = vmul.f32 %v1558, %v1577
        %v1594 = vmul.f32 %v1559, %v1577
        %v1595 = vmul.f32 %v1560, %v1577
        %v1596 = vmul.f32 %v1561, %v1577
        %v1597 = vmul.f32 %v1562, %v1577
        %v1598 = vmul.f32 %v1563, %v1577
        %v1599 = vmul.f32 %v1564, %v1577
        %v1600 = vmul.f32 %v1565, %v1577
        %v1601 = vmul.f32 %v1566, %v1577
        %v1602 = vmul.f32 %v1567, %v1577
        %v1603 = vmul.f32 %v1568, %v1577
        %v1604 = vmul.f32 %v1569, %v1577
        %v1605 = vmul.f32 %v1570, %v1577
        %v1606 = vmul.f32 %v1571, %v1577
        %v1607 = vmul.f32 %v1572, %v1577
        %v1608 = vmul.f32 %v1573, %v1577
        %v1609 = vmul.f32 %v1574, %v1577
        %v1610 = vmul.f32 %v1575, %v1577
        %v1612 = vperm.slane %v995, 0
        %v1614 = vadd.f32 %v1579, %v1612
        %v1615 = vadd.f32 %v1580, %v1612
        %v1616 = vadd.f32 %v1581, %v1612
        %v1617 = vadd.f32 %v1582, %v1612
        %v1618 = vadd.f32 %v1583, %v1612
        %v1619 = vadd.f32 %v1584, %v1612
        %v1620 = vadd.f32 %v1585, %v1612
        %v1621 = vadd.f32 %v1586, %v1612
        %v1622 = vadd.f32 %v1587, %v1612
        %v1623 = vadd.f32 %v1588, %v1612
        %v1624 = vadd.f32 %v1589, %v1612
        %v1625 = vadd.f32 %v1590, %v1612
        %v1626 = vadd.f32 %v1591, %v1612
        %v1627 = vadd.f32 %v1592, %v1612
        %v1628 = vadd.f32 %v1593, %v1612
        %v1629 = vadd.f32 %v1594, %v1612
        %v1630 = vadd.f32 %v1595, %v1612
        %v1631 = vadd.f32 %v1596, %v1612
        %v1632 = vadd.f32 %v1597, %v1612
        %v1633 = vadd.f32 %v1598, %v1612
        %v1634 = vadd.f32 %v1599, %v1612
        %v1635 = vadd.f32 %v1600, %v1612
        %v1636 = vadd.f32 %v1601, %v1612
        %v1637 = vadd.f32 %v1602, %v1612
        %v1638 = vadd.f32 %v1603, %v1612
        %v1639 = vadd.f32 %v1604, %v1612
        %v1640 = vadd.f32 %v1605, %v1612
        %v1641 = vadd.f32 %v1606, %v1612
        %v1642 = vadd.f32 %v1607, %v1612
        %v1643 = vadd.f32 %v1608, %v1612
        %v1644 = vadd.f32 %v1609, %v1612
        %v1645 = vadd.f32 %v1610, %v1612
        %vm1646 = vcmp.ge.f32.partialorder %v1614, 0.0
        %vm1647 = vcmp.ge.f32.partialorder %v1615, 0.0
        %vm1648 = vcmp.ge.f32.partialorder %v1616, 0.0
        %vm1649 = vcmp.ge.f32.partialorder %v1617, 0.0
        %vm1650 = vcmp.ge.f32.partialorder %v1618, 0.0
        %vm1651 = vcmp.ge.f32.partialorder %v1619, 0.0
        %vm1652 = vcmp.ge.f32.partialorder %v1620, 0.0
        %vm1653 = vcmp.ge.f32.partialorder %v1621, 0.0
        %vm1654 = vcmp.ge.f32.partialorder %v1622, 0.0
        %vm1655 = vcmp.ge.f32.partialorder %v1623, 0.0
        %vm1656 = vcmp.ge.f32.partialorder %v1624, 0.0
        %vm1657 = vcmp.ge.f32.partialorder %v1625, 0.0
        %vm1658 = vcmp.ge.f32.partialorder %v1626, 0.0
        %vm1659 = vcmp.ge.f32.partialorder %v1627, 0.0
        %vm1660 = vcmp.ge.f32.partialorder %v1628, 0.0
        %vm1661 = vcmp.ge.f32.partialorder %v1629, 0.0
        %vm1662 = vcmp.ge.f32.partialorder %v1630, 0.0
        %vm1663 = vcmp.ge.f32.partialorder %v1631, 0.0
        %vm1664 = vcmp.ge.f32.partialorder %v1632, 0.0
        %vm1665 = vcmp.ge.f32.partialorder %v1633, 0.0
        %vm1666 = vcmp.ge.f32.partialorder %v1634, 0.0
        %vm1667 = vcmp.ge.f32.partialorder %v1635, 0.0
        %vm1668 = vcmp.ge.f32.partialorder %v1636, 0.0
        %vm1669 = vcmp.ge.f32.partialorder %v1637, 0.0
        %vm1670 = vcmp.ge.f32.partialorder %v1638, 0.0
        %vm1671 = vcmp.ge.f32.partialorder %v1639, 0.0
        %vm1672 = vcmp.ge.f32.partialorder %v1640, 0.0
        %vm1673 = vcmp.ge.f32.partialorder %v1641, 0.0
        %vm1674 = vcmp.ge.f32.partialorder %v1642, 0.0
        %vm1675 = vcmp.ge.f32.partialorder %v1643, 0.0
        %vm1676 = vcmp.ge.f32.partialorder %v1644, 0.0
        %vm1677 = vcmp.ge.f32.partialorder %v1645, 0.0
        %v1678 = vmul.f32 %v1614, 0.2
        %v1679 = vmul.f32 %v1615, 0.2
        %v1680 = vmul.f32 %v1616, 0.2
        %v1681 = vmul.f32 %v1617, 0.2
        %v1682 = vmul.f32 %v1618, 0.2
        %v1683 = vmul.f32 %v1619, 0.2
        %v1684 = vmul.f32 %v1620, 0.2
        %v1685 = vmul.f32 %v1621, 0.2
        %v1686 = vmul.f32 %v1622, 0.2
        %v1687 = vmul.f32 %v1623, 0.2
        %v1688 = vmul.f32 %v1624, 0.2
        %v1689 = vmul.f32 %v1625, 0.2
        %v1690 = vmul.f32 %v1626, 0.2
        %v1691 = vmul.f32 %v1627, 0.2
        %v1692 = vmul.f32 %v1628, 0.2
        %v1693 = vmul.f32 %v1629, 0.2
        %v1694 = vmul.f32 %v1630, 0.2
        %v1695 = vmul.f32 %v1631, 0.2
        %v1696 = vmul.f32 %v1632, 0.2
        %v1697 = vmul.f32 %v1633, 0.2
        %v1698 = vmul.f32 %v1634, 0.2
        %v1699 = vmul.f32 %v1635, 0.2
        %v1700 = vmul.f32 %v1636, 0.2
        %v1701 = vmul.f32 %v1637, 0.2
        %v1702 = vmul.f32 %v1638, 0.2
        %v1703 = vmul.f32 %v1639, 0.2
        %v1704 = vmul.f32 %v1640, 0.2
        %v1705 = vmul.f32 %v1641, 0.2
        %v1706 = vmul.f32 %v1642, 0.2
        %v1707 = vmul.f32 %v1643, 0.2
        %v1708 = vmul.f32 %v1644, 0.2
        %v1709 = vmul.f32 %v1645, 0.2
        %v1710 = vsel %vm1646, %v1614, %v1678
        %v1711 = vsel %vm1647, %v1615, %v1679
        %v1712 = vsel %vm1648, %v1616, %v1680
        %v1713 = vsel %vm1649, %v1617, %v1681
        %v1714 = vsel %vm1650, %v1618, %v1682
        %v1715 = vsel %vm1651, %v1619, %v1683
        %v1716 = vsel %vm1652, %v1620, %v1684
        %v1717 = vsel %vm1653, %v1621, %v1685
        %v1718 = vsel %vm1654, %v1622, %v1686
        %v1719 = vsel %vm1655, %v1623, %v1687
        %v1720 = vsel %vm1656, %v1624, %v1688
        %v1721 = vsel %vm1657, %v1625, %v1689
        %v1722 = vsel %vm1658, %v1626, %v1690
        %v1723 = vsel %vm1659, %v1627, %v1691
        %v1724 = vsel %vm1660, %v1628, %v1692
        %v1725 = vsel %vm1661, %v1629, %v1693
        %v1726 = vsel %vm1662, %v1630, %v1694
        %v1727 = vsel %vm1663, %v1631, %v1695
        %v1728 = vsel %vm1664, %v1632, %v1696
        %v1729 = vsel %vm1665, %v1633, %v1697
        %v1730 = vsel %vm1666, %v1634, %v1698
        %v1731 = vsel %vm1667, %v1635, %v1699
        %v1732 = vsel %vm1668, %v1636, %v1700
        %v1733 = vsel %vm1669, %v1637, %v1701
        %v1734 = vsel %vm1670, %v1638, %v1702
        %v1735 = vsel %vm1671, %v1639, %v1703
        %v1736 = vsel %vm1672, %v1640, %v1704
        %v1737 = vsel %vm1673, %v1641, %v1705
        %v1738 = vsel %vm1674, %v1642, %v1706
        %v1739 = vsel %vm1675, %v1643, %v1707
        %v1740 = vsel %vm1676, %v1644, %v1708
        %v1741 = vsel %vm1677, %v1645, %v1709
        %v1742 = vld [vmem:[#allocation11] sm:$0x1]
        %v1743 = vld [vmem:[#allocation12] sm:$0x1]
        %v1744 = vpack.c.bf16 %v1711, %v1710
        %v1745 = vpack.c.bf16 %v1713, %v1712
        %v1746 = vpack.c.bf16 %v1715, %v1714
        %v1747 = vpack.c.bf16 %v1717, %v1716
        %v1748 = vpack.c.bf16 %v1719, %v1718
        %v1749 = vpack.c.bf16 %v1721, %v1720
        %v1750 = vpack.c.bf16 %v1723, %v1722
        %v1751 = vpack.c.bf16 %v1725, %v1724
        %v1752 = vpack.c.bf16 %v1727, %v1726
        %v1753 = vpack.c.bf16 %v1729, %v1728
        %v1754 = vpack.c.bf16 %v1731, %v1730
        %v1755 = vpack.c.bf16 %v1733, %v1732
        %v1756 = vpack.c.bf16 %v1735, %v1734
        %v1757 = vpack.c.bf16 %v1737, %v1736
        %v1758 = vpack.c.bf16 %v1739, %v1738
        %v1759 = vpack.c.bf16 %v1741, %v1740
        %v1760 = vld [vmem:[#allocation9] sm:$0xf]
        %v1761 = vld [vmem:[#allocation9 + $0x4] sm:$0xf]
        %v1762 = vld [vmem:[#allocation9 + $0x8] sm:$0xf]
        %v1763 = vld [vmem:[#allocation9 + $0xc] sm:$0xf]
        %v1768 = vunpack.c.l.b16 %v1760
        %v1769 = vunpack.c.l.b16 %v1761
        %v1770 = vunpack.c.l.b16 %v1762
        %v1771 = vunpack.c.l.b16 %v1763
        %v1772 = vpack.c.b16 %v1769, %v1768
        %v1773 = vpack.c.b16 %v1771, %v1770
        %vm1776 = vcmask 261120
        %v1778 = vsel %vm1776, %v1744, 0
        %v1781 = vsel %vm1776, %v1745, 0
        %v1784 = vsel %vm1776, %v1746, 0
        %v1787 = vsel %vm1776, %v1747, 0
        %v1790 = vsel %vm1776, %v1748, 0
        %v1793 = vsel %vm1776, %v1749, 0
        %v1796 = vsel %vm1776, %v1750, 0
        %v1799 = vsel %vm1776, %v1751, 0
        %v1802 = vsel %vm1776, %v1752, 0
        %v1805 = vsel %vm1776, %v1753, 0
        %v1808 = vsel %vm1776, %v1754, 0
        %v1811 = vsel %vm1776, %v1755, 0
        %v1814 = vsel %vm1776, %v1756, 0
        %v1817 = vsel %vm1776, %v1757, 0
        %v1820 = vsel %vm1776, %v1758, 0
        %v1823 = vsel %vm1776, %v1759, 0
        %1825 = vmatpush.bf16.msra.mxu0 0
        %1826 = vmatpush.bf16.msra.mxu0 0
        %1827 = vmatpush.bf16.msra.mxu0 0
        %1828 = vmatpush.bf16.msra.mxu0 0
        %1829 = vmatpush.bf16.msra.mxu0 0
        %1830 = vmatpush.bf16.msra.mxu0 0
        %1831 = vmatpush.bf16.msra.mxu0 %v1773
        %1832 = vmatpush.bf16.msra.mxu0 %v1772
        %1833 = vmatmul.bf16.gmra.mxu0 %v1778
        %v1834 = vpop.f32.mrf.mxu0
        %v1835 = vadd.f32 0.0, %v1834
        %v1836 = vpop.f32.mrf.mxu0
        %v1837 = vadd.f32 0.0, %v1836
        %1838 = vmatmul.bf16.gmra.mxu0 %v1781
        %v1839 = vpop.f32.mrf.mxu0
        %v1840 = vadd.f32 0.0, %v1839
        %v1841 = vpop.f32.mrf.mxu0
        %v1842 = vadd.f32 0.0, %v1841
        %1843 = vmatmul.bf16.gmra.mxu0 %v1784
        %v1844 = vpop.f32.mrf.mxu0
        %v1845 = vadd.f32 0.0, %v1844
        %v1846 = vpop.f32.mrf.mxu0
        %v1847 = vadd.f32 0.0, %v1846
        %1848 = vmatmul.bf16.gmra.mxu0 %v1787
        %v1849 = vpop.f32.mrf.mxu0
        %v1850 = vadd.f32 0.0, %v1849
        %v1851 = vpop.f32.mrf.mxu0
        %v1852 = vadd.f32 0.0, %v1851
        %1853 = vmatmul.bf16.gmra.mxu0 %v1790
        %v1854 = vpop.f32.mrf.mxu0
        %v1855 = vadd.f32 0.0, %v1854
        %v1856 = vpop.f32.mrf.mxu0
        %v1857 = vadd.f32 0.0, %v1856
        %1858 = vmatmul.bf16.gmra.mxu0 %v1793
        %v1859 = vpop.f32.mrf.mxu0
        %v1860 = vadd.f32 0.0, %v1859
        %v1861 = vpop.f32.mrf.mxu0
        %v1862 = vadd.f32 0.0, %v1861
        %1863 = vmatmul.bf16.gmra.mxu0 %v1796
        %v1864 = vpop.f32.mrf.mxu0
        %v1865 = vadd.f32 0.0, %v1864
        %v1866 = vpop.f32.mrf.mxu0
        %v1867 = vadd.f32 0.0, %v1866
        %1868 = vmatmul.bf16.gmra.mxu0 %v1799
        %v1869 = vpop.f32.mrf.mxu0
        %v1870 = vadd.f32 0.0, %v1869
        %v1871 = vpop.f32.mrf.mxu0
        %v1872 = vadd.f32 0.0, %v1871
        %1873 = vmatmul.bf16.gmra.mxu0 %v1802
        %v1874 = vpop.f32.mrf.mxu0
        %v1875 = vadd.f32 0.0, %v1874
        %v1876 = vpop.f32.mrf.mxu0
        %v1877 = vadd.f32 0.0, %v1876
        %1878 = vmatmul.bf16.gmra.mxu0 %v1805
        %v1879 = vpop.f32.mrf.mxu0
        %v1880 = vadd.f32 0.0, %v1879
        %v1881 = vpop.f32.mrf.mxu0
        %v1882 = vadd.f32 0.0, %v1881
        %1883 = vmatmul.bf16.gmra.mxu0 %v1808
        %v1884 = vpop.f32.mrf.mxu0
        %v1885 = vadd.f32 0.0, %v1884
        %v1886 = vpop.f32.mrf.mxu0
        %v1887 = vadd.f32 0.0, %v1886
        %1888 = vmatmul.bf16.gmra.mxu0 %v1811
        %v1889 = vpop.f32.mrf.mxu0
        %v1890 = vadd.f32 0.0, %v1889
        %v1891 = vpop.f32.mrf.mxu0
        %v1892 = vadd.f32 0.0, %v1891
        %1893 = vmatmul.bf16.gmra.mxu0 %v1814
        %v1894 = vpop.f32.mrf.mxu0
        %v1895 = vadd.f32 0.0, %v1894
        %v1896 = vpop.f32.mrf.mxu0
        %v1897 = vadd.f32 0.0, %v1896
        %1898 = vmatmul.bf16.gmra.mxu0 %v1817
        %v1899 = vpop.f32.mrf.mxu0
        %v1900 = vadd.f32 0.0, %v1899
        %v1901 = vpop.f32.mrf.mxu0
        %v1902 = vadd.f32 0.0, %v1901
        %1903 = vmatmul.bf16.gmra.mxu0 %v1820
        %v1904 = vpop.f32.mrf.mxu0
        %v1905 = vadd.f32 0.0, %v1904
        %v1906 = vpop.f32.mrf.mxu0
        %v1907 = vadd.f32 0.0, %v1906
        %1908 = vmatmul.bf16.gmra.mxu0 %v1823
        %v1909 = vpop.f32.mrf.mxu0
        %v1910 = vadd.f32 0.0, %v1909
        %v1911 = vpop.f32.mrf.mxu0
        %v1912 = vadd.f32 0.0, %v1911
        %1913 = vdwg.mxu0
        %v1915 = vperm.slane %v1742, 0
        %v1917 = vmul.f32 %v1835, %v1915
        %v1918 = vmul.f32 %v1837, %v1915
        %v1919 = vmul.f32 %v1840, %v1915
        %v1920 = vmul.f32 %v1842, %v1915
        %v1921 = vmul.f32 %v1845, %v1915
        %v1922 = vmul.f32 %v1847, %v1915
        %v1923 = vmul.f32 %v1850, %v1915
        %v1924 = vmul.f32 %v1852, %v1915
        %v1925 = vmul.f32 %v1855, %v1915
        %v1926 = vmul.f32 %v1857, %v1915
        %v1927 = vmul.f32 %v1860, %v1915
        %v1928 = vmul.f32 %v1862, %v1915
        %v1929 = vmul.f32 %v1865, %v1915
        %v1930 = vmul.f32 %v1867, %v1915
        %v1931 = vmul.f32 %v1870, %v1915
        %v1932 = vmul.f32 %v1872, %v1915
        %v1933 = vmul.f32 %v1875, %v1915
        %v1934 = vmul.f32 %v1877, %v1915
        %v1935 = vmul.f32 %v1880, %v1915
        %v1936 = vmul.f32 %v1882, %v1915
        %v1937 = vmul.f32 %v1885, %v1915
        %v1938 = vmul.f32 %v1887, %v1915
        %v1939 = vmul.f32 %v1890, %v1915
        %v1940 = vmul.f32 %v1892, %v1915
        %v1941 = vmul.f32 %v1895, %v1915
        %v1942 = vmul.f32 %v1897, %v1915
        %v1943 = vmul.f32 %v1900, %v1915
        %v1944 = vmul.f32 %v1902, %v1915
        %v1945 = vmul.f32 %v1905, %v1915
        %v1946 = vmul.f32 %v1907, %v1915
        %v1947 = vmul.f32 %v1910, %v1915
        %v1948 = vmul.f32 %v1912, %v1915
        %v1950 = vperm.slane %v1743, 0
        %v1952 = vadd.f32 %v1917, %v1950
        %v1953 = vadd.f32 %v1918, %v1950
        %v1954 = vadd.f32 %v1919, %v1950
        %v1955 = vadd.f32 %v1920, %v1950
        %v1956 = vadd.f32 %v1921, %v1950
        %v1957 = vadd.f32 %v1922, %v1950
        %v1958 = vadd.f32 %v1923, %v1950
        %v1959 = vadd.f32 %v1924, %v1950
        %v1960 = vadd.f32 %v1925, %v1950
        %v1961 = vadd.f32 %v1926, %v1950
        %v1962 = vadd.f32 %v1927, %v1950
        %v1963 = vadd.f32 %v1928, %v1950
        %v1964 = vadd.f32 %v1929, %v1950
        %v1965 = vadd.f32 %v1930, %v1950
        %v1966 = vadd.f32 %v1931, %v1950
        %v1967 = vadd.f32 %v1932, %v1950
        %v1968 = vadd.f32 %v1933, %v1950
        %v1969 = vadd.f32 %v1934, %v1950
        %v1970 = vadd.f32 %v1935, %v1950
        %v1971 = vadd.f32 %v1936, %v1950
        %v1972 = vadd.f32 %v1937, %v1950
        %v1973 = vadd.f32 %v1938, %v1950
        %v1974 = vadd.f32 %v1939, %v1950
        %v1975 = vadd.f32 %v1940, %v1950
        %v1976 = vadd.f32 %v1941, %v1950
        %v1977 = vadd.f32 %v1942, %v1950
        %v1978 = vadd.f32 %v1943, %v1950
        %v1979 = vadd.f32 %v1944, %v1950
        %v1980 = vadd.f32 %v1945, %v1950
        %v1981 = vadd.f32 %v1946, %v1950
        %v1982 = vadd.f32 %v1947, %v1950
        %v1983 = vadd.f32 %v1948, %v1950
        %vm1984 = vcmp.ge.f32.partialorder %v1952, 0.0
        %vm1985 = vcmp.ge.f32.partialorder %v1953, 0.0
        %vm1986 = vcmp.ge.f32.partialorder %v1954, 0.0
        %vm1987 = vcmp.ge.f32.partialorder %v1955, 0.0
        %vm1988 = vcmp.ge.f32.partialorder %v1956, 0.0
        %vm1989 = vcmp.ge.f32.partialorder %v1957, 0.0
        %vm1990 = vcmp.ge.f32.partialorder %v1958, 0.0
        %vm1991 = vcmp.ge.f32.partialorder %v1959, 0.0
        %vm1992 = vcmp.ge.f32.partialorder %v1960, 0.0
        %vm1993 = vcmp.ge.f32.partialorder %v1961, 0.0
        %vm1994 = vcmp.ge.f32.partialorder %v1962, 0.0
        %vm1995 = vcmp.ge.f32.partialorder %v1963, 0.0
        %vm1996 = vcmp.ge.f32.partialorder %v1964, 0.0
        %vm1997 = vcmp.ge.f32.partialorder %v1965, 0.0
        %vm1998 = vcmp.ge.f32.partialorder %v1966, 0.0
        %vm1999 = vcmp.ge.f32.partialorder %v1967, 0.0
        %vm2000 = vcmp.ge.f32.partialorder %v1968, 0.0
        %vm2001 = vcmp.ge.f32.partialorder %v1969, 0.0
        %vm2002 = vcmp.ge.f32.partialorder %v1970, 0.0
        %vm2003 = vcmp.ge.f32.partialorder %v1971, 0.0
        %vm2004 = vcmp.ge.f32.partialorder %v1972, 0.0
        %vm2005 = vcmp.ge.f32.partialorder %v1973, 0.0
        %vm2006 = vcmp.ge.f32.partialorder %v1974, 0.0
        %vm2007 = vcmp.ge.f32.partialorder %v1975, 0.0
        %vm2008 = vcmp.ge.f32.partialorder %v1976, 0.0
        %vm2009 = vcmp.ge.f32.partialorder %v1977, 0.0
        %vm2010 = vcmp.ge.f32.partialorder %v1978, 0.0
        %vm2011 = vcmp.ge.f32.partialorder %v1979, 0.0
        %vm2012 = vcmp.ge.f32.partialorder %v1980, 0.0
        %vm2013 = vcmp.ge.f32.partialorder %v1981, 0.0
        %vm2014 = vcmp.ge.f32.partialorder %v1982, 0.0
        %vm2015 = vcmp.ge.f32.partialorder %v1983, 0.0
        %v2016 = vmul.f32 %v1952, 0.2
        %v2017 = vmul.f32 %v1953, 0.2
        %v2018 = vmul.f32 %v1954, 0.2
        %v2019 = vmul.f32 %v1955, 0.2
        %v2020 = vmul.f32 %v1956, 0.2
        %v2021 = vmul.f32 %v1957, 0.2
        %v2022 = vmul.f32 %v1958, 0.2
        %v2023 = vmul.f32 %v1959, 0.2
        %v2024 = vmul.f32 %v1960, 0.2
        %v2025 = vmul.f32 %v1961, 0.2
        %v2026 = vmul.f32 %v1962, 0.2
        %v2027 = vmul.f32 %v1963, 0.2
        %v2028 = vmul.f32 %v1964, 0.2
        %v2029 = vmul.f32 %v1965, 0.2
        %v2030 = vmul.f32 %v1966, 0.2
        %v2031 = vmul.f32 %v1967, 0.2
        %v2032 = vmul.f32 %v1968, 0.2
        %v2033 = vmul.f32 %v1969, 0.2
        %v2034 = vmul.f32 %v1970, 0.2
        %v2035 = vmul.f32 %v1971, 0.2
        %v2036 = vmul.f32 %v1972, 0.2
        %v2037 = vmul.f32 %v1973, 0.2
        %v2038 = vmul.f32 %v1974, 0.2
        %v2039 = vmul.f32 %v1975, 0.2
        %v2040 = vmul.f32 %v1976, 0.2
        %v2041 = vmul.f32 %v1977, 0.2
        %v2042 = vmul.f32 %v1978, 0.2
        %v2043 = vmul.f32 %v1979, 0.2
        %v2044 = vmul.f32 %v1980, 0.2
        %v2045 = vmul.f32 %v1981, 0.2
        %v2046 = vmul.f32 %v1982, 0.2
        %v2047 = vmul.f32 %v1983, 0.2
        %v2048 = vsel %vm1984, %v1952, %v2016
        %v2049 = vsel %vm1985, %v1953, %v2017
        %v2050 = vsel %vm1986, %v1954, %v2018
        %v2051 = vsel %vm1987, %v1955, %v2019
        %v2052 = vsel %vm1988, %v1956, %v2020
        %v2053 = vsel %vm1989, %v1957, %v2021
        %v2054 = vsel %vm1990, %v1958, %v2022
        %v2055 = vsel %vm1991, %v1959, %v2023
        %v2056 = vsel %vm1992, %v1960, %v2024
        %v2057 = vsel %vm1993, %v1961, %v2025
        %v2058 = vsel %vm1994, %v1962, %v2026
        %v2059 = vsel %vm1995, %v1963, %v2027
        %v2060 = vsel %vm1996, %v1964, %v2028
        %v2061 = vsel %vm1997, %v1965, %v2029
        %v2062 = vsel %vm1998, %v1966, %v2030
        %v2063 = vsel %vm1999, %v1967, %v2031
        %v2064 = vsel %vm2000, %v1968, %v2032
        %v2065 = vsel %vm2001, %v1969, %v2033
        %v2066 = vsel %vm2002, %v1970, %v2034
        %v2067 = vsel %vm2003, %v1971, %v2035
        %v2068 = vsel %vm2004, %v1972, %v2036
        %v2069 = vsel %vm2005, %v1973, %v2037
        %v2070 = vsel %vm2006, %v1974, %v2038
        %v2071 = vsel %vm2007, %v1975, %v2039
        %v2072 = vsel %vm2008, %v1976, %v2040
        %v2073 = vsel %vm2009, %v1977, %v2041
        %v2074 = vsel %vm2010, %v1978, %v2042
        %v2075 = vsel %vm2011, %v1979, %v2043
        %v2076 = vsel %vm2012, %v1980, %v2044
        %v2077 = vsel %vm2013, %v1981, %v2045
        %v2078 = vsel %vm2014, %v1982, %v2046
        %v2079 = vsel %vm2015, %v1983, %v2047
        %v2080 = vld [vmem:[#allocation15] sm:$0x1]
        %v2081 = vld [vmem:[#allocation17] sm:$0x1]
        %v2082 = vpack.c.bf16 %v2049, %v2048
        %v2083 = vpack.c.bf16 %v2051, %v2050
        %v2084 = vpack.c.bf16 %v2053, %v2052
        %v2085 = vpack.c.bf16 %v2055, %v2054
        %v2086 = vpack.c.bf16 %v2057, %v2056
        %v2087 = vpack.c.bf16 %v2059, %v2058
        %v2088 = vpack.c.bf16 %v2061, %v2060
        %v2089 = vpack.c.bf16 %v2063, %v2062
        %v2090 = vpack.c.bf16 %v2065, %v2064
        %v2091 = vpack.c.bf16 %v2067, %v2066
        %v2092 = vpack.c.bf16 %v2069, %v2068
        %v2093 = vpack.c.bf16 %v2071, %v2070
        %v2094 = vpack.c.bf16 %v2073, %v2072
        %v2095 = vpack.c.bf16 %v2075, %v2074
        %v2096 = vpack.c.bf16 %v2077, %v2076
        %v2097 = vpack.c.bf16 %v2079, %v2078
        %v2098 = vld [vmem:[#allocation14] sm:$0xf]
        %v2099 = vld [vmem:[#allocation14 + $0x4] sm:$0xf]
        %v2100 = vld [vmem:[#allocation14 + $0x8] sm:$0xf]
        %v2101 = vld [vmem:[#allocation14 + $0xc] sm:$0xf]
        %v2102 = vld [vmem:[#allocation14 + $0x10] sm:$0xf]
        %v2103 = vld [vmem:[#allocation14 + $0x14] sm:$0xf]
        %v2104 = vld [vmem:[#allocation14 + $0x18] sm:$0xf]
        %v2105 = vld [vmem:[#allocation14 + $0x1c] sm:$0xf]
        %v2114 = vunpack.c.l.b16 %v2098
        %v2115 = vunpack.c.l.b16 %v2099
        %v2116 = vunpack.c.l.b16 %v2100
        %v2117 = vunpack.c.l.b16 %v2101
        %v2118 = vunpack.c.l.b16 %v2102
        %v2119 = vunpack.c.l.b16 %v2103
        %v2120 = vunpack.c.l.b16 %v2104
        %v2121 = vunpack.c.l.b16 %v2105
        %v2122 = vpack.c.b16 %v2115, %v2114
        %v2123 = vpack.c.b16 %v2117, %v2116
        %v2124 = vpack.c.b16 %v2119, %v2118
        %v2125 = vpack.c.b16 %v2121, %v2120
        %vm2130 = vcmask 523264
        %v2132 = vsel %vm2130, %v2082, 0
        %v2135 = vsel %vm2130, %v2083, 0
        %v2138 = vsel %vm2130, %v2084, 0
        %v2141 = vsel %vm2130, %v2085, 0
        %v2144 = vsel %vm2130, %v2086, 0
        %v2147 = vsel %vm2130, %v2087, 0
        %v2150 = vsel %vm2130, %v2088, 0
        %v2153 = vsel %vm2130, %v2089, 0
        %v2156 = vsel %vm2130, %v2090, 0
        %v2159 = vsel %vm2130, %v2091, 0
        %v2162 = vsel %vm2130, %v2092, 0
        %v2165 = vsel %vm2130, %v2093, 0
        %v2168 = vsel %vm2130, %v2094, 0
        %v2171 = vsel %vm2130, %v2095, 0
        %v2174 = vsel %vm2130, %v2096, 0
        %v2177 = vsel %vm2130, %v2097, 0
        %2179 = vmatpush.bf16.msra.mxu0 0
        %2180 = vmatpush.bf16.msra.mxu0 0
        %2181 = vmatpush.bf16.msra.mxu0 0
        %2182 = vmatpush.bf16.msra.mxu0 0
        %2183 = vmatpush.bf16.msra.mxu0 %v2125
        %2184 = vmatpush.bf16.msra.mxu0 %v2124
        %2185 = vmatpush.bf16.msra.mxu0 %v2123
        %2186 = vmatpush.bf16.msra.mxu0 %v2122
        %2187 = vmatmul.bf16.gmra.mxu0 %v2132
        %v2188 = vpop.f32.mrf.mxu0
        %v2189 = vadd.f32 0.0, %v2188
        %v2190 = vpop.f32.mrf.mxu0
        %v2191 = vadd.f32 0.0, %v2190
        %2192 = vmatmul.bf16.gmra.mxu0 %v2135
        %v2193 = vpop.f32.mrf.mxu0
        %v2194 = vadd.f32 0.0, %v2193
        %v2195 = vpop.f32.mrf.mxu0
        %v2196 = vadd.f32 0.0, %v2195
        %2197 = vmatmul.bf16.gmra.mxu0 %v2138
        %v2198 = vpop.f32.mrf.mxu0
        %v2199 = vadd.f32 0.0, %v2198
        %v2200 = vpop.f32.mrf.mxu0
        %v2201 = vadd.f32 0.0, %v2200
        %2202 = vmatmul.bf16.gmra.mxu0 %v2141
        %v2203 = vpop.f32.mrf.mxu0
        %v2204 = vadd.f32 0.0, %v2203
        %v2205 = vpop.f32.mrf.mxu0
        %v2206 = vadd.f32 0.0, %v2205
        %2207 = vmatmul.bf16.gmra.mxu0 %v2144
        %v2208 = vpop.f32.mrf.mxu0
        %v2209 = vadd.f32 0.0, %v2208
        %v2210 = vpop.f32.mrf.mxu0
        %v2211 = vadd.f32 0.0, %v2210
        %2212 = vmatmul.bf16.gmra.mxu0 %v2147
        %v2213 = vpop.f32.mrf.mxu0
        %v2214 = vadd.f32 0.0, %v2213
        %v2215 = vpop.f32.mrf.mxu0
        %v2216 = vadd.f32 0.0, %v2215
        %2217 = vmatmul.bf16.gmra.mxu0 %v2150
        %v2218 = vpop.f32.mrf.mxu0
        %v2219 = vadd.f32 0.0, %v2218
        %v2220 = vpop.f32.mrf.mxu0
        %v2221 = vadd.f32 0.0, %v2220
        %2222 = vmatmul.bf16.gmra.mxu0 %v2153
        %v2223 = vpop.f32.mrf.mxu0
        %v2224 = vadd.f32 0.0, %v2223
        %v2225 = vpop.f32.mrf.mxu0
        %v2226 = vadd.f32 0.0, %v2225
        %2227 = vmatmul.bf16.gmra.mxu0 %v2156
        %v2228 = vpop.f32.mrf.mxu0
        %v2229 = vadd.f32 0.0, %v2228
        %v2230 = vpop.f32.mrf.mxu0
        %v2231 = vadd.f32 0.0, %v2230
        %2232 = vmatmul.bf16.gmra.mxu0 %v2159
        %v2233 = vpop.f32.mrf.mxu0
        %v2234 = vadd.f32 0.0, %v2233
        %v2235 = vpop.f32.mrf.mxu0
        %v2236 = vadd.f32 0.0, %v2235
        %2237 = vmatmul.bf16.gmra.mxu0 %v2162
        %v2238 = vpop.f32.mrf.mxu0
        %v2239 = vadd.f32 0.0, %v2238
        %v2240 = vpop.f32.mrf.mxu0
        %v2241 = vadd.f32 0.0, %v2240
        %2242 = vmatmul.bf16.gmra.mxu0 %v2165
        %v2243 = vpop.f32.mrf.mxu0
        %v2244 = vadd.f32 0.0, %v2243
        %v2245 = vpop.f32.mrf.mxu0
        %v2246 = vadd.f32 0.0, %v2245
        %2247 = vmatmul.bf16.gmra.mxu0 %v2168
        %v2248 = vpop.f32.mrf.mxu0
        %v2249 = vadd.f32 0.0, %v2248
        %v2250 = vpop.f32.mrf.mxu0
        %v2251 = vadd.f32 0.0, %v2250
        %2252 = vmatmul.bf16.gmra.mxu0 %v2171
        %v2253 = vpop.f32.mrf.mxu0
        %v2254 = vadd.f32 0.0, %v2253
        %v2255 = vpop.f32.mrf.mxu0
        %v2256 = vadd.f32 0.0, %v2255
        %2257 = vmatmul.bf16.gmra.mxu0 %v2174
        %v2258 = vpop.f32.mrf.mxu0
        %v2259 = vadd.f32 0.0, %v2258
        %v2260 = vpop.f32.mrf.mxu0
        %v2261 = vadd.f32 0.0, %v2260
        %2262 = vmatmul.bf16.gmra.mxu0 %v2177
        %v2263 = vpop.f32.mrf.mxu0
        %v2264 = vadd.f32 0.0, %v2263
        %v2265 = vpop.f32.mrf.mxu0
        %v2266 = vadd.f32 0.0, %v2265
        %2267 = vdwg.mxu0
        %v2269 = vperm.slane %v2080, 0
        %v2271 = vmul.f32 %v2189, %v2269
        %v2272 = vmul.f32 %v2191, %v2269
        %v2273 = vmul.f32 %v2194, %v2269
        %v2274 = vmul.f32 %v2196, %v2269
        %v2275 = vmul.f32 %v2199, %v2269
        %v2276 = vmul.f32 %v2201, %v2269
        %v2277 = vmul.f32 %v2204, %v2269
        %v2278 = vmul.f32 %v2206, %v2269
        %v2279 = vmul.f32 %v2209, %v2269
        %v2280 = vmul.f32 %v2211, %v2269
        %v2281 = vmul.f32 %v2214, %v2269
        %v2282 = vmul.f32 %v2216, %v2269
        %v2283 = vmul.f32 %v2219, %v2269
        %v2284 = vmul.f32 %v2221, %v2269
        %v2285 = vmul.f32 %v2224, %v2269
        %v2286 = vmul.f32 %v2226, %v2269
        %v2287 = vmul.f32 %v2229, %v2269
        %v2288 = vmul.f32 %v2231, %v2269
        %v2289 = vmul.f32 %v2234, %v2269
        %v2290 = vmul.f32 %v2236, %v2269
        %v2291 = vmul.f32 %v2239, %v2269
        %v2292 = vmul.f32 %v2241, %v2269
        %v2293 = vmul.f32 %v2244, %v2269
        %v2294 = vmul.f32 %v2246, %v2269
        %v2295 = vmul.f32 %v2249, %v2269
        %v2296 = vmul.f32 %v2251, %v2269
        %v2297 = vmul.f32 %v2254, %v2269
        %v2298 = vmul.f32 %v2256, %v2269
        %v2299 = vmul.f32 %v2259, %v2269
        %v2300 = vmul.f32 %v2261, %v2269
        %v2301 = vmul.f32 %v2264, %v2269
        %v2302 = vmul.f32 %v2266, %v2269
        %v2304 = vperm.slane %v2081, 0
        %v2306 = vadd.f32 %v2271, %v2304
        %v2307 = vadd.f32 %v2272, %v2304
        %v2308 = vadd.f32 %v2273, %v2304
        %v2309 = vadd.f32 %v2274, %v2304
        %v2310 = vadd.f32 %v2275, %v2304
        %v2311 = vadd.f32 %v2276, %v2304
        %v2312 = vadd.f32 %v2277, %v2304
        %v2313 = vadd.f32 %v2278, %v2304
        %v2314 = vadd.f32 %v2279, %v2304
        %v2315 = vadd.f32 %v2280, %v2304
        %v2316 = vadd.f32 %v2281, %v2304
        %v2317 = vadd.f32 %v2282, %v2304
        %v2318 = vadd.f32 %v2283, %v2304
        %v2319 = vadd.f32 %v2284, %v2304
        %v2320 = vadd.f32 %v2285, %v2304
        %v2321 = vadd.f32 %v2286, %v2304
        %v2322 = vadd.f32 %v2287, %v2304
        %v2323 = vadd.f32 %v2288, %v2304
        %v2324 = vadd.f32 %v2289, %v2304
        %v2325 = vadd.f32 %v2290, %v2304
        %v2326 = vadd.f32 %v2291, %v2304
        %v2327 = vadd.f32 %v2292, %v2304
        %v2328 = vadd.f32 %v2293, %v2304
        %v2329 = vadd.f32 %v2294, %v2304
        %v2330 = vadd.f32 %v2295, %v2304
        %v2331 = vadd.f32 %v2296, %v2304
        %v2332 = vadd.f32 %v2297, %v2304
        %v2333 = vadd.f32 %v2298, %v2304
        %v2334 = vadd.f32 %v2299, %v2304
        %v2335 = vadd.f32 %v2300, %v2304
        %v2336 = vadd.f32 %v2301, %v2304
        %v2337 = vadd.f32 %v2302, %v2304
        %vm2338 = vcmp.ge.f32.partialorder %v2306, 0.0
        %vm2339 = vcmp.ge.f32.partialorder %v2307, 0.0
        %vm2340 = vcmp.ge.f32.partialorder %v2308, 0.0
        %vm2341 = vcmp.ge.f32.partialorder %v2309, 0.0
        %vm2342 = vcmp.ge.f32.partialorder %v2310, 0.0
        %vm2343 = vcmp.ge.f32.partialorder %v2311, 0.0
        %vm2344 = vcmp.ge.f32.partialorder %v2312, 0.0
        %vm2345 = vcmp.ge.f32.partialorder %v2313, 0.0
        %vm2346 = vcmp.ge.f32.partialorder %v2314, 0.0
        %vm2347 = vcmp.ge.f32.partialorder %v2315, 0.0
        %vm2348 = vcmp.ge.f32.partialorder %v2316, 0.0
        %vm2349 = vcmp.ge.f32.partialorder %v2317, 0.0
        %vm2350 = vcmp.ge.f32.partialorder %v2318, 0.0
        %vm2351 = vcmp.ge.f32.partialorder %v2319, 0.0
        %vm2352 = vcmp.ge.f32.partialorder %v2320, 0.0
        %vm2353 = vcmp.ge.f32.partialorder %v2321, 0.0
        %vm2354 = vcmp.ge.f32.partialorder %v2322, 0.0
        %vm2355 = vcmp.ge.f32.partialorder %v2323, 0.0
        %vm2356 = vcmp.ge.f32.partialorder %v2324, 0.0
        %vm2357 = vcmp.ge.f32.partialorder %v2325, 0.0
        %vm2358 = vcmp.ge.f32.partialorder %v2326, 0.0
        %vm2359 = vcmp.ge.f32.partialorder %v2327, 0.0
        %vm2360 = vcmp.ge.f32.partialorder %v2328, 0.0
        %vm2361 = vcmp.ge.f32.partialorder %v2329, 0.0
        %vm2362 = vcmp.ge.f32.partialorder %v2330, 0.0
        %vm2363 = vcmp.ge.f32.partialorder %v2331, 0.0
        %vm2364 = vcmp.ge.f32.partialorder %v2332, 0.0
        %vm2365 = vcmp.ge.f32.partialorder %v2333, 0.0
        %vm2366 = vcmp.ge.f32.partialorder %v2334, 0.0
        %vm2367 = vcmp.ge.f32.partialorder %v2335, 0.0
        %vm2368 = vcmp.ge.f32.partialorder %v2336, 0.0
        %vm2369 = vcmp.ge.f32.partialorder %v2337, 0.0
        %v2370 = vmul.f32 %v2306, 0.2
        %v2371 = vmul.f32 %v2307, 0.2
        %v2372 = vmul.f32 %v2308, 0.2
        %v2373 = vmul.f32 %v2309, 0.2
        %v2374 = vmul.f32 %v2310, 0.2
        %v2375 = vmul.f32 %v2311, 0.2
        %v2376 = vmul.f32 %v2312, 0.2
        %v2377 = vmul.f32 %v2313, 0.2
        %v2378 = vmul.f32 %v2314, 0.2
        %v2379 = vmul.f32 %v2315, 0.2
        %v2380 = vmul.f32 %v2316, 0.2
        %v2381 = vmul.f32 %v2317, 0.2
        %v2382 = vmul.f32 %v2318, 0.2
        %v2383 = vmul.f32 %v2319, 0.2
        %v2384 = vmul.f32 %v2320, 0.2
        %v2385 = vmul.f32 %v2321, 0.2
        %v2386 = vmul.f32 %v2322, 0.2
        %v2387 = vmul.f32 %v2323, 0.2
        %v2388 = vmul.f32 %v2324, 0.2
        %v2389 = vmul.f32 %v2325, 0.2
        %v2390 = vmul.f32 %v2326, 0.2
        %v2391 = vmul.f32 %v2327, 0.2
        %v2392 = vmul.f32 %v2328, 0.2
        %v2393 = vmul.f32 %v2329, 0.2
        %v2394 = vmul.f32 %v2330, 0.2
        %v2395 = vmul.f32 %v2331, 0.2
        %v2396 = vmul.f32 %v2332, 0.2
        %v2397 = vmul.f32 %v2333, 0.2
        %v2398 = vmul.f32 %v2334, 0.2
        %v2399 = vmul.f32 %v2335, 0.2
        %v2400 = vmul.f32 %v2336, 0.2
        %v2401 = vmul.f32 %v2337, 0.2
        %v2402 = vsel %vm2338, %v2306, %v2370
        %v2403 = vsel %vm2339, %v2307, %v2371
        %v2404 = vsel %vm2340, %v2308, %v2372
        %v2405 = vsel %vm2341, %v2309, %v2373
        %v2406 = vsel %vm2342, %v2310, %v2374
        %v2407 = vsel %vm2343, %v2311, %v2375
        %v2408 = vsel %vm2344, %v2312, %v2376
        %v2409 = vsel %vm2345, %v2313, %v2377
        %v2410 = vsel %vm2346, %v2314, %v2378
        %v2411 = vsel %vm2347, %v2315, %v2379
        %v2412 = vsel %vm2348, %v2316, %v2380
        %v2413 = vsel %vm2349, %v2317, %v2381
        %v2414 = vsel %vm2350, %v2318, %v2382
        %v2415 = vsel %vm2351, %v2319, %v2383
        %v2416 = vsel %vm2352, %v2320, %v2384
        %v2417 = vsel %vm2353, %v2321, %v2385
        %v2418 = vsel %vm2354, %v2322, %v2386
        %v2419 = vsel %vm2355, %v2323, %v2387
        %v2420 = vsel %vm2356, %v2324, %v2388
        %v2421 = vsel %vm2357, %v2325, %v2389
        %v2422 = vsel %vm2358, %v2326, %v2390
        %v2423 = vsel %vm2359, %v2327, %v2391
        %v2424 = vsel %vm2360, %v2328, %v2392
        %v2425 = vsel %vm2361, %v2329, %v2393
        %v2426 = vsel %vm2362, %v2330, %v2394
        %v2427 = vsel %vm2363, %v2331, %v2395
        %v2428 = vsel %vm2364, %v2332, %v2396
        %v2429 = vsel %vm2365, %v2333, %v2397
        %v2430 = vsel %vm2366, %v2334, %v2398
        %v2431 = vsel %vm2367, %v2335, %v2399
        %v2432 = vsel %vm2368, %v2336, %v2400
        %v2433 = vsel %vm2369, %v2337, %v2401
        %v2434 = vld [vmem:[#allocation20] sm:$0x1]
        %v2435 = vld [vmem:[#allocation21] sm:$0x1]
        %v2436 = vpack.c.bf16 %v2403, %v2402
        %v2437 = vpack.c.bf16 %v2405, %v2404
        %v2438 = vpack.c.bf16 %v2407, %v2406
        %v2439 = vpack.c.bf16 %v2409, %v2408
        %v2440 = vpack.c.bf16 %v2411, %v2410
        %v2441 = vpack.c.bf16 %v2413, %v2412
        %v2442 = vpack.c.bf16 %v2415, %v2414
        %v2443 = vpack.c.bf16 %v2417, %v2416
        %v2444 = vpack.c.bf16 %v2419, %v2418
        %v2445 = vpack.c.bf16 %v2421, %v2420
        %v2446 = vpack.c.bf16 %v2423, %v2422
        %v2447 = vpack.c.bf16 %v2425, %v2424
        %v2448 = vpack.c.bf16 %v2427, %v2426
        %v2449 = vpack.c.bf16 %v2429, %v2428
        %v2450 = vpack.c.bf16 %v2431, %v2430
        %v2451 = vpack.c.bf16 %v2433, %v2432
        %v2452 = vld [vmem:[#allocation18] sm:$0xf]
        %v2453 = vld [vmem:[#allocation18 + $0x4] sm:$0xf]
        %v2454 = vld [vmem:[#allocation18 + $0x8] sm:$0xf]
        %v2455 = vld [vmem:[#allocation18 + $0xc] sm:$0xf]
        %v2456 = vld [vmem:[#allocation18 + $0x10] sm:$0xf]
        %v2457 = vld [vmem:[#allocation18 + $0x14] sm:$0xf]
        %v2458 = vld [vmem:[#allocation18 + $0x18] sm:$0xf]
        %v2459 = vld [vmem:[#allocation18 + $0x1c] sm:$0xf]
        %v2460 = vld [vmem:[#allocation18 + $0x20] sm:$0xf]
        %v2461 = vld [vmem:[#allocation18 + $0x24] sm:$0xf]
        %v2462 = vld [vmem:[#allocation18 + $0x28] sm:$0xf]
        %v2463 = vld [vmem:[#allocation18 + $0x2c] sm:$0xf]
        %v2464 = vld [vmem:[#allocation18 + $0x30] sm:$0xf]
        %v2465 = vld [vmem:[#allocation18 + $0x34] sm:$0xf]
        %v2466 = vld [vmem:[#allocation18 + $0x38] sm:$0xf]
        %v2467 = vld [vmem:[#allocation18 + $0x3c] sm:$0xf]
        %v2484 = vunpack.c.l.b16 %v2452
        %v2485 = vunpack.c.l.b16 %v2453
        %v2486 = vunpack.c.l.b16 %v2454
        %v2487 = vunpack.c.l.b16 %v2455
        %v2488 = vunpack.c.l.b16 %v2456
        %v2489 = vunpack.c.l.b16 %v2457
        %v2490 = vunpack.c.l.b16 %v2458
        %v2491 = vunpack.c.l.b16 %v2459
        %v2492 = vunpack.c.l.b16 %v2460
        %v2493 = vunpack.c.l.b16 %v2461
        %v2494 = vunpack.c.l.b16 %v2462
        %v2495 = vunpack.c.l.b16 %v2463
        %v2496 = vunpack.c.l.b16 %v2464
        %v2497 = vunpack.c.l.b16 %v2465
        %v2498 = vunpack.c.l.b16 %v2466
        %v2499 = vunpack.c.l.b16 %v2467
        %v2500 = vpack.c.b16 %v2485, %v2484
        %v2501 = vpack.c.b16 %v2487, %v2486
        %v2502 = vpack.c.b16 %v2489, %v2488
        %v2503 = vpack.c.b16 %v2491, %v2490
        %v2504 = vpack.c.b16 %v2493, %v2492
        %v2505 = vpack.c.b16 %v2495, %v2494
        %v2506 = vpack.c.b16 %v2497, %v2496
        %v2507 = vpack.c.b16 %v2499, %v2498
        %2516 = vmatpush.bf16.msra.mxu0 %v2507
        %2517 = vmatpush.bf16.msra.mxu0 %v2506
        %2518 = vmatpush.bf16.msra.mxu0 %v2505
        %2519 = vmatpush.bf16.msra.mxu0 %v2504
        %2520 = vmatpush.bf16.msra.mxu0 %v2503
        %2521 = vmatpush.bf16.msra.mxu0 %v2502
        %2522 = vmatpush.bf16.msra.mxu0 %v2501
        %2523 = vmatpush.bf16.msra.mxu0 %v2500
        %2524 = vmatmul.bf16.gmra.mxu0 %v2436
        %v2525 = vpop.f32.mrf.mxu0
        %v2526 = vadd.f32 0.0, %v2525
        %v2527 = vpop.f32.mrf.mxu0
        %v2528 = vadd.f32 0.0, %v2527
        %2529 = vmatmul.bf16.gmra.mxu0 %v2437
        %v2530 = vpop.f32.mrf.mxu0
        %v2531 = vadd.f32 0.0, %v2530
        %v2532 = vpop.f32.mrf.mxu0
        %v2533 = vadd.f32 0.0, %v2532
        %2534 = vmatmul.bf16.gmra.mxu0 %v2438
        %v2535 = vpop.f32.mrf.mxu0
        %v2536 = vadd.f32 0.0, %v2535
        %v2537 = vpop.f32.mrf.mxu0
        %v2538 = vadd.f32 0.0, %v2537
        %2539 = vmatmul.bf16.gmra.mxu0 %v2439
        %v2540 = vpop.f32.mrf.mxu0
        %v2541 = vadd.f32 0.0, %v2540
        %v2542 = vpop.f32.mrf.mxu0
        %v2543 = vadd.f32 0.0, %v2542
        %2544 = vmatmul.bf16.gmra.mxu0 %v2440
        %v2545 = vpop.f32.mrf.mxu0
        %v2546 = vadd.f32 0.0, %v2545
        %v2547 = vpop.f32.mrf.mxu0
        %v2548 = vadd.f32 0.0, %v2547
        %2549 = vmatmul.bf16.gmra.mxu0 %v2441
        %v2550 = vpop.f32.mrf.mxu0
        %v2551 = vadd.f32 0.0, %v2550
        %v2552 = vpop.f32.mrf.mxu0
        %v2553 = vadd.f32 0.0, %v2552
        %2554 = vmatmul.bf16.gmra.mxu0 %v2442
        %v2555 = vpop.f32.mrf.mxu0
        %v2556 = vadd.f32 0.0, %v2555
        %v2557 = vpop.f32.mrf.mxu0
        %v2558 = vadd.f32 0.0, %v2557
        %2559 = vmatmul.bf16.gmra.mxu0 %v2443
        %v2560 = vpop.f32.mrf.mxu0
        %v2561 = vadd.f32 0.0, %v2560
        %v2562 = vpop.f32.mrf.mxu0
        %v2563 = vadd.f32 0.0, %v2562
        %2564 = vmatmul.bf16.gmra.mxu0 %v2444
        %v2565 = vpop.f32.mrf.mxu0
        %v2566 = vadd.f32 0.0, %v2565
        %v2567 = vpop.f32.mrf.mxu0
        %v2568 = vadd.f32 0.0, %v2567
        %2569 = vmatmul.bf16.gmra.mxu0 %v2445
        %v2570 = vpop.f32.mrf.mxu0
        %v2571 = vadd.f32 0.0, %v2570
        %v2572 = vpop.f32.mrf.mxu0
        %v2573 = vadd.f32 0.0, %v2572
        %2574 = vmatmul.bf16.gmra.mxu0 %v2446
        %v2575 = vpop.f32.mrf.mxu0
        %v2576 = vadd.f32 0.0, %v2575
        %v2577 = vpop.f32.mrf.mxu0
        %v2578 = vadd.f32 0.0, %v2577
        %2579 = vmatmul.bf16.gmra.mxu0 %v2447
        %v2580 = vpop.f32.mrf.mxu0
        %v2581 = vadd.f32 0.0, %v2580
        %v2582 = vpop.f32.mrf.mxu0
        %v2583 = vadd.f32 0.0, %v2582
        %2584 = vmatmul.bf16.gmra.mxu0 %v2448
        %v2585 = vpop.f32.mrf.mxu0
        %v2586 = vadd.f32 0.0, %v2585
        %v2587 = vpop.f32.mrf.mxu0
        %v2588 = vadd.f32 0.0, %v2587
        %2589 = vmatmul.bf16.gmra.mxu0 %v2449
        %v2590 = vpop.f32.mrf.mxu0
        %v2591 = vadd.f32 0.0, %v2590
        %v2592 = vpop.f32.mrf.mxu0
        %v2593 = vadd.f32 0.0, %v2592
        %2594 = vmatmul.bf16.gmra.mxu0 %v2450
        %v2595 = vpop.f32.mrf.mxu0
        %v2596 = vadd.f32 0.0, %v2595
        %v2597 = vpop.f32.mrf.mxu0
        %v2598 = vadd.f32 0.0, %v2597
        %2599 = vmatmul.bf16.gmra.mxu0 %v2451
        %v2600 = vpop.f32.mrf.mxu0
        %v2601 = vadd.f32 0.0, %v2600
        %v2602 = vpop.f32.mrf.mxu0
        %v2603 = vadd.f32 0.0, %v2602
        %2604 = vdwg.mxu0
        %v2606 = vperm.slane %v2434, 0
        %v2608 = vmul.f32 %v2526, %v2606
        %v2609 = vmul.f32 %v2528, %v2606
        %v2610 = vmul.f32 %v2531, %v2606
        %v2611 = vmul.f32 %v2533, %v2606
        %v2612 = vmul.f32 %v2536, %v2606
        %v2613 = vmul.f32 %v2538, %v2606
        %v2614 = vmul.f32 %v2541, %v2606
        %v2615 = vmul.f32 %v2543, %v2606
        %v2616 = vmul.f32 %v2546, %v2606
        %v2617 = vmul.f32 %v2548, %v2606
        %v2618 = vmul.f32 %v2551, %v2606
        %v2619 = vmul.f32 %v2553, %v2606
        %v2620 = vmul.f32 %v2556, %v2606
        %v2621 = vmul.f32 %v2558, %v2606
        %v2622 = vmul.f32 %v2561, %v2606
        %v2623 = vmul.f32 %v2563, %v2606
        %v2624 = vmul.f32 %v2566, %v2606
        %v2625 = vmul.f32 %v2568, %v2606
        %v2626 = vmul.f32 %v2571, %v2606
        %v2627 = vmul.f32 %v2573, %v2606
        %v2628 = vmul.f32 %v2576, %v2606
        %v2629 = vmul.f32 %v2578, %v2606
        %v2630 = vmul.f32 %v2581, %v2606
        %v2631 = vmul.f32 %v2583, %v2606
        %v2632 = vmul.f32 %v2586, %v2606
        %v2633 = vmul.f32 %v2588, %v2606
        %v2634 = vmul.f32 %v2591, %v2606
        %v2635 = vmul.f32 %v2593, %v2606
        %v2636 = vmul.f32 %v2596, %v2606
        %v2637 = vmul.f32 %v2598, %v2606
        %v2638 = vmul.f32 %v2601, %v2606
        %v2639 = vmul.f32 %v2603, %v2606
        %v2641 = vperm.slane %v2435, 0
        %v2643 = vadd.f32 %v2608, %v2641
        %v2644 = vadd.f32 %v2609, %v2641
        %v2645 = vadd.f32 %v2610, %v2641
        %v2646 = vadd.f32 %v2611, %v2641
        %v2647 = vadd.f32 %v2612, %v2641
        %v2648 = vadd.f32 %v2613, %v2641
        %v2649 = vadd.f32 %v2614, %v2641
        %v2650 = vadd.f32 %v2615, %v2641
        %v2651 = vadd.f32 %v2616, %v2641
        %v2652 = vadd.f32 %v2617, %v2641
        %v2653 = vadd.f32 %v2618, %v2641
        %v2654 = vadd.f32 %v2619, %v2641
        %v2655 = vadd.f32 %v2620, %v2641
        %v2656 = vadd.f32 %v2621, %v2641
        %v2657 = vadd.f32 %v2622, %v2641
        %v2658 = vadd.f32 %v2623, %v2641
        %v2659 = vadd.f32 %v2624, %v2641
        %v2660 = vadd.f32 %v2625, %v2641
        %v2661 = vadd.f32 %v2626, %v2641
        %v2662 = vadd.f32 %v2627, %v2641
        %v2663 = vadd.f32 %v2628, %v2641
        %v2664 = vadd.f32 %v2629, %v2641
        %v2665 = vadd.f32 %v2630, %v2641
        %v2666 = vadd.f32 %v2631, %v2641
        %v2667 = vadd.f32 %v2632, %v2641
        %v2668 = vadd.f32 %v2633, %v2641
        %v2669 = vadd.f32 %v2634, %v2641
        %v2670 = vadd.f32 %v2635, %v2641
        %v2671 = vadd.f32 %v2636, %v2641
        %v2672 = vadd.f32 %v2637, %v2641
        %v2673 = vadd.f32 %v2638, %v2641
        %v2674 = vadd.f32 %v2639, %v2641
        %vm2675 = vcmp.ge.f32.partialorder %v2643, 0.0
        %vm2676 = vcmp.ge.f32.partialorder %v2644, 0.0
        %vm2677 = vcmp.ge.f32.partialorder %v2645, 0.0
        %vm2678 = vcmp.ge.f32.partialorder %v2646, 0.0
        %vm2679 = vcmp.ge.f32.partialorder %v2647, 0.0
        %vm2680 = vcmp.ge.f32.partialorder %v2648, 0.0
        %vm2681 = vcmp.ge.f32.partialorder %v2649, 0.0
        %vm2682 = vcmp.ge.f32.partialorder %v2650, 0.0
        %vm2683 = vcmp.ge.f32.partialorder %v2651, 0.0
        %vm2684 = vcmp.ge.f32.partialorder %v2652, 0.0
        %vm2685 = vcmp.ge.f32.partialorder %v2653, 0.0
        %vm2686 = vcmp.ge.f32.partialorder %v2654, 0.0
        %vm2687 = vcmp.ge.f32.partialorder %v2655, 0.0
        %vm2688 = vcmp.ge.f32.partialorder %v2656, 0.0
        %vm2689 = vcmp.ge.f32.partialorder %v2657, 0.0
        %vm2690 = vcmp.ge.f32.partialorder %v2658, 0.0
        %vm2691 = vcmp.ge.f32.partialorder %v2659, 0.0
        %vm2692 = vcmp.ge.f32.partialorder %v2660, 0.0
        %vm2693 = vcmp.ge.f32.partialorder %v2661, 0.0
        %vm2694 = vcmp.ge.f32.partialorder %v2662, 0.0
        %vm2695 = vcmp.ge.f32.partialorder %v2663, 0.0
        %vm2696 = vcmp.ge.f32.partialorder %v2664, 0.0
        %vm2697 = vcmp.ge.f32.partialorder %v2665, 0.0
        %vm2698 = vcmp.ge.f32.partialorder %v2666, 0.0
        %vm2699 = vcmp.ge.f32.partialorder %v2667, 0.0
        %vm2700 = vcmp.ge.f32.partialorder %v2668, 0.0
        %vm2701 = vcmp.ge.f32.partialorder %v2669, 0.0
        %vm2702 = vcmp.ge.f32.partialorder %v2670, 0.0
        %vm2703 = vcmp.ge.f32.partialorder %v2671, 0.0
        %vm2704 = vcmp.ge.f32.partialorder %v2672, 0.0
        %vm2705 = vcmp.ge.f32.partialorder %v2673, 0.0
        %vm2706 = vcmp.ge.f32.partialorder %v2674, 0.0
        %v2707 = vmul.f32 %v2643, 0.2
        %v2708 = vmul.f32 %v2644, 0.2
        %v2709 = vmul.f32 %v2645, 0.2
        %v2710 = vmul.f32 %v2646, 0.2
        %v2711 = vmul.f32 %v2647, 0.2
        %v2712 = vmul.f32 %v2648, 0.2
        %v2713 = vmul.f32 %v2649, 0.2
        %v2714 = vmul.f32 %v2650, 0.2
        %v2715 = vmul.f32 %v2651, 0.2
        %v2716 = vmul.f32 %v2652, 0.2
        %v2717 = vmul.f32 %v2653, 0.2
        %v2718 = vmul.f32 %v2654, 0.2
        %v2719 = vmul.f32 %v2655, 0.2
        %v2720 = vmul.f32 %v2656, 0.2
        %v2721 = vmul.f32 %v2657, 0.2
        %v2722 = vmul.f32 %v2658, 0.2
        %v2723 = vmul.f32 %v2659, 0.2
        %v2724 = vmul.f32 %v2660, 0.2
        %v2725 = vmul.f32 %v2661, 0.2
        %v2726 = vmul.f32 %v2662, 0.2
        %v2727 = vmul.f32 %v2663, 0.2
        %v2728 = vmul.f32 %v2664, 0.2
        %v2729 = vmul.f32 %v2665, 0.2
        %v2730 = vmul.f32 %v2666, 0.2
        %v2731 = vmul.f32 %v2667, 0.2
        %v2732 = vmul.f32 %v2668, 0.2
        %v2733 = vmul.f32 %v2669, 0.2
        %v2734 = vmul.f32 %v2670, 0.2
        %v2735 = vmul.f32 %v2671, 0.2
        %v2736 = vmul.f32 %v2672, 0.2
        %v2737 = vmul.f32 %v2673, 0.2
        %v2738 = vmul.f32 %v2674, 0.2
        %v2739 = vsel %vm2675, %v2643, %v2707
        %v2740 = vsel %vm2676, %v2644, %v2708
        %v2741 = vsel %vm2677, %v2645, %v2709
        %v2742 = vsel %vm2678, %v2646, %v2710
        %v2743 = vsel %vm2679, %v2647, %v2711
        %v2744 = vsel %vm2680, %v2648, %v2712
        %v2745 = vsel %vm2681, %v2649, %v2713
        %v2746 = vsel %vm2682, %v2650, %v2714
        %v2747 = vsel %vm2683, %v2651, %v2715
        %v2748 = vsel %vm2684, %v2652, %v2716
        %v2749 = vsel %vm2685, %v2653, %v2717
        %v2750 = vsel %vm2686, %v2654, %v2718
        %v2751 = vsel %vm2687, %v2655, %v2719
        %v2752 = vsel %vm2688, %v2656, %v2720
        %v2753 = vsel %vm2689, %v2657, %v2721
        %v2754 = vsel %vm2690, %v2658, %v2722
        %v2755 = vsel %vm2691, %v2659, %v2723
        %v2756 = vsel %vm2692, %v2660, %v2724
        %v2757 = vsel %vm2693, %v2661, %v2725
        %v2758 = vsel %vm2694, %v2662, %v2726
        %v2759 = vsel %vm2695, %v2663, %v2727
        %v2760 = vsel %vm2696, %v2664, %v2728
        %v2761 = vsel %vm2697, %v2665, %v2729
        %v2762 = vsel %vm2698, %v2666, %v2730
        %v2763 = vsel %vm2699, %v2667, %v2731
        %v2764 = vsel %vm2700, %v2668, %v2732
        %v2765 = vsel %vm2701, %v2669, %v2733
        %v2766 = vsel %vm2702, %v2670, %v2734
        %v2767 = vsel %vm2703, %v2671, %v2735
        %v2768 = vsel %vm2704, %v2672, %v2736
        %v2769 = vsel %vm2705, %v2673, %v2737
        %v2770 = vsel %vm2706, %v2674, %v2738
        %v2771 = vld [vmem:[%s14] sm:$0x3]
        %v2772 = vld [vmem:[%s15] sm:$0x3]
        %v2773 = vpack.c.bf16 %v2740, %v2739
        %v2774 = vpack.c.bf16 %v2742, %v2741
        %v2775 = vpack.c.bf16 %v2744, %v2743
        %v2776 = vpack.c.bf16 %v2746, %v2745
        %v2777 = vpack.c.bf16 %v2748, %v2747
        %v2778 = vpack.c.bf16 %v2750, %v2749
        %v2779 = vpack.c.bf16 %v2752, %v2751
        %v2780 = vpack.c.bf16 %v2754, %v2753
        %v2781 = vpack.c.bf16 %v2756, %v2755
        %v2782 = vpack.c.bf16 %v2758, %v2757
        %v2783 = vpack.c.bf16 %v2760, %v2759
        %v2784 = vpack.c.bf16 %v2762, %v2761
        %v2785 = vpack.c.bf16 %v2764, %v2763
        %v2786 = vpack.c.bf16 %v2766, %v2765
        %v2787 = vpack.c.bf16 %v2768, %v2767
        %v2788 = vpack.c.bf16 %v2770, %v2769
        %v2789 = vld [vmem:[%s13] sm:$0xff]
        %v2790 = vld [vmem:[%s13 + $0x8] sm:$0xff]
        %v2791 = vld [vmem:[%s13 + $0x10] sm:$0xff]
        %v2792 = vld [vmem:[%s13 + $0x18] sm:$0xff]
        %v2793 = vld [vmem:[%s13 + $0x20] sm:$0xff]
        %v2794 = vld [vmem:[%s13 + $0x28] sm:$0xff]
        %v2795 = vld [vmem:[%s13 + $0x30] sm:$0xff]
        %v2796 = vld [vmem:[%s13 + $0x38] sm:$0xff]
        %v2797 = vld [vmem:[%s13 + $0x40] sm:$0xff]
        %v2798 = vld [vmem:[%s13 + $0x48] sm:$0xff]
        %v2799 = vld [vmem:[%s13 + $0x50] sm:$0xff]
        %v2800 = vld [vmem:[%s13 + $0x58] sm:$0xff]
        %v2801 = vld [vmem:[%s13 + $0x60] sm:$0xff]
        %v2802 = vld [vmem:[%s13 + $0x68] sm:$0xff]
        %v2803 = vld [vmem:[%s13 + $0x70] sm:$0xff]
        %v2804 = vld [vmem:[%s13 + $0x78] sm:$0xff]
        %v2821 = vunpack.c.l.b16 %v2789
        %v2822 = vunpack.c.h.b16 %v2789
        %v2823 = vunpack.c.l.b16 %v2790
        %v2824 = vunpack.c.h.b16 %v2790
        %v2825 = vunpack.c.l.b16 %v2791
        %v2826 = vunpack.c.h.b16 %v2791
        %v2827 = vunpack.c.l.b16 %v2792
        %v2828 = vunpack.c.h.b16 %v2792
        %v2829 = vunpack.c.l.b16 %v2793
        %v2830 = vunpack.c.h.b16 %v2793
        %v2831 = vunpack.c.l.b16 %v2794
        %v2832 = vunpack.c.h.b16 %v2794
        %v2833 = vunpack.c.l.b16 %v2795
        %v2834 = vunpack.c.h.b16 %v2795
        %v2835 = vunpack.c.l.b16 %v2796
        %v2836 = vunpack.c.h.b16 %v2796
        %v2837 = vunpack.c.l.b16 %v2797
        %v2838 = vunpack.c.h.b16 %v2797
        %v2839 = vunpack.c.l.b16 %v2798
        %v2840 = vunpack.c.h.b16 %v2798
        %v2841 = vunpack.c.l.b16 %v2799
        %v2842 = vunpack.c.h.b16 %v2799
        %v2843 = vunpack.c.l.b16 %v2800
        %v2844 = vunpack.c.h.b16 %v2800
        %v2845 = vunpack.c.l.b16 %v2801
        %v2846 = vunpack.c.h.b16 %v2801
        %v2847 = vunpack.c.l.b16 %v2802
        %v2848 = vunpack.c.h.b16 %v2802
        %v2849 = vunpack.c.l.b16 %v2803
        %v2850 = vunpack.c.h.b16 %v2803
        %v2851 = vunpack.c.l.b16 %v2804
        %v2852 = vunpack.c.h.b16 %v2804
        %v2853 = vpack.c.b16 %v2823, %v2821
        %v2854 = vpack.c.b16 %v2824, %v2822
        %v2855 = vpack.c.b16 %v2827, %v2825
        %v2856 = vpack.c.b16 %v2828, %v2826
        %v2857 = vpack.c.b16 %v2831, %v2829
        %v2858 = vpack.c.b16 %v2832, %v2830
        %v2859 = vpack.c.b16 %v2835, %v2833
        %v2860 = vpack.c.b16 %v2836, %v2834
        %v2861 = vpack.c.b16 %v2839, %v2837
        %v2862 = vpack.c.b16 %v2840, %v2838
        %v2863 = vpack.c.b16 %v2843, %v2841
        %v2864 = vpack.c.b16 %v2844, %v2842
        %v2865 = vpack.c.b16 %v2847, %v2845
        %v2866 = vpack.c.b16 %v2848, %v2846
        %v2867 = vpack.c.b16 %v2851, %v2849
        %v2868 = vpack.c.b16 %v2852, %v2850
        %2885 = vmatpush.bf16.msra.mxu0 %v2867
        %2886 = vmatpush.bf16.msra.mxu0 %v2865
        %2887 = vmatpush.bf16.msra.mxu0 %v2863
        %2888 = vmatpush.bf16.msra.mxu0 %v2861
        %2889 = vmatpush.bf16.msra.mxu0 %v2859
        %2890 = vmatpush.bf16.msra.mxu0 %v2857
        %2891 = vmatpush.bf16.msra.mxu0 %v2855
        %2892 = vmatpush.bf16.msra.mxu0 %v2853
        %2893 = vmatmul.bf16.gmra.mxu0 %v2773
        %v2894 = vpop.f32.mrf.mxu0
        %v2895 = vadd.f32 0.0, %v2894
        %v2896 = vpop.f32.mrf.mxu0
        %v2897 = vadd.f32 0.0, %v2896
        %2898 = vmatmul.bf16.gmra.mxu0 %v2774
        %v2899 = vpop.f32.mrf.mxu0
        %v2900 = vadd.f32 0.0, %v2899
        %v2901 = vpop.f32.mrf.mxu0
        %v2902 = vadd.f32 0.0, %v2901
        %2903 = vmatmul.bf16.gmra.mxu0 %v2775
        %v2904 = vpop.f32.mrf.mxu0
        %v2905 = vadd.f32 0.0, %v2904
        %v2906 = vpop.f32.mrf.mxu0
        %v2907 = vadd.f32 0.0, %v2906
        %2908 = vmatmul.bf16.gmra.mxu0 %v2776
        %v2909 = vpop.f32.mrf.mxu0
        %v2910 = vadd.f32 0.0, %v2909
        %v2911 = vpop.f32.mrf.mxu0
        %v2912 = vadd.f32 0.0, %v2911
        %2913 = vmatmul.bf16.gmra.mxu0 %v2777
        %v2914 = vpop.f32.mrf.mxu0
        %v2915 = vadd.f32 0.0, %v2914
        %v2916 = vpop.f32.mrf.mxu0
        %v2917 = vadd.f32 0.0, %v2916
        %2918 = vmatmul.bf16.gmra.mxu0 %v2778
        %v2919 = vpop.f32.mrf.mxu0
        %v2920 = vadd.f32 0.0, %v2919
        %v2921 = vpop.f32.mrf.mxu0
        %v2922 = vadd.f32 0.0, %v2921
        %2923 = vmatmul.bf16.gmra.mxu0 %v2779
        %v2924 = vpop.f32.mrf.mxu0
        %v2925 = vadd.f32 0.0, %v2924
        %v2926 = vpop.f32.mrf.mxu0
        %v2927 = vadd.f32 0.0, %v2926
        %2928 = vmatmul.bf16.gmra.mxu0 %v2780
        %v2929 = vpop.f32.mrf.mxu0
        %v2930 = vadd.f32 0.0, %v2929
        %v2931 = vpop.f32.mrf.mxu0
        %v2932 = vadd.f32 0.0, %v2931
        %2933 = vmatmul.bf16.gmra.mxu0 %v2781
        %v2934 = vpop.f32.mrf.mxu0
        %v2935 = vadd.f32 0.0, %v2934
        %v2936 = vpop.f32.mrf.mxu0
        %v2937 = vadd.f32 0.0, %v2936
        %2938 = vmatmul.bf16.gmra.mxu0 %v2782
        %v2939 = vpop.f32.mrf.mxu0
        %v2940 = vadd.f32 0.0, %v2939
        %v2941 = vpop.f32.mrf.mxu0
        %v2942 = vadd.f32 0.0, %v2941
        %2943 = vmatmul.bf16.gmra.mxu0 %v2783
        %v2944 = vpop.f32.mrf.mxu0
        %v2945 = vadd.f32 0.0, %v2944
        %v2946 = vpop.f32.mrf.mxu0
        %v2947 = vadd.f32 0.0, %v2946
        %2948 = vmatmul.bf16.gmra.mxu0 %v2784
        %v2949 = vpop.f32.mrf.mxu0
        %v2950 = vadd.f32 0.0, %v2949
        %v2951 = vpop.f32.mrf.mxu0
        %v2952 = vadd.f32 0.0, %v2951
        %2953 = vmatmul.bf16.gmra.mxu0 %v2785
        %v2954 = vpop.f32.mrf.mxu0
        %v2955 = vadd.f32 0.0, %v2954
        %v2956 = vpop.f32.mrf.mxu0
        %v2957 = vadd.f32 0.0, %v2956
        %2958 = vmatmul.bf16.gmra.mxu0 %v2786
        %v2959 = vpop.f32.mrf.mxu0
        %v2960 = vadd.f32 0.0, %v2959
        %v2961 = vpop.f32.mrf.mxu0
        %v2962 = vadd.f32 0.0, %v2961
        %2963 = vmatmul.bf16.gmra.mxu0 %v2787
        %v2964 = vpop.f32.mrf.mxu0
        %v2965 = vadd.f32 0.0, %v2964
        %v2966 = vpop.f32.mrf.mxu0
        %v2967 = vadd.f32 0.0, %v2966
        %2968 = vmatmul.bf16.gmra.mxu0 %v2788
        %v2969 = vpop.f32.mrf.mxu0
        %v2970 = vadd.f32 0.0, %v2969
        %v2971 = vpop.f32.mrf.mxu0
        %v2972 = vadd.f32 0.0, %v2971
        %2973 = vdwg.mxu0
        %2974 = vmatpush.bf16.msra.mxu0 %v2868
        %2975 = vmatpush.bf16.msra.mxu0 %v2866
        %2976 = vmatpush.bf16.msra.mxu0 %v2864
        %2977 = vmatpush.bf16.msra.mxu0 %v2862
        %2978 = vmatpush.bf16.msra.mxu0 %v2860
        %2979 = vmatpush.bf16.msra.mxu0 %v2858
        %2980 = vmatpush.bf16.msra.mxu0 %v2856
        %2981 = vmatpush.bf16.msra.mxu0 %v2854
        %2982 = vmatmul.bf16.gmra.mxu0 %v2773
        %v2983 = vpop.f32.mrf.mxu0
        %v2984 = vadd.f32 0.0, %v2983
        %v2985 = vpop.f32.mrf.mxu0
        %v2986 = vadd.f32 0.0, %v2985
        %2987 = vmatmul.bf16.gmra.mxu0 %v2774
        %v2988 = vpop.f32.mrf.mxu0
        %v2989 = vadd.f32 0.0, %v2988
        %v2990 = vpop.f32.mrf.mxu0
        %v2991 = vadd.f32 0.0, %v2990
        %2992 = vmatmul.bf16.gmra.mxu0 %v2775
        %v2993 = vpop.f32.mrf.mxu0
        %v2994 = vadd.f32 0.0, %v2993
        %v2995 = vpop.f32.mrf.mxu0
        %v2996 = vadd.f32 0.0, %v2995
        %2997 = vmatmul.bf16.gmra.mxu0 %v2776
        %v2998 = vpop.f32.mrf.mxu0
        %v2999 = vadd.f32 0.0, %v2998
        %v3000 = vpop.f32.mrf.mxu0
        %v3001 = vadd.f32 0.0, %v3000
        %3002 = vmatmul.bf16.gmra.mxu0 %v2777
        %v3003 = vpop.f32.mrf.mxu0
        %v3004 = vadd.f32 0.0, %v3003
        %v3005 = vpop.f32.mrf.mxu0
        %v3006 = vadd.f32 0.0, %v3005
        %3007 = vmatmul.bf16.gmra.mxu0 %v2778
        %v3008 = vpop.f32.mrf.mxu0
        %v3009 = vadd.f32 0.0, %v3008
        %v3010 = vpop.f32.mrf.mxu0
        %v3011 = vadd.f32 0.0, %v3010
        %3012 = vmatmul.bf16.gmra.mxu0 %v2779
        %v3013 = vpop.f32.mrf.mxu0
        %v3014 = vadd.f32 0.0, %v3013
        %v3015 = vpop.f32.mrf.mxu0
        %v3016 = vadd.f32 0.0, %v3015
        %3017 = vmatmul.bf16.gmra.mxu0 %v2780
        %v3018 = vpop.f32.mrf.mxu0
        %v3019 = vadd.f32 0.0, %v3018
        %v3020 = vpop.f32.mrf.mxu0
        %v3021 = vadd.f32 0.0, %v3020
        %3022 = vmatmul.bf16.gmra.mxu0 %v2781
        %v3023 = vpop.f32.mrf.mxu0
        %v3024 = vadd.f32 0.0, %v3023
        %v3025 = vpop.f32.mrf.mxu0
        %v3026 = vadd.f32 0.0, %v3025
        %3027 = vmatmul.bf16.gmra.mxu0 %v2782
        %v3028 = vpop.f32.mrf.mxu0
        %v3029 = vadd.f32 0.0, %v3028
        %v3030 = vpop.f32.mrf.mxu0
        %v3031 = vadd.f32 0.0, %v3030
        %3032 = vmatmul.bf16.gmra.mxu0 %v2783
        %v3033 = vpop.f32.mrf.mxu0
        %v3034 = vadd.f32 0.0, %v3033
        %v3035 = vpop.f32.mrf.mxu0
        %v3036 = vadd.f32 0.0, %v3035
        %3037 = vmatmul.bf16.gmra.mxu0 %v2784
        %v3038 = vpop.f32.mrf.mxu0
        %v3039 = vadd.f32 0.0, %v3038
        %v3040 = vpop.f32.mrf.mxu0
        %v3041 = vadd.f32 0.0, %v3040
        %3042 = vmatmul.bf16.gmra.mxu0 %v2785
        %v3043 = vpop.f32.mrf.mxu0
        %v3044 = vadd.f32 0.0, %v3043
        %v3045 = vpop.f32.mrf.mxu0
        %v3046 = vadd.f32 0.0, %v3045
        %3047 = vmatmul.bf16.gmra.mxu0 %v2786
        %v3048 = vpop.f32.mrf.mxu0
        %v3049 = vadd.f32 0.0, %v3048
        %v3050 = vpop.f32.mrf.mxu0
        %v3051 = vadd.f32 0.0, %v3050
        %3052 = vmatmul.bf16.gmra.mxu0 %v2787
        %v3053 = vpop.f32.mrf.mxu0
        %v3054 = vadd.f32 0.0, %v3053
        %v3055 = vpop.f32.mrf.mxu0
        %v3056 = vadd.f32 0.0, %v3055
        %3057 = vmatmul.bf16.gmra.mxu0 %v2788
        %v3058 = vpop.f32.mrf.mxu0
        %v3059 = vadd.f32 0.0, %v3058
        %v3060 = vpop.f32.mrf.mxu0
        %v3061 = vadd.f32 0.0, %v3060
        %3062 = vdwg.mxu0
        %v3064 = vperm.slane %v2771, 0
        %v3065 = vperm.slane %v2771, 1
        %v3068 = vmul.f32 %v2895, %v3064
        %v3069 = vmul.f32 %v2984, %v3065
        %v3070 = vmul.f32 %v2897, %v3064
        %v3071 = vmul.f32 %v2986, %v3065
        %v3072 = vmul.f32 %v2900, %v3064
        %v3073 = vmul.f32 %v2989, %v3065
        %v3074 = vmul.f32 %v2902, %v3064
        %v3075 = vmul.f32 %v2991, %v3065
        %v3076 = vmul.f32 %v2905, %v3064
        %v3077 = vmul.f32 %v2994, %v3065
        %v3078 = vmul.f32 %v2907, %v3064
        %v3079 = vmul.f32 %v2996, %v3065
        %v3080 = vmul.f32 %v2910, %v3064
        %v3081 = vmul.f32 %v2999, %v3065
        %v3082 = vmul.f32 %v2912, %v3064
        %v3083 = vmul.f32 %v3001, %v3065
        %v3084 = vmul.f32 %v2915, %v3064
        %v3085 = vmul.f32 %v3004, %v3065
        %v3086 = vmul.f32 %v2917, %v3064
        %v3087 = vmul.f32 %v3006, %v3065
        %v3088 = vmul.f32 %v2920, %v3064
        %v3089 = vmul.f32 %v3009, %v3065
        %v3090 = vmul.f32 %v2922, %v3064
        %v3091 = vmul.f32 %v3011, %v3065
        %v3092 = vmul.f32 %v2925, %v3064
        %v3093 = vmul.f32 %v3014, %v3065
        %v3094 = vmul.f32 %v2927, %v3064
        %v3095 = vmul.f32 %v3016, %v3065
        %v3096 = vmul.f32 %v2930, %v3064
        %v3097 = vmul.f32 %v3019, %v3065
        %v3098 = vmul.f32 %v2932, %v3064
        %v3099 = vmul.f32 %v3021, %v3065
        %v3100 = vmul.f32 %v2935, %v3064
        %v3101 = vmul.f32 %v3024, %v3065
        %v3102 = vmul.f32 %v2937, %v3064
        %v3103 = vmul.f32 %v3026, %v3065
        %v3104 = vmul.f32 %v2940, %v3064
        %v3105 = vmul.f32 %v3029, %v3065
        %v3106 = vmul.f32 %v2942, %v3064
        %v3107 = vmul.f32 %v3031, %v3065
        %v3108 = vmul.f32 %v2945, %v3064
        %v3109 = vmul.f32 %v3034, %v3065
        %v3110 = vmul.f32 %v2947, %v3064
        %v3111 = vmul.f32 %v3036, %v3065
        %v3112 = vmul.f32 %v2950, %v3064
        %v3113 = vmul.f32 %v3039, %v3065
        %v3114 = vmul.f32 %v2952, %v3064
        %v3115 = vmul.f32 %v3041, %v3065
        %v3116 = vmul.f32 %v2955, %v3064
        %v3117 = vmul.f32 %v3044, %v3065
        %v3118 = vmul.f32 %v2957, %v3064
        %v3119 = vmul.f32 %v3046, %v3065
        %v3120 = vmul.f32 %v2960, %v3064
        %v3121 = vmul.f32 %v3049, %v3065
        %v3122 = vmul.f32 %v2962, %v3064
        %v3123 = vmul.f32 %v3051, %v3065
        %v3124 = vmul.f32 %v2965, %v3064
        %v3125 = vmul.f32 %v3054, %v3065
        %v3126 = vmul.f32 %v2967, %v3064
        %v3127 = vmul.f32 %v3056, %v3065
        %v3128 = vmul.f32 %v2970, %v3064
        %v3129 = vmul.f32 %v3059, %v3065
        %v3130 = vmul.f32 %v2972, %v3064
        %v3131 = vmul.f32 %v3061, %v3065
        %v3133 = vperm.slane %v2772, 0
        %v3134 = vperm.slane %v2772, 1
        %v3137 = vadd.f32 %v3068, %v3133
        %v3138 = vadd.f32 %v3069, %v3134
        %v3139 = vadd.f32 %v3070, %v3133
        %v3140 = vadd.f32 %v3071, %v3134
        %v3141 = vadd.f32 %v3072, %v3133
        %v3142 = vadd.f32 %v3073, %v3134
        %v3143 = vadd.f32 %v3074, %v3133
        %v3144 = vadd.f32 %v3075, %v3134
        %v3145 = vadd.f32 %v3076, %v3133
        %v3146 = vadd.f32 %v3077, %v3134
        %v3147 = vadd.f32 %v3078, %v3133
        %v3148 = vadd.f32 %v3079, %v3134
        %v3149 = vadd.f32 %v3080, %v3133
        %v3150 = vadd.f32 %v3081, %v3134
        %v3151 = vadd.f32 %v3082, %v3133
        %v3152 = vadd.f32 %v3083, %v3134
        %v3153 = vadd.f32 %v3084, %v3133
        %v3154 = vadd.f32 %v3085, %v3134
        %v3155 = vadd.f32 %v3086, %v3133
        %v3156 = vadd.f32 %v3087, %v3134
        %v3157 = vadd.f32 %v3088, %v3133
        %v3158 = vadd.f32 %v3089, %v3134
        %v3159 = vadd.f32 %v3090, %v3133
        %v3160 = vadd.f32 %v3091, %v3134
        %v3161 = vadd.f32 %v3092, %v3133
        %v3162 = vadd.f32 %v3093, %v3134
        %v3163 = vadd.f32 %v3094, %v3133
        %v3164 = vadd.f32 %v3095, %v3134
        %v3165 = vadd.f32 %v3096, %v3133
        %v3166 = vadd.f32 %v3097, %v3134
        %v3167 = vadd.f32 %v3098, %v3133
        %v3168 = vadd.f32 %v3099, %v3134
        %v3169 = vadd.f32 %v3100, %v3133
        %v3170 = vadd.f32 %v3101, %v3134
        %v3171 = vadd.f32 %v3102, %v3133
        %v3172 = vadd.f32 %v3103, %v3134
        %v3173 = vadd.f32 %v3104, %v3133
        %v3174 = vadd.f32 %v3105, %v3134
        %v3175 = vadd.f32 %v3106, %v3133
        %v3176 = vadd.f32 %v3107, %v3134
        %v3177 = vadd.f32 %v3108, %v3133
        %v3178 = vadd.f32 %v3109, %v3134
        %v3179 = vadd.f32 %v3110, %v3133
        %v3180 = vadd.f32 %v3111, %v3134
        %v3181 = vadd.f32 %v3112, %v3133
        %v3182 = vadd.f32 %v3113, %v3134
        %v3183 = vadd.f32 %v3114, %v3133
        %v3184 = vadd.f32 %v3115, %v3134
        %v3185 = vadd.f32 %v3116, %v3133
        %v3186 = vadd.f32 %v3117, %v3134
        %v3187 = vadd.f32 %v3118, %v3133
        %v3188 = vadd.f32 %v3119, %v3134
        %v3189 = vadd.f32 %v3120, %v3133
        %v3190 = vadd.f32 %v3121, %v3134
        %v3191 = vadd.f32 %v3122, %v3133
        %v3192 = vadd.f32 %v3123, %v3134
        %v3193 = vadd.f32 %v3124, %v3133
        %v3194 = vadd.f32 %v3125, %v3134
        %v3195 = vadd.f32 %v3126, %v3133
        %v3196 = vadd.f32 %v3127, %v3134
        %v3197 = vadd.f32 %v3128, %v3133
        %v3198 = vadd.f32 %v3129, %v3134
        %v3199 = vadd.f32 %v3130, %v3133
        %v3200 = vadd.f32 %v3131, %v3134
        %vm3201 = vcmp.ge.f32.partialorder %v3137, 0.0
        %vm3202 = vcmp.ge.f32.partialorder %v3138, 0.0
        %vm3203 = vcmp.ge.f32.partialorder %v3139, 0.0
        %vm3204 = vcmp.ge.f32.partialorder %v3140, 0.0
        %vm3205 = vcmp.ge.f32.partialorder %v3141, 0.0
        %vm3206 = vcmp.ge.f32.partialorder %v3142, 0.0
        %vm3207 = vcmp.ge.f32.partialorder %v3143, 0.0
        %vm3208 = vcmp.ge.f32.partialorder %v3144, 0.0
        %vm3209 = vcmp.ge.f32.partialorder %v3145, 0.0
        %vm3210 = vcmp.ge.f32.partialorder %v3146, 0.0
        %vm3211 = vcmp.ge.f32.partialorder %v3147, 0.0
        %vm3212 = vcmp.ge.f32.partialorder %v3148, 0.0
        %vm3213 = vcmp.ge.f32.partialorder %v3149, 0.0
        %vm3214 = vcmp.ge.f32.partialorder %v3150, 0.0
        %vm3215 = vcmp.ge.f32.partialorder %v3151, 0.0
        %vm3216 = vcmp.ge.f32.partialorder %v3152, 0.0
        %vm3217 = vcmp.ge.f32.partialorder %v3153, 0.0
        %vm3218 = vcmp.ge.f32.partialorder %v3154, 0.0
        %vm3219 = vcmp.ge.f32.partialorder %v3155, 0.0
        %vm3220 = vcmp.ge.f32.partialorder %v3156, 0.0
        %vm3221 = vcmp.ge.f32.partialorder %v3157, 0.0
        %vm3222 = vcmp.ge.f32.partialorder %v3158, 0.0
        %vm3223 = vcmp.ge.f32.partialorder %v3159, 0.0
        %vm3224 = vcmp.ge.f32.partialorder %v3160, 0.0
        %vm3225 = vcmp.ge.f32.partialorder %v3161, 0.0
        %vm3226 = vcmp.ge.f32.partialorder %v3162, 0.0
        %vm3227 = vcmp.ge.f32.partialorder %v3163, 0.0
        %vm3228 = vcmp.ge.f32.partialorder %v3164, 0.0
        %vm3229 = vcmp.ge.f32.partialorder %v3165, 0.0
        %vm3230 = vcmp.ge.f32.partialorder %v3166, 0.0
        %vm3231 = vcmp.ge.f32.partialorder %v3167, 0.0
        %vm3232 = vcmp.ge.f32.partialorder %v3168, 0.0
        %vm3233 = vcmp.ge.f32.partialorder %v3169, 0.0
        %vm3234 = vcmp.ge.f32.partialorder %v3170, 0.0
        %vm3235 = vcmp.ge.f32.partialorder %v3171, 0.0
        %vm3236 = vcmp.ge.f32.partialorder %v3172, 0.0
        %vm3237 = vcmp.ge.f32.partialorder %v3173, 0.0
        %vm3238 = vcmp.ge.f32.partialorder %v3174, 0.0
        %vm3239 = vcmp.ge.f32.partialorder %v3175, 0.0
        %vm3240 = vcmp.ge.f32.partialorder %v3176, 0.0
        %vm3241 = vcmp.ge.f32.partialorder %v3177, 0.0
        %vm3242 = vcmp.ge.f32.partialorder %v3178, 0.0
        %vm3243 = vcmp.ge.f32.partialorder %v3179, 0.0
        %vm3244 = vcmp.ge.f32.partialorder %v3180, 0.0
        %vm3245 = vcmp.ge.f32.partialorder %v3181, 0.0
        %vm3246 = vcmp.ge.f32.partialorder %v3182, 0.0
        %vm3247 = vcmp.ge.f32.partialorder %v3183, 0.0
        %vm3248 = vcmp.ge.f32.partialorder %v3184, 0.0
        %vm3249 = vcmp.ge.f32.partialorder %v3185, 0.0
        %vm3250 = vcmp.ge.f32.partialorder %v3186, 0.0
        %vm3251 = vcmp.ge.f32.partialorder %v3187, 0.0
        %vm3252 = vcmp.ge.f32.partialorder %v3188, 0.0
        %vm3253 = vcmp.ge.f32.partialorder %v3189, 0.0
        %vm3254 = vcmp.ge.f32.partialorder %v3190, 0.0
        %vm3255 = vcmp.ge.f32.partialorder %v3191, 0.0
        %vm3256 = vcmp.ge.f32.partialorder %v3192, 0.0
        %vm3257 = vcmp.ge.f32.partialorder %v3193, 0.0
        %vm3258 = vcmp.ge.f32.partialorder %v3194, 0.0
        %vm3259 = vcmp.ge.f32.partialorder %v3195, 0.0
        %vm3260 = vcmp.ge.f32.partialorder %v3196, 0.0
        %vm3261 = vcmp.ge.f32.partialorder %v3197, 0.0
        %vm3262 = vcmp.ge.f32.partialorder %v3198, 0.0
        %vm3263 = vcmp.ge.f32.partialorder %v3199, 0.0
        %vm3264 = vcmp.ge.f32.partialorder %v3200, 0.0
        %v3265 = vmul.f32 %v3137, 0.2
        %v3266 = vmul.f32 %v3138, 0.2
        %v3267 = vmul.f32 %v3139, 0.2
        %v3268 = vmul.f32 %v3140, 0.2
        %v3269 = vmul.f32 %v3141, 0.2
        %v3270 = vmul.f32 %v3142, 0.2
        %v3271 = vmul.f32 %v3143, 0.2
        %v3272 = vmul.f32 %v3144, 0.2
        %v3273 = vmul.f32 %v3145, 0.2
        %v3274 = vmul.f32 %v3146, 0.2
        %v3275 = vmul.f32 %v3147, 0.2
        %v3276 = vmul.f32 %v3148, 0.2
        %v3277 = vmul.f32 %v3149, 0.2
        %v3278 = vmul.f32 %v3150, 0.2
        %v3279 = vmul.f32 %v3151, 0.2
        %v3280 = vmul.f32 %v3152, 0.2
        %v3281 = vmul.f32 %v3153, 0.2
        %v3282 = vmul.f32 %v3154, 0.2
        %v3283 = vmul.f32 %v3155, 0.2
        %v3284 = vmul.f32 %v3156, 0.2
        %v3285 = vmul.f32 %v3157, 0.2
        %v3286 = vmul.f32 %v3158, 0.2
        %v3287 = vmul.f32 %v3159, 0.2
        %v3288 = vmul.f32 %v3160, 0.2
        %v3289 = vmul.f32 %v3161, 0.2
        %v3290 = vmul.f32 %v3162, 0.2
        %v3291 = vmul.f32 %v3163, 0.2
        %v3292 = vmul.f32 %v3164, 0.2
        %v3293 = vmul.f32 %v3165, 0.2
        %v3294 = vmul.f32 %v3166, 0.2
        %v3295 = vmul.f32 %v3167, 0.2
        %v3296 = vmul.f32 %v3168, 0.2
        %v3297 = vmul.f32 %v3169, 0.2
        %v3298 = vmul.f32 %v3170, 0.2
        %v3299 = vmul.f32 %v3171, 0.2
        %v3300 = vmul.f32 %v3172, 0.2
        %v3301 = vmul.f32 %v3173, 0.2
        %v3302 = vmul.f32 %v3174, 0.2
        %v3303 = vmul.f32 %v3175, 0.2
        %v3304 = vmul.f32 %v3176, 0.2
        %v3305 = vmul.f32 %v3177, 0.2
        %v3306 = vmul.f32 %v3178, 0.2
        %v3307 = vmul.f32 %v3179, 0.2
        %v3308 = vmul.f32 %v3180, 0.2
        %v3309 = vmul.f32 %v3181, 0.2
        %v3310 = vmul.f32 %v3182, 0.2
        %v3311 = vmul.f32 %v3183, 0.2
        %v3312 = vmul.f32 %v3184, 0.2
        %v3313 = vmul.f32 %v3185, 0.2
        %v3314 = vmul.f32 %v3186, 0.2
        %v3315 = vmul.f32 %v3187, 0.2
        %v3316 = vmul.f32 %v3188, 0.2
        %v3317 = vmul.f32 %v3189, 0.2
        %v3318 = vmul.f32 %v3190, 0.2
        %v3319 = vmul.f32 %v3191, 0.2
        %v3320 = vmul.f32 %v3192, 0.2
        %v3321 = vmul.f32 %v3193, 0.2
        %v3322 = vmul.f32 %v3194, 0.2
        %v3323 = vmul.f32 %v3195, 0.2
        %v3324 = vmul.f32 %v3196, 0.2
        %v3325 = vmul.f32 %v3197, 0.2
        %v3326 = vmul.f32 %v3198, 0.2
        %v3327 = vmul.f32 %v3199, 0.2
        %v3328 = vmul.f32 %v3200, 0.2
        %v3329 = vsel %vm3201, %v3137, %v3265
        %v3330 = vsel %vm3202, %v3138, %v3266
        %v3331 = vsel %vm3203, %v3139, %v3267
        %v3332 = vsel %vm3204, %v3140, %v3268
        %v3333 = vsel %vm3205, %v3141, %v3269
        %v3334 = vsel %vm3206, %v3142, %v3270
        %v3335 = vsel %vm3207, %v3143, %v3271
        %v3336 = vsel %vm3208, %v3144, %v3272
        %v3337 = vsel %vm3209, %v3145, %v3273
        %v3338 = vsel %vm3210, %v3146, %v3274
        %v3339 = vsel %vm3211, %v3147, %v3275
        %v3340 = vsel %vm3212, %v3148, %v3276
        %v3341 = vsel %vm3213, %v3149, %v3277
        %v3342 = vsel %vm3214, %v3150, %v3278
        %v3343 = vsel %vm3215, %v3151, %v3279
        %v3344 = vsel %vm3216, %v3152, %v3280
        %v3345 = vsel %vm3217, %v3153, %v3281
        %v3346 = vsel %vm3218, %v3154, %v3282
        %v3347 = vsel %vm3219, %v3155, %v3283
        %v3348 = vsel %vm3220, %v3156, %v3284
        %v3349 = vsel %vm3221, %v3157, %v3285
        %v3350 = vsel %vm3222, %v3158, %v3286
        %v3351 = vsel %vm3223, %v3159, %v3287
        %v3352 = vsel %vm3224, %v3160, %v3288
        %v3353 = vsel %vm3225, %v3161, %v3289
        %v3354 = vsel %vm3226, %v3162, %v3290
        %v3355 = vsel %vm3227, %v3163, %v3291
        %v3356 = vsel %vm3228, %v3164, %v3292
        %v3357 = vsel %vm3229, %v3165, %v3293
        %v3358 = vsel %vm3230, %v3166, %v3294
        %v3359 = vsel %vm3231, %v3167, %v3295
        %v3360 = vsel %vm3232, %v3168, %v3296
        %v3361 = vsel %vm3233, %v3169, %v3297
        %v3362 = vsel %vm3234, %v3170, %v3298
        %v3363 = vsel %vm3235, %v3171, %v3299
        %v3364 = vsel %vm3236, %v3172, %v3300
        %v3365 = vsel %vm3237, %v3173, %v3301
        %v3366 = vsel %vm3238, %v3174, %v3302
        %v3367 = vsel %vm3239, %v3175, %v3303
        %v3368 = vsel %vm3240, %v3176, %v3304
        %v3369 = vsel %vm3241, %v3177, %v3305
        %v3370 = vsel %vm3242, %v3178, %v3306
        %v3371 = vsel %vm3243, %v3179, %v3307
        %v3372 = vsel %vm3244, %v3180, %v3308
        %v3373 = vsel %vm3245, %v3181, %v3309
        %v3374 = vsel %vm3246, %v3182, %v3310
        %v3375 = vsel %vm3247, %v3183, %v3311
        %v3376 = vsel %vm3248, %v3184, %v3312
        %v3377 = vsel %vm3249, %v3185, %v3313
        %v3378 = vsel %vm3250, %v3186, %v3314
        %v3379 = vsel %vm3251, %v3187, %v3315
        %v3380 = vsel %vm3252, %v3188, %v3316
        %v3381 = vsel %vm3253, %v3189, %v3317
        %v3382 = vsel %vm3254, %v3190, %v3318
        %v3383 = vsel %vm3255, %v3191, %v3319
        %v3384 = vsel %vm3256, %v3192, %v3320
        %v3385 = vsel %vm3257, %v3193, %v3321
        %v3386 = vsel %vm3258, %v3194, %v3322
        %v3387 = vsel %vm3259, %v3195, %v3323
        %v3388 = vsel %vm3260, %v3196, %v3324
        %v3389 = vsel %vm3261, %v3197, %v3325
        %v3390 = vsel %vm3262, %v3198, %v3326
        %v3391 = vsel %vm3263, %v3199, %v3327
        %v3392 = vsel %vm3264, %v3200, %v3328
        %v3393 = vmax.f32 %v3329, %v3333
        %v3394 = vmax.f32 %v3331, %v3335
        %v3395 = vmax.f32 %v3393, %v3337
        %v3396 = vmax.f32 %v3394, %v3339
        %v3397 = vmax.f32 %v3395, %v3341
        %v3398 = vmax.f32 %v3396, %v3343
        %v3399 = vmax.f32 %v3397, %v3345
        %v3400 = vmax.f32 %v3398, %v3347
        %v3401 = vmax.f32 %v3399, %v3349
        %v3402 = vmax.f32 %v3400, %v3351
        %v3403 = vmax.f32 %v3401, %v3353
        %v3404 = vmax.f32 %v3402, %v3355
        %v3405 = vmax.f32 %v3403, %v3357
        %v3406 = vmax.f32 %v3404, %v3359
        %v3407 = vmax.f32 %v3405, %v3361
        %v3408 = vmax.f32 %v3406, %v3363
        %v3409 = vmax.f32 %v3407, %v3365
        %v3410 = vmax.f32 %v3408, %v3367
        %v3411 = vmax.f32 %v3409, %v3369
        %v3412 = vmax.f32 %v3410, %v3371
        %v3413 = vmax.f32 %v3411, %v3373
        %v3414 = vmax.f32 %v3412, %v3375
        %v3415 = vmax.f32 %v3413, %v3377
        %v3416 = vmax.f32 %v3414, %v3379
        %v3417 = vmax.f32 %v3415, %v3381
        %v3418 = vmax.f32 %v3416, %v3383
        %v3419 = vmax.f32 %v3417, %v3385
        %v3420 = vmax.f32 %v3418, %v3387
        %v3421 = vmax.f32 %v3419, %v3389
        %v3422 = vmax.f32 %v3420, %v3391
        %v3423 = vmax.f32 %v3421, %v3422
        %v3424 = vmax.f32 %v3330, %v3334
        %v3425 = vmax.f32 %v3332, %v3336
        %v3426 = vmax.f32 %v3424, %v3338
        %v3427 = vmax.f32 %v3425, %v3340
        %v3428 = vmax.f32 %v3426, %v3342
        %v3429 = vmax.f32 %v3427, %v3344
        %v3430 = vmax.f32 %v3428, %v3346
        %v3431 = vmax.f32 %v3429, %v3348
        %v3432 = vmax.f32 %v3430, %v3350
        %v3433 = vmax.f32 %v3431, %v3352
        %v3434 = vmax.f32 %v3432, %v3354
        %v3435 = vmax.f32 %v3433, %v3356
        %v3436 = vmax.f32 %v3434, %v3358
        %v3437 = vmax.f32 %v3435, %v3360
        %v3438 = vmax.f32 %v3436, %v3362
        %v3439 = vmax.f32 %v3437, %v3364
        %v3440 = vmax.f32 %v3438, %v3366
        %v3441 = vmax.f32 %v3439, %v3368
        %v3442 = vmax.f32 %v3440, %v3370
        %v3443 = vmax.f32 %v3441, %v3372
        %v3444 = vmax.f32 %v3442, %v3374
        %v3445 = vmax.f32 %v3443, %v3376
        %v3446 = vmax.f32 %v3444, %v3378
        %v3447 = vmax.f32 %v3445, %v3380
        %v3448 = vmax.f32 %v3446, %v3382
        %v3449 = vmax.f32 %v3447, %v3384
        %v3450 = vmax.f32 %v3448, %v3386
        %v3451 = vmax.f32 %v3449, %v3388
        %v3452 = vmax.f32 %v3450, %v3390
        %v3453 = vmax.f32 %v3451, %v3392
        %v3454 = vmax.f32 %v3452, %v3453
        %p3455 = scmp.eq.s32.totalorder %s49, 0
        // Predicated region
        $region169: #{tpu_custom_call.1} parent=115 // pred_check
          %p3456 = pneg %p3455
        $region170: #{tpu_custom_call.1} parent=115 // pred_check_branch
          %3458 = sbr.rel (%p3456) target = $region172
        $region171: #{tpu_custom_call.1} parent=115 // pred_region
          %3459 = vst [vmem:[#allocation2] sm:$0xff] %v3423
          %3460 = vst [vmem:[#allocation2 + $0x8] sm:$0xff] %v3454
        $region172: #{tpu_custom_call.1} parent=115 // pred_fallthru
          _
        %p3461 = scmp.gt.s32.totalorder %s49, 0
        // Predicated region
        $region173: #{tpu_custom_call.1} parent=115 // pred_check
          %p3462 = pneg %p3461
        $region174: #{tpu_custom_call.1} parent=115 // pred_check_branch
          %3464 = sbr.rel (%p3462) target = $region176
        $region175: #{tpu_custom_call.1} parent=115 // pred_region
          %v3465 = vld [vmem:[#allocation2] sm:$0xff]
          %v3466 = vld [vmem:[#allocation2 + $0x8] sm:$0xff]
          %v3467 = vmax.f32 %v3465, %v3423
          %v3468 = vmax.f32 %v3466, %v3454
          %3469 = vst [vmem:[#allocation2] sm:$0xff] %v3467
          %3470 = vst [vmem:[#allocation2 + $0x8] sm:$0xff] %v3468
        $region176: #{tpu_custom_call.1} parent=115 // pred_fallthru
          _
        // Predicated region
        $region177: #{tpu_custom_call.1} parent=115 // pred_check
          %p3471 = pneg %p3455
        $region178: #{tpu_custom_call.1} parent=115 // pred_check_branch
          %3473 = sbr.rel (%p3471) target = $region180
        $region179: #{tpu_custom_call.1} parent=115 // pred_region
          %v3474 = vld [vmem:[#allocation2] sm:$0xff]
          %v3475 = vld [vmem:[#allocation2 + $0x8] sm:$0xff]
          %v3476 = vrot.slane %v3474, 4
          %v3477 = vmax.f32 %v3474, %v3476
          %v3478 = vrot.slane %v3477, 2
          %v3479 = vmax.f32 %v3477, %v3478
          %v3480 = vrot.slane %v3479, 1
          %v3481 = vmax.f32 %v3479, %v3480
          %v3482 = vrot.slane %v3475, 4
          %v3483 = vmax.f32 %v3475, %v3482
          %v3484 = vrot.slane %v3483, 2
          %v3485 = vmax.f32 %v3483, %v3484
          %v3486 = vrot.slane %v3485, 1
          %v3487 = vmax.f32 %v3485, %v3486
          %v3488 = vpack.c.bf16 %v3481, %v3481
          %v3489 = vpack.c.bf16 %v3487, %v3487
          %v3490 = vld [vmem:[%s16] sm:$0xff]
          %v3491 = vld [vmem:[%s16 + $0x8] sm:$0xff]
          %v3492 = vld [vmem:[%s16 + $0x10] sm:$0xff]
          %v3493 = vld [vmem:[%s16 + $0x18] sm:$0xff]
          %v3494 = vld [vmem:[%s16 + $0x20] sm:$0xff]
          %v3495 = vld [vmem:[%s16 + $0x28] sm:$0xff]
          %v3496 = vld [vmem:[%s16 + $0x30] sm:$0xff]
          %v3497 = vld [vmem:[%s16 + $0x38] sm:$0xff]
          %v3498 = vld [vmem:[%s16 + $0x40] sm:$0xff]
          %v3499 = vld [vmem:[%s16 + $0x48] sm:$0xff]
          %v3500 = vld [vmem:[%s16 + $0x50] sm:$0xff]
          %v3501 = vld [vmem:[%s16 + $0x58] sm:$0xff]
          %v3502 = vld [vmem:[%s16 + $0x60] sm:$0xff]
          %v3503 = vld [vmem:[%s16 + $0x68] sm:$0xff]
          %v3504 = vld [vmem:[%s16 + $0x70] sm:$0xff]
          %v3505 = vld [vmem:[%s16 + $0x78] sm:$0xff]
          %v3506 = vld [vmem:[%s16 + $0x80] sm:$0xff]
          %v3507 = vld [vmem:[%s16 + $0x88] sm:$0xff]
          %v3508 = vld [vmem:[%s16 + $0x90] sm:$0xff]
          %v3509 = vld [vmem:[%s16 + $0x98] sm:$0xff]
          %v3510 = vld [vmem:[%s16 + $0xa0] sm:$0xff]
          %v3511 = vld [vmem:[%s16 + $0xa8] sm:$0xff]
          %v3512 = vld [vmem:[%s16 + $0xb0] sm:$0xff]
          %v3513 = vld [vmem:[%s16 + $0xb8] sm:$0xff]
          %v3514 = vld [vmem:[%s16 + $0xc0] sm:$0xff]
          %v3515 = vld [vmem:[%s16 + $0xc8] sm:$0xff]
          %v3516 = vld [vmem:[%s16 + $0xd0] sm:$0xff]
          %v3517 = vld [vmem:[%s16 + $0xd8] sm:$0xff]
          %v3518 = vld [vmem:[%s16 + $0xe0] sm:$0xff]
          %v3519 = vld [vmem:[%s16 + $0xe8] sm:$0xff]
          %v3520 = vld [vmem:[%s16 + $0xf0] sm:$0xff]
          %v3521 = vld [vmem:[%s16 + $0xf8] sm:$0xff]
          %v3522 = vld [vmem:[%s16 + $0x100] sm:$0xff]
          %v3523 = vld [vmem:[%s16 + $0x108] sm:$0xff]
          %v3524 = vld [vmem:[%s16 + $0x110] sm:$0xff]
          %v3525 = vld [vmem:[%s16 + $0x118] sm:$0xff]
          %v3526 = vld [vmem:[%s16 + $0x120] sm:$0xff]
          %v3527 = vld [vmem:[%s16 + $0x128] sm:$0xff]
          %v3528 = vld [vmem:[%s16 + $0x130] sm:$0xff]
          %v3529 = vld [vmem:[%s16 + $0x138] sm:$0xff]
          %v3530 = vld [vmem:[%s16 + $0x140] sm:$0xff]
          %v3531 = vld [vmem:[%s16 + $0x148] sm:$0xff]
          %v3532 = vld [vmem:[%s16 + $0x150] sm:$0xff]
          %v3533 = vld [vmem:[%s16 + $0x158] sm:$0xff]
          %v3534 = vld [vmem:[%s16 + $0x160] sm:$0xff]
          %v3535 = vld [vmem:[%s16 + $0x168] sm:$0xff]
          %v3536 = vld [vmem:[%s16 + $0x170] sm:$0xff]
          %v3537 = vld [vmem:[%s16 + $0x178] sm:$0xff]
          %v3538 = vld [vmem:[%s16 + $0x180] sm:$0xff]
          %v3539 = vld [vmem:[%s16 + $0x188] sm:$0xff]
          %v3540 = vld [vmem:[%s16 + $0x190] sm:$0xff]
          %v3541 = vld [vmem:[%s16 + $0x198] sm:$0xff]
          %v3542 = vld [vmem:[%s16 + $0x1a0] sm:$0xff]
          %v3543 = vld [vmem:[%s16 + $0x1a8] sm:$0xff]
          %v3544 = vld [vmem:[%s16 + $0x1b0] sm:$0xff]
          %v3545 = vld [vmem:[%s16 + $0x1b8] sm:$0xff]
          %v3546 = vld [vmem:[%s16 + $0x1c0] sm:$0xff]
          %v3547 = vld [vmem:[%s16 + $0x1c8] sm:$0xff]
          %v3548 = vld [vmem:[%s16 + $0x1d0] sm:$0xff]
          %v3549 = vld [vmem:[%s16 + $0x1d8] sm:$0xff]
          %v3550 = vld [vmem:[%s16 + $0x1e0] sm:$0xff]
          %v3551 = vld [vmem:[%s16 + $0x1e8] sm:$0xff]
          %v3552 = vld [vmem:[%s16 + $0x1f0] sm:$0xff]
          %v3553 = vld [vmem:[%s16 + $0x1f8] sm:$0xff]
          %v3618 = vunpack.c.l.b16 %v3490
          %v3619 = vunpack.c.h.b16 %v3490
          %v3620 = vunpack.c.l.b16 %v3491
          %v3621 = vunpack.c.h.b16 %v3491
          %v3622 = vunpack.c.l.b16 %v3492
          %v3623 = vunpack.c.h.b16 %v3492
          %v3624 = vunpack.c.l.b16 %v3493
          %v3625 = vunpack.c.h.b16 %v3493
          %v3626 = vunpack.c.l.b16 %v3494
          %v3627 = vunpack.c.h.b16 %v3494
          %v3628 = vunpack.c.l.b16 %v3495
          %v3629 = vunpack.c.h.b16 %v3495
          %v3630 = vunpack.c.l.b16 %v3496
          %v3631 = vunpack.c.h.b16 %v3496
          %v3632 = vunpack.c.l.b16 %v3497
          %v3633 = vunpack.c.h.b16 %v3497
          %v3634 = vunpack.c.l.b16 %v3498
          %v3635 = vunpack.c.h.b16 %v3498
          %v3636 = vunpack.c.l.b16 %v3499
          %v3637 = vunpack.c.h.b16 %v3499
          %v3638 = vunpack.c.l.b16 %v3500
          %v3639 = vunpack.c.h.b16 %v3500
          %v3640 = vunpack.c.l.b16 %v3501
          %v3641 = vunpack.c.h.b16 %v3501
          %v3642 = vunpack.c.l.b16 %v3502
          %v3643 = vunpack.c.h.b16 %v3502
          %v3644 = vunpack.c.l.b16 %v3503
          %v3645 = vunpack.c.h.b16 %v3503
          %v3646 = vunpack.c.l.b16 %v3504
          %v3647 = vunpack.c.h.b16 %v3504
          %v3648 = vunpack.c.l.b16 %v3505
          %v3649 = vunpack.c.h.b16 %v3505
          %v3650 = vunpack.c.l.b16 %v3506
          %v3651 = vunpack.c.h.b16 %v3506
          %v3652 = vunpack.c.l.b16 %v3507
          %v3653 = vunpack.c.h.b16 %v3507
          %v3654 = vunpack.c.l.b16 %v3508
          %v3655 = vunpack.c.h.b16 %v3508
          %v3656 = vunpack.c.l.b16 %v3509
          %v3657 = vunpack.c.h.b16 %v3509
          %v3658 = vunpack.c.l.b16 %v3510
          %v3659 = vunpack.c.h.b16 %v3510
          %v3660 = vunpack.c.l.b16 %v3511
          %v3661 = vunpack.c.h.b16 %v3511
          %v3662 = vunpack.c.l.b16 %v3512
          %v3663 = vunpack.c.h.b16 %v3512
          %v3664 = vunpack.c.l.b16 %v3513
          %v3665 = vunpack.c.h.b16 %v3513
          %v3666 = vunpack.c.l.b16 %v3514
          %v3667 = vunpack.c.h.b16 %v3514
          %v3668 = vunpack.c.l.b16 %v3515
          %v3669 = vunpack.c.h.b16 %v3515
          %v3670 = vunpack.c.l.b16 %v3516
          %v3671 = vunpack.c.h.b16 %v3516
          %v3672 = vunpack.c.l.b16 %v3517
          %v3673 = vunpack.c.h.b16 %v3517
          %v3674 = vunpack.c.l.b16 %v3518
          %v3675 = vunpack.c.h.b16 %v3518
          %v3676 = vunpack.c.l.b16 %v3519
          %v3677 = vunpack.c.h.b16 %v3519
          %v3678 = vunpack.c.l.b16 %v3520
          %v3679 = vunpack.c.h.b16 %v3520
          %v3680 = vunpack.c.l.b16 %v3521
          %v3681 = vunpack.c.h.b16 %v3521
          %v3682 = vunpack.c.l.b16 %v3522
          %v3683 = vunpack.c.h.b16 %v3522
          %v3684 = vunpack.c.l.b16 %v3523
          %v3685 = vunpack.c.h.b16 %v3523
          %v3686 = vunpack.c.l.b16 %v3524
          %v3687 = vunpack.c.h.b16 %v3524
          %v3688 = vunpack.c.l.b16 %v3525
          %v3689 = vunpack.c.h.b16 %v3525
          %v3690 = vunpack.c.l.b16 %v3526
          %v3691 = vunpack.c.h.b16 %v3526
          %v3692 = vunpack.c.l.b16 %v3527
          %v3693 = vunpack.c.h.b16 %v3527
          %v3694 = vunpack.c.l.b16 %v3528
          %v3695 = vunpack.c.h.b16 %v3528
          %v3696 = vunpack.c.l.b16 %v3529
          %v3697 = vunpack.c.h.b16 %v3529
          %v3698 = vunpack.c.l.b16 %v3530
          %v3699 = vunpack.c.h.b16 %v3530
          %v3700 = vunpack.c.l.b16 %v3531
          %v3701 = vunpack.c.h.b16 %v3531
          %v3702 = vunpack.c.l.b16 %v3532
          %v3703 = vunpack.c.h.b16 %v3532
          %v3704 = vunpack.c.l.b16 %v3533
          %v3705 = vunpack.c.h.b16 %v3533
          %v3706 = vunpack.c.l.b16 %v3534
          %v3707 = vunpack.c.h.b16 %v3534
          %v3708 = vunpack.c.l.b16 %v3535
          %v3709 = vunpack.c.h.b16 %v3535
          %v3710 = vunpack.c.l.b16 %v3536
          %v3711 = vunpack.c.h.b16 %v3536
          %v3712 = vunpack.c.l.b16 %v3537
          %v3713 = vunpack.c.h.b16 %v3537
          %v3714 = vunpack.c.l.b16 %v3538
          %v3715 = vunpack.c.h.b16 %v3538
          %v3716 = vunpack.c.l.b16 %v3539
          %v3717 = vunpack.c.h.b16 %v3539
          %v3718 = vunpack.c.l.b16 %v3540
          %v3719 = vunpack.c.h.b16 %v3540
          %v3720 = vunpack.c.l.b16 %v3541
          %v3721 = vunpack.c.h.b16 %v3541
          %v3722 = vunpack.c.l.b16 %v3542
          %v3723 = vunpack.c.h.b16 %v3542
          %v3724 = vunpack.c.l.b16 %v3543
          %v3725 = vunpack.c.h.b16 %v3543
          %v3726 = vunpack.c.l.b16 %v3544
          %v3727 = vunpack.c.h.b16 %v3544
          %v3728 = vunpack.c.l.b16 %v3545
          %v3729 = vunpack.c.h.b16 %v3545
          %v3730 = vunpack.c.l.b16 %v3546
          %v3731 = vunpack.c.h.b16 %v3546
          %v3732 = vunpack.c.l.b16 %v3547
          %v3733 = vunpack.c.h.b16 %v3547
          %v3734 = vunpack.c.l.b16 %v3548
          %v3735 = vunpack.c.h.b16 %v3548
          %v3736 = vunpack.c.l.b16 %v3549
          %v3737 = vunpack.c.h.b16 %v3549
          %v3738 = vunpack.c.l.b16 %v3550
          %v3739 = vunpack.c.h.b16 %v3550
          %v3740 = vunpack.c.l.b16 %v3551
          %v3741 = vunpack.c.h.b16 %v3551
          %v3742 = vunpack.c.l.b16 %v3552
          %v3743 = vunpack.c.h.b16 %v3552
          %v3744 = vunpack.c.l.b16 %v3553
          %v3745 = vunpack.c.h.b16 %v3553
          %v3746 = vpack.c.b16 %v3622, %v3618
          %v3747 = vpack.c.b16 %v3623, %v3619
          %v3748 = vpack.c.b16 %v3624, %v3620
          %v3749 = vpack.c.b16 %v3625, %v3621
          %v3750 = vpack.c.b16 %v3630, %v3626
          %v3751 = vpack.c.b16 %v3631, %v3627
          %v3752 = vpack.c.b16 %v3632, %v3628
          %v3753 = vpack.c.b16 %v3633, %v3629
          %v3754 = vpack.c.b16 %v3638, %v3634
          %v3755 = vpack.c.b16 %v3639, %v3635
          %v3756 = vpack.c.b16 %v3640, %v3636
          %v3757 = vpack.c.b16 %v3641, %v3637
          %v3758 = vpack.c.b16 %v3646, %v3642
          %v3759 = vpack.c.b16 %v3647, %v3643
          %v3760 = vpack.c.b16 %v3648, %v3644
          %v3761 = vpack.c.b16 %v3649, %v3645
          %v3762 = vpack.c.b16 %v3654, %v3650
          %v3763 = vpack.c.b16 %v3655, %v3651
          %v3764 = vpack.c.b16 %v3656, %v3652
          %v3765 = vpack.c.b16 %v3657, %v3653
          %v3766 = vpack.c.b16 %v3662, %v3658
          %v3767 = vpack.c.b16 %v3663, %v3659
          %v3768 = vpack.c.b16 %v3664, %v3660
          %v3769 = vpack.c.b16 %v3665, %v3661
          %v3770 = vpack.c.b16 %v3670, %v3666
          %v3771 = vpack.c.b16 %v3671, %v3667
          %v3772 = vpack.c.b16 %v3672, %v3668
          %v3773 = vpack.c.b16 %v3673, %v3669
          %v3774 = vpack.c.b16 %v3678, %v3674
          %v3775 = vpack.c.b16 %v3679, %v3675
          %v3776 = vpack.c.b16 %v3680, %v3676
          %v3777 = vpack.c.b16 %v3681, %v3677
          %v3778 = vpack.c.b16 %v3686, %v3682
          %v3779 = vpack.c.b16 %v3687, %v3683
          %v3780 = vpack.c.b16 %v3688, %v3684
          %v3781 = vpack.c.b16 %v3689, %v3685
          %v3782 = vpack.c.b16 %v3694, %v3690
          %v3783 = vpack.c.b16 %v3695, %v3691
          %v3784 = vpack.c.b16 %v3696, %v3692
          %v3785 = vpack.c.b16 %v3697, %v3693
          %v3786 = vpack.c.b16 %v3702, %v3698
          %v3787 = vpack.c.b16 %v3703, %v3699
          %v3788 = vpack.c.b16 %v3704, %v3700
          %v3789 = vpack.c.b16 %v3705, %v3701
          %v3790 = vpack.c.b16 %v3710, %v3706
          %v3791 = vpack.c.b16 %v3711, %v3707
          %v3792 = vpack.c.b16 %v3712, %v3708
          %v3793 = vpack.c.b16 %v3713, %v3709
          %v3794 = vpack.c.b16 %v3718, %v3714
          %v3795 = vpack.c.b16 %v3719, %v3715
          %v3796 = vpack.c.b16 %v3720, %v3716
          %v3797 = vpack.c.b16 %v3721, %v3717
          %v3798 = vpack.c.b16 %v3726, %v3722
          %v3799 = vpack.c.b16 %v3727, %v3723
          %v3800 = vpack.c.b16 %v3728, %v3724
          %v3801 = vpack.c.b16 %v3729, %v3725
          %v3802 = vpack.c.b16 %v3734, %v3730
          %v3803 = vpack.c.b16 %v3735, %v3731
          %v3804 = vpack.c.b16 %v3736, %v3732
          %v3805 = vpack.c.b16 %v3737, %v3733
          %v3806 = vpack.c.b16 %v3742, %v3738
          %v3807 = vpack.c.b16 %v3743, %v3739
          %v3808 = vpack.c.b16 %v3744, %v3740
          %v3809 = vpack.c.b16 %v3745, %v3741
          %3874 = vmatpush.bf16.msra.mxu0 %v3774
          %3875 = vmatpush.bf16.msra.mxu0 %v3770
          %3876 = vmatpush.bf16.msra.mxu0 %v3766
          %3877 = vmatpush.bf16.msra.mxu0 %v3762
          %3878 = vmatpush.bf16.msra.mxu0 %v3758
          %3879 = vmatpush.bf16.msra.mxu0 %v3754
          %3880 = vmatpush.bf16.msra.mxu0 %v3750
          %3881 = vmatpush.bf16.msra.mxu0 %v3746
          %3882 = vmatmul.bf16.gmra.mxu0 %v3488
          %v3883 = vpop.f32.mrf.mxu0
          %v3884 = vadd.f32 0.0, %v3883
          %v3885 = vpop.f32.mrf.mxu0
          %3886 = vdwg.mxu0
          %3887 = vmatpush.bf16.msra.mxu0 %v3806
          %3888 = vmatpush.bf16.msra.mxu0 %v3802
          %3889 = vmatpush.bf16.msra.mxu0 %v3798
          %3890 = vmatpush.bf16.msra.mxu0 %v3794
          %3891 = vmatpush.bf16.msra.mxu0 %v3790
          %3892 = vmatpush.bf16.msra.mxu0 %v3786
          %3893 = vmatpush.bf16.msra.mxu0 %v3782
          %3894 = vmatpush.bf16.msra.mxu0 %v3778
          %3895 = vmatmul.bf16.gmra.mxu0 %v3489
          %v3896 = vpop.f32.mrf.mxu0
          %v3897 = vadd.f32 %v3884, %v3896
          %v3898 = vpop.f32.mrf.mxu0
          %3899 = vdwg.mxu0
          %3900 = vmatpush.bf16.msra.mxu0 %v3775
          %3901 = vmatpush.bf16.msra.mxu0 %v3771
          %3902 = vmatpush.bf16.msra.mxu0 %v3767
          %3903 = vmatpush.bf16.msra.mxu0 %v3763
          %3904 = vmatpush.bf16.msra.mxu0 %v3759
          %3905 = vmatpush.bf16.msra.mxu0 %v3755
          %3906 = vmatpush.bf16.msra.mxu0 %v3751
          %3907 = vmatpush.bf16.msra.mxu0 %v3747
          %3908 = vmatmul.bf16.gmra.mxu0 %v3488
          %v3909 = vpop.f32.mrf.mxu0
          %v3910 = vadd.f32 0.0, %v3909
          %v3911 = vpop.f32.mrf.mxu0
          %3912 = vdwg.mxu0
          %3913 = vmatpush.bf16.msra.mxu0 %v3807
          %3914 = vmatpush.bf16.msra.mxu0 %v3803
          %3915 = vmatpush.bf16.msra.mxu0 %v3799
          %3916 = vmatpush.bf16.msra.mxu0 %v3795
          %3917 = vmatpush.bf16.msra.mxu0 %v3791
          %3918 = vmatpush.bf16.msra.mxu0 %v3787
          %3919 = vmatpush.bf16.msra.mxu0 %v3783
          %3920 = vmatpush.bf16.msra.mxu0 %v3779
          %3921 = vmatmul.bf16.gmra.mxu0 %v3489
          %v3922 = vpop.f32.mrf.mxu0
          %v3923 = vadd.f32 %v3910, %v3922
          %v3924 = vpop.f32.mrf.mxu0
          %3925 = vdwg.mxu0
          %3926 = vmatpush.bf16.msra.mxu0 %v3776
          %3927 = vmatpush.bf16.msra.mxu0 %v3772
          %3928 = vmatpush.bf16.msra.mxu0 %v3768
          %3929 = vmatpush.bf16.msra.mxu0 %v3764
          %3930 = vmatpush.bf16.msra.mxu0 %v3760
          %3931 = vmatpush.bf16.msra.mxu0 %v3756
          %3932 = vmatpush.bf16.msra.mxu0 %v3752
          %3933 = vmatpush.bf16.msra.mxu0 %v3748
          %3934 = vmatmul.bf16.gmra.mxu0 %v3488
          %v3935 = vpop.f32.mrf.mxu0
          %v3936 = vadd.f32 0.0, %v3935
          %v3937 = vpop.f32.mrf.mxu0
          %3938 = vdwg.mxu0
          %3939 = vmatpush.bf16.msra.mxu0 %v3808
          %3940 = vmatpush.bf16.msra.mxu0 %v3804
          %3941 = vmatpush.bf16.msra.mxu0 %v3800
          %3942 = vmatpush.bf16.msra.mxu0 %v3796
          %3943 = vmatpush.bf16.msra.mxu0 %v3792
          %3944 = vmatpush.bf16.msra.mxu0 %v3788
          %3945 = vmatpush.bf16.msra.mxu0 %v3784
          %3946 = vmatpush.bf16.msra.mxu0 %v3780
          %3947 = vmatmul.bf16.gmra.mxu0 %v3489
          %v3948 = vpop.f32.mrf.mxu0
          %v3949 = vadd.f32 %v3936, %v3948
          %v3950 = vpop.f32.mrf.mxu0
          %3951 = vdwg.mxu0
          %3952 = vmatpush.bf16.msra.mxu0 %v3777
          %3953 = vmatpush.bf16.msra.mxu0 %v3773
          %3954 = vmatpush.bf16.msra.mxu0 %v3769
          %3955 = vmatpush.bf16.msra.mxu0 %v3765
          %3956 = vmatpush.bf16.msra.mxu0 %v3761
          %3957 = vmatpush.bf16.msra.mxu0 %v3757
          %3958 = vmatpush.bf16.msra.mxu0 %v3753
          %3959 = vmatpush.bf16.msra.mxu0 %v3749
          %3960 = vmatmul.bf16.gmra.mxu0 %v3488
          %v3961 = vpop.f32.mrf.mxu0
          %v3962 = vadd.f32 0.0, %v3961
          %v3963 = vpop.f32.mrf.mxu0
          %3964 = vdwg.mxu0
          %3965 = vmatpush.bf16.msra.mxu0 %v3809
          %3966 = vmatpush.bf16.msra.mxu0 %v3805
          %3967 = vmatpush.bf16.msra.mxu0 %v3801
          %3968 = vmatpush.bf16.msra.mxu0 %v3797
          %3969 = vmatpush.bf16.msra.mxu0 %v3793
          %3970 = vmatpush.bf16.msra.mxu0 %v3789
          %3971 = vmatpush.bf16.msra.mxu0 %v3785
          %3972 = vmatpush.bf16.msra.mxu0 %v3781
          %3973 = vmatmul.bf16.gmra.mxu0 %v3489
          %v3974 = vpop.f32.mrf.mxu0
          %v3975 = vadd.f32 %v3962, %v3974
          %v3976 = vpop.f32.mrf.mxu0
          %3977 = vdwg.mxu0
          %v3978 = vld [vmem:[%s17] sm:$0xf]
          %v3980 = vperm.slane %v3978, 0
          %v3981 = vperm.slane %v3978, 1
          %v3982 = vperm.slane %v3978, 2
          %v3983 = vperm.slane %v3978, 3
          %v3988 = vmul.f32 %v3897, %v3980
          %v3989 = vmul.f32 %v3923, %v3981
          %v3990 = vmul.f32 %v3949, %v3982
          %v3991 = vmul.f32 %v3975, %v3983
          %v3992 = vld [vmem:[%s18] sm:$0xf]
          %v3994 = vperm.slane %v3992, 0
          %v3995 = vperm.slane %v3992, 1
          %v3996 = vperm.slane %v3992, 2
          %v3997 = vperm.slane %v3992, 3
          %v4002 = vadd.f32 %v3988, %v3994
          %v4003 = vadd.f32 %v3989, %v3995
          %v4004 = vadd.f32 %v3990, %v3996
          %v4005 = vadd.f32 %v3991, %v3997
          %vm4006 = vcmp.ge.f32.partialorder %v4002, 0.0
          %vm4007 = vcmp.ge.f32.partialorder %v4003, 0.0
          %vm4008 = vcmp.ge.f32.partialorder %v4004, 0.0
          %vm4009 = vcmp.ge.f32.partialorder %v4005, 0.0
          %v4010 = vmul.f32 %v4002, 0.2
          %v4011 = vmul.f32 %v4003, 0.2
          %v4012 = vmul.f32 %v4004, 0.2
          %v4013 = vmul.f32 %v4005, 0.2
          %v4014 = vsel %vm4006, %v4002, %v4010
          %v4015 = vsel %vm4007, %v4003, %v4011
          %v4016 = vsel %vm4008, %v4004, %v4012
          %v4017 = vsel %vm4009, %v4005, %v4013
          %v4018 = vpack.c.bf16 %v4014, %v4014
          %v4019 = vpack.c.bf16 %v4015, %v4015
          %v4020 = vpack.c.bf16 %v4016, %v4016
          %v4021 = vpack.c.bf16 %v4017, %v4017
          %v4022 = vld [vmem:[#allocation23] sm:$0xff]
          %v4023 = vld [vmem:[#allocation23 + $0x8] sm:$0xff]
          %v4024 = vld [vmem:[#allocation23 + $0x10] sm:$0xff]
          %v4025 = vld [vmem:[#allocation23 + $0x18] sm:$0xff]
          %v4026 = vld [vmem:[#allocation23 + $0x20] sm:$0xff]
          %v4027 = vld [vmem:[#allocation23 + $0x28] sm:$0xff]
          %v4028 = vld [vmem:[#allocation23 + $0x30] sm:$0xff]
          %v4029 = vld [vmem:[#allocation23 + $0x38] sm:$0xff]
          %v4030 = vld [vmem:[#allocation23 + $0x40] sm:$0xff]
          %v4031 = vld [vmem:[#allocation23 + $0x48] sm:$0xff]
          %v4032 = vld [vmem:[#allocation23 + $0x50] sm:$0xff]
          %v4033 = vld [vmem:[#allocation23 + $0x58] sm:$0xff]
          %v4034 = vld [vmem:[#allocation23 + $0x60] sm:$0xff]
          %v4035 = vld [vmem:[#allocation23 + $0x68] sm:$0xff]
          %v4036 = vld [vmem:[#allocation23 + $0x70] sm:$0xff]
          %v4037 = vld [vmem:[#allocation23 + $0x78] sm:$0xff]
          %v4038 = vld [vmem:[#allocation23 + $0x80] sm:$0xff]
          %v4039 = vld [vmem:[#allocation23 + $0x88] sm:$0xff]
          %v4040 = vld [vmem:[#allocation23 + $0x90] sm:$0xff]
          %v4041 = vld [vmem:[#allocation23 + $0x98] sm:$0xff]
          %v4042 = vld [vmem:[#allocation23 + $0xa0] sm:$0xff]
          %v4043 = vld [vmem:[#allocation23 + $0xa8] sm:$0xff]
          %v4044 = vld [vmem:[#allocation23 + $0xb0] sm:$0xff]
          %v4045 = vld [vmem:[#allocation23 + $0xb8] sm:$0xff]
          %v4046 = vld [vmem:[#allocation23 + $0xc0] sm:$0xff]
          %v4047 = vld [vmem:[#allocation23 + $0xc8] sm:$0xff]
          %v4048 = vld [vmem:[#allocation23 + $0xd0] sm:$0xff]
          %v4049 = vld [vmem:[#allocation23 + $0xd8] sm:$0xff]
          %v4050 = vld [vmem:[#allocation23 + $0xe0] sm:$0xff]
          %v4051 = vld [vmem:[#allocation23 + $0xe8] sm:$0xff]
          %v4052 = vld [vmem:[#allocation23 + $0xf0] sm:$0xff]
          %v4053 = vld [vmem:[#allocation23 + $0xf8] sm:$0xff]
          %v4054 = vld [vmem:[#allocation23 + $0x100] sm:$0xff]
          %v4055 = vld [vmem:[#allocation23 + $0x108] sm:$0xff]
          %v4056 = vld [vmem:[#allocation23 + $0x110] sm:$0xff]
          %v4057 = vld [vmem:[#allocation23 + $0x118] sm:$0xff]
          %v4058 = vld [vmem:[#allocation23 + $0x120] sm:$0xff]
          %v4059 = vld [vmem:[#allocation23 + $0x128] sm:$0xff]
          %v4060 = vld [vmem:[#allocation23 + $0x130] sm:$0xff]
          %v4061 = vld [vmem:[#allocation23 + $0x138] sm:$0xff]
          %v4062 = vld [vmem:[#allocation23 + $0x140] sm:$0xff]
          %v4063 = vld [vmem:[#allocation23 + $0x148] sm:$0xff]
          %v4064 = vld [vmem:[#allocation23 + $0x150] sm:$0xff]
          %v4065 = vld [vmem:[#allocation23 + $0x158] sm:$0xff]
          %v4066 = vld [vmem:[#allocation23 + $0x160] sm:$0xff]
          %v4067 = vld [vmem:[#allocation23 + $0x168] sm:$0xff]
          %v4068 = vld [vmem:[#allocation23 + $0x170] sm:$0xff]
          %v4069 = vld [vmem:[#allocation23 + $0x178] sm:$0xff]
          %v4070 = vld [vmem:[#allocation23 + $0x180] sm:$0xff]
          %v4071 = vld [vmem:[#allocation23 + $0x188] sm:$0xff]
          %v4072 = vld [vmem:[#allocation23 + $0x190] sm:$0xff]
          %v4073 = vld [vmem:[#allocation23 + $0x198] sm:$0xff]
          %v4074 = vld [vmem:[#allocation23 + $0x1a0] sm:$0xff]
          %v4075 = vld [vmem:[#allocation23 + $0x1a8] sm:$0xff]
          %v4076 = vld [vmem:[#allocation23 + $0x1b0] sm:$0xff]
          %v4077 = vld [vmem:[#allocation23 + $0x1b8] sm:$0xff]
          %v4078 = vld [vmem:[#allocation23 + $0x1c0] sm:$0xff]
          %v4079 = vld [vmem:[#allocation23 + $0x1c8] sm:$0xff]
          %v4080 = vld [vmem:[#allocation23 + $0x1d0] sm:$0xff]
          %v4081 = vld [vmem:[#allocation23 + $0x1d8] sm:$0xff]
          %v4082 = vld [vmem:[#allocation23 + $0x1e0] sm:$0xff]
          %v4083 = vld [vmem:[#allocation23 + $0x1e8] sm:$0xff]
          %v4084 = vld [vmem:[#allocation23 + $0x1f0] sm:$0xff]
          %v4085 = vld [vmem:[#allocation23 + $0x1f8] sm:$0xff]
          %v4150 = vunpack.c.l.b16 %v4022
          %v4151 = vunpack.c.h.b16 %v4022
          %v4152 = vunpack.c.l.b16 %v4023
          %v4153 = vunpack.c.h.b16 %v4023
          %v4154 = vunpack.c.l.b16 %v4024
          %v4155 = vunpack.c.h.b16 %v4024
          %v4156 = vunpack.c.l.b16 %v4025
          %v4157 = vunpack.c.h.b16 %v4025
          %v4158 = vunpack.c.l.b16 %v4026
          %v4159 = vunpack.c.h.b16 %v4026
          %v4160 = vunpack.c.l.b16 %v4027
          %v4161 = vunpack.c.h.b16 %v4027
          %v4162 = vunpack.c.l.b16 %v4028
          %v4163 = vunpack.c.h.b16 %v4028
          %v4164 = vunpack.c.l.b16 %v4029
          %v4165 = vunpack.c.h.b16 %v4029
          %v4166 = vunpack.c.l.b16 %v4030
          %v4167 = vunpack.c.h.b16 %v4030
          %v4168 = vunpack.c.l.b16 %v4031
          %v4169 = vunpack.c.h.b16 %v4031
          %v4170 = vunpack.c.l.b16 %v4032
          %v4171 = vunpack.c.h.b16 %v4032
          %v4172 = vunpack.c.l.b16 %v4033
          %v4173 = vunpack.c.h.b16 %v4033
          %v4174 = vunpack.c.l.b16 %v4034
          %v4175 = vunpack.c.h.b16 %v4034
          %v4176 = vunpack.c.l.b16 %v4035
          %v4177 = vunpack.c.h.b16 %v4035
          %v4178 = vunpack.c.l.b16 %v4036
          %v4179 = vunpack.c.h.b16 %v4036
          %v4180 = vunpack.c.l.b16 %v4037
          %v4181 = vunpack.c.h.b16 %v4037
          %v4182 = vunpack.c.l.b16 %v4038
          %v4183 = vunpack.c.h.b16 %v4038
          %v4184 = vunpack.c.l.b16 %v4039
          %v4185 = vunpack.c.h.b16 %v4039
          %v4186 = vunpack.c.l.b16 %v4040
          %v4187 = vunpack.c.h.b16 %v4040
          %v4188 = vunpack.c.l.b16 %v4041
          %v4189 = vunpack.c.h.b16 %v4041
          %v4190 = vunpack.c.l.b16 %v4042
          %v4191 = vunpack.c.h.b16 %v4042
          %v4192 = vunpack.c.l.b16 %v4043
          %v4193 = vunpack.c.h.b16 %v4043
          %v4194 = vunpack.c.l.b16 %v4044
          %v4195 = vunpack.c.h.b16 %v4044
          %v4196 = vunpack.c.l.b16 %v4045
          %v4197 = vunpack.c.h.b16 %v4045
          %v4198 = vunpack.c.l.b16 %v4046
          %v4199 = vunpack.c.h.b16 %v4046
          %v4200 = vunpack.c.l.b16 %v4047
          %v4201 = vunpack.c.h.b16 %v4047
          %v4202 = vunpack.c.l.b16 %v4048
          %v4203 = vunpack.c.h.b16 %v4048
          %v4204 = vunpack.c.l.b16 %v4049
          %v4205 = vunpack.c.h.b16 %v4049
          %v4206 = vunpack.c.l.b16 %v4050
          %v4207 = vunpack.c.h.b16 %v4050
          %v4208 = vunpack.c.l.b16 %v4051
          %v4209 = vunpack.c.h.b16 %v4051
          %v4210 = vunpack.c.l.b16 %v4052
          %v4211 = vunpack.c.h.b16 %v4052
          %v4212 = vunpack.c.l.b16 %v4053
          %v4213 = vunpack.c.h.b16 %v4053
          %v4214 = vunpack.c.l.b16 %v4054
          %v4215 = vunpack.c.h.b16 %v4054
          %v4216 = vunpack.c.l.b16 %v4055
          %v4217 = vunpack.c.h.b16 %v4055
          %v4218 = vunpack.c.l.b16 %v4056
          %v4219 = vunpack.c.h.b16 %v4056
          %v4220 = vunpack.c.l.b16 %v4057
          %v4221 = vunpack.c.h.b16 %v4057
          %v4222 = vunpack.c.l.b16 %v4058
          %v4223 = vunpack.c.h.b16 %v4058
          %v4224 = vunpack.c.l.b16 %v4059
          %v4225 = vunpack.c.h.b16 %v4059
          %v4226 = vunpack.c.l.b16 %v4060
          %v4227 = vunpack.c.h.b16 %v4060
          %v4228 = vunpack.c.l.b16 %v4061
          %v4229 = vunpack.c.h.b16 %v4061
          %v4230 = vunpack.c.l.b16 %v4062
          %v4231 = vunpack.c.h.b16 %v4062
          %v4232 = vunpack.c.l.b16 %v4063
          %v4233 = vunpack.c.h.b16 %v4063
          %v4234 = vunpack.c.l.b16 %v4064
          %v4235 = vunpack.c.h.b16 %v4064
          %v4236 = vunpack.c.l.b16 %v4065
          %v4237 = vunpack.c.h.b16 %v4065
          %v4238 = vunpack.c.l.b16 %v4066
          %v4239 = vunpack.c.h.b16 %v4066
          %v4240 = vunpack.c.l.b16 %v4067
          %v4241 = vunpack.c.h.b16 %v4067
          %v4242 = vunpack.c.l.b16 %v4068
          %v4243 = vunpack.c.h.b16 %v4068
          %v4244 = vunpack.c.l.b16 %v4069
          %v4245 = vunpack.c.h.b16 %v4069
          %v4246 = vunpack.c.l.b16 %v4070
          %v4247 = vunpack.c.h.b16 %v4070
          %v4248 = vunpack.c.l.b16 %v4071
          %v4249 = vunpack.c.h.b16 %v4071
          %v4250 = vunpack.c.l.b16 %v4072
          %v4251 = vunpack.c.h.b16 %v4072
          %v4252 = vunpack.c.l.b16 %v4073
          %v4253 = vunpack.c.h.b16 %v4073
          %v4254 = vunpack.c.l.b16 %v4074
          %v4255 = vunpack.c.h.b16 %v4074
          %v4256 = vunpack.c.l.b16 %v4075
          %v4257 = vunpack.c.h.b16 %v4075
          %v4258 = vunpack.c.l.b16 %v4076
          %v4259 = vunpack.c.h.b16 %v4076
          %v4260 = vunpack.c.l.b16 %v4077
          %v4261 = vunpack.c.h.b16 %v4077
          %v4262 = vunpack.c.l.b16 %v4078
          %v4263 = vunpack.c.h.b16 %v4078
          %v4264 = vunpack.c.l.b16 %v4079
          %v4265 = vunpack.c.h.b16 %v4079
          %v4266 = vunpack.c.l.b16 %v4080
          %v4267 = vunpack.c.h.b16 %v4080
          %v4268 = vunpack.c.l.b16 %v4081
          %v4269 = vunpack.c.h.b16 %v4081
          %v4270 = vunpack.c.l.b16 %v4082
          %v4271 = vunpack.c.h.b16 %v4082
          %v4272 = vunpack.c.l.b16 %v4083
          %v4273 = vunpack.c.h.b16 %v4083
          %v4274 = vunpack.c.l.b16 %v4084
          %v4275 = vunpack.c.h.b16 %v4084
          %v4276 = vunpack.c.l.b16 %v4085
          %v4277 = vunpack.c.h.b16 %v4085
          %v4278 = vpack.c.b16 %v4152, %v4150
          %v4279 = vpack.c.b16 %v4153, %v4151
          %v4280 = vpack.c.b16 %v4156, %v4154
          %v4281 = vpack.c.b16 %v4157, %v4155
          %v4282 = vpack.c.b16 %v4160, %v4158
          %v4283 = vpack.c.b16 %v4161, %v4159
          %v4284 = vpack.c.b16 %v4164, %v4162
          %v4285 = vpack.c.b16 %v4165, %v4163
          %v4286 = vpack.c.b16 %v4168, %v4166
          %v4287 = vpack.c.b16 %v4169, %v4167
          %v4288 = vpack.c.b16 %v4172, %v4170
          %v4289 = vpack.c.b16 %v4173, %v4171
          %v4290 = vpack.c.b16 %v4176, %v4174
          %v4291 = vpack.c.b16 %v4177, %v4175
          %v4292 = vpack.c.b16 %v4180, %v4178
          %v4293 = vpack.c.b16 %v4181, %v4179
          %v4294 = vpack.c.b16 %v4184, %v4182
          %v4295 = vpack.c.b16 %v4185, %v4183
          %v4296 = vpack.c.b16 %v4188, %v4186
          %v4297 = vpack.c.b16 %v4189, %v4187
          %v4298 = vpack.c.b16 %v4192, %v4190
          %v4299 = vpack.c.b16 %v4193, %v4191
          %v4300 = vpack.c.b16 %v4196, %v4194
          %v4301 = vpack.c.b16 %v4197, %v4195
          %v4302 = vpack.c.b16 %v4200, %v4198
          %v4303 = vpack.c.b16 %v4201, %v4199
          %v4304 = vpack.c.b16 %v4204, %v4202
          %v4305 = vpack.c.b16 %v4205, %v4203
          %v4306 = vpack.c.b16 %v4208, %v4206
          %v4307 = vpack.c.b16 %v4209, %v4207
          %v4308 = vpack.c.b16 %v4212, %v4210
          %v4309 = vpack.c.b16 %v4213, %v4211
          %v4310 = vpack.c.b16 %v4216, %v4214
          %v4311 = vpack.c.b16 %v4217, %v4215
          %v4312 = vpack.c.b16 %v4220, %v4218
          %v4313 = vpack.c.b16 %v4221, %v4219
          %v4314 = vpack.c.b16 %v4224, %v4222
          %v4315 = vpack.c.b16 %v4225, %v4223
          %v4316 = vpack.c.b16 %v4228, %v4226
          %v4317 = vpack.c.b16 %v4229, %v4227
          %v4318 = vpack.c.b16 %v4232, %v4230
          %v4319 = vpack.c.b16 %v4233, %v4231
          %v4320 = vpack.c.b16 %v4236, %v4234
          %v4321 = vpack.c.b16 %v4237, %v4235
          %v4322 = vpack.c.b16 %v4240, %v4238
          %v4323 = vpack.c.b16 %v4241, %v4239
          %v4324 = vpack.c.b16 %v4244, %v4242
          %v4325 = vpack.c.b16 %v4245, %v4243
          %v4326 = vpack.c.b16 %v4248, %v4246
          %v4327 = vpack.c.b16 %v4249, %v4247
          %v4328 = vpack.c.b16 %v4252, %v4250
          %v4329 = vpack.c.b16 %v4253, %v4251
          %v4330 = vpack.c.b16 %v4256, %v4254
          %v4331 = vpack.c.b16 %v4257, %v4255
          %v4332 = vpack.c.b16 %v4260, %v4258
          %v4333 = vpack.c.b16 %v4261, %v4259
          %v4334 = vpack.c.b16 %v4264, %v4262
          %v4335 = vpack.c.b16 %v4265, %v4263
          %v4336 = vpack.c.b16 %v4268, %v4266
          %v4337 = vpack.c.b16 %v4269, %v4267
          %v4338 = vpack.c.b16 %v4272, %v4270
          %v4339 = vpack.c.b16 %v4273, %v4271
          %v4340 = vpack.c.b16 %v4276, %v4274
          %v4341 = vpack.c.b16 %v4277, %v4275
          %4406 = vmatpush.bf16.msra.mxu0 %v4292
          %4407 = vmatpush.bf16.msra.mxu0 %v4290
          %4408 = vmatpush.bf16.msra.mxu0 %v4288
          %4409 = vmatpush.bf16.msra.mxu0 %v4286
          %4410 = vmatpush.bf16.msra.mxu0 %v4284
          %4411 = vmatpush.bf16.msra.mxu0 %v4282
          %4412 = vmatpush.bf16.msra.mxu0 %v4280
          %4413 = vmatpush.bf16.msra.mxu0 %v4278
          %4414 = vmatmul.bf16.gmra.mxu0 %v4018
          %v4415 = vpop.f32.mrf.mxu0
          %v4416 = vadd.f32 0.0, %v4415
          %v4417 = vpop.f32.mrf.mxu0
          %4418 = vdwg.mxu0
          %4419 = vmatpush.bf16.msra.mxu0 %v4308
          %4420 = vmatpush.bf16.msra.mxu0 %v4306
          %4421 = vmatpush.bf16.msra.mxu0 %v4304
          %4422 = vmatpush.bf16.msra.mxu0 %v4302
          %4423 = vmatpush.bf16.msra.mxu0 %v4300
          %4424 = vmatpush.bf16.msra.mxu0 %v4298
          %4425 = vmatpush.bf16.msra.mxu0 %v4296
          %4426 = vmatpush.bf16.msra.mxu0 %v4294
          %4427 = vmatmul.bf16.gmra.mxu0 %v4019
          %v4428 = vpop.f32.mrf.mxu0
          %v4429 = vadd.f32 %v4416, %v4428
          %v4430 = vpop.f32.mrf.mxu0
          %4431 = vdwg.mxu0
          %4432 = vmatpush.bf16.msra.mxu0 %v4324
          %4433 = vmatpush.bf16.msra.mxu0 %v4322
          %4434 = vmatpush.bf16.msra.mxu0 %v4320
          %4435 = vmatpush.bf16.msra.mxu0 %v4318
          %4436 = vmatpush.bf16.msra.mxu0 %v4316
          %4437 = vmatpush.bf16.msra.mxu0 %v4314
          %4438 = vmatpush.bf16.msra.mxu0 %v4312
          %4439 = vmatpush.bf16.msra.mxu0 %v4310
          %4440 = vmatmul.bf16.gmra.mxu0 %v4020
          %v4441 = vpop.f32.mrf.mxu0
          %v4442 = vadd.f32 %v4429, %v4441
          %v4443 = vpop.f32.mrf.mxu0
          %4444 = vdwg.mxu0
          %4445 = vmatpush.bf16.msra.mxu0 %v4340
          %4446 = vmatpush.bf16.msra.mxu0 %v4338
          %4447 = vmatpush.bf16.msra.mxu0 %v4336
          %4448 = vmatpush.bf16.msra.mxu0 %v4334
          %4449 = vmatpush.bf16.msra.mxu0 %v4332
          %4450 = vmatpush.bf16.msra.mxu0 %v4330
          %4451 = vmatpush.bf16.msra.mxu0 %v4328
          %4452 = vmatpush.bf16.msra.mxu0 %v4326
          %4453 = vmatmul.bf16.gmra.mxu0 %v4021
          %v4454 = vpop.f32.mrf.mxu0
          %v4455 = vadd.f32 %v4442, %v4454
          %v4456 = vpop.f32.mrf.mxu0
          %4457 = vdwg.mxu0
          %4458 = vmatpush.bf16.msra.mxu0 %v4293
          %4459 = vmatpush.bf16.msra.mxu0 %v4291
          %4460 = vmatpush.bf16.msra.mxu0 %v4289
          %4461 = vmatpush.bf16.msra.mxu0 %v4287
          %4462 = vmatpush.bf16.msra.mxu0 %v4285
          %4463 = vmatpush.bf16.msra.mxu0 %v4283
          %4464 = vmatpush.bf16.msra.mxu0 %v4281
          %4465 = vmatpush.bf16.msra.mxu0 %v4279
          %4466 = vmatmul.bf16.gmra.mxu0 %v4018
          %v4467 = vpop.f32.mrf.mxu0
          %v4468 = vadd.f32 0.0, %v4467
          %v4469 = vpop.f32.mrf.mxu0
          %4470 = vdwg.mxu0
          %4471 = vmatpush.bf16.msra.mxu0 %v4309
          %4472 = vmatpush.bf16.msra.mxu0 %v4307
          %4473 = vmatpush.bf16.msra.mxu0 %v4305
          %4474 = vmatpush.bf16.msra.mxu0 %v4303
          %4475 = vmatpush.bf16.msra.mxu0 %v4301
          %4476 = vmatpush.bf16.msra.mxu0 %v4299
          %4477 = vmatpush.bf16.msra.mxu0 %v4297
          %4478 = vmatpush.bf16.msra.mxu0 %v4295
          %4479 = vmatmul.bf16.gmra.mxu0 %v4019
          %v4480 = vpop.f32.mrf.mxu0
          %v4481 = vadd.f32 %v4468, %v4480
          %v4482 = vpop.f32.mrf.mxu0
          %4483 = vdwg.mxu0
          %4484 = vmatpush.bf16.msra.mxu0 %v4325
          %4485 = vmatpush.bf16.msra.mxu0 %v4323
          %4486 = vmatpush.bf16.msra.mxu0 %v4321
          %4487 = vmatpush.bf16.msra.mxu0 %v4319
          %4488 = vmatpush.bf16.msra.mxu0 %v4317
          %4489 = vmatpush.bf16.msra.mxu0 %v4315
          %4490 = vmatpush.bf16.msra.mxu0 %v4313
          %4491 = vmatpush.bf16.msra.mxu0 %v4311
          %4492 = vmatmul.bf16.gmra.mxu0 %v4020
          %v4493 = vpop.f32.mrf.mxu0
          %v4494 = vadd.f32 %v4481, %v4493
          %v4495 = vpop.f32.mrf.mxu0
          %4496 = vdwg.mxu0
          %4497 = vmatpush.bf16.msra.mxu0 %v4341
          %4498 = vmatpush.bf16.msra.mxu0 %v4339
          %4499 = vmatpush.bf16.msra.mxu0 %v4337
          %4500 = vmatpush.bf16.msra.mxu0 %v4335
          %4501 = vmatpush.bf16.msra.mxu0 %v4333
          %4502 = vmatpush.bf16.msra.mxu0 %v4331
          %4503 = vmatpush.bf16.msra.mxu0 %v4329
          %4504 = vmatpush.bf16.msra.mxu0 %v4327
          %4505 = vmatmul.bf16.gmra.mxu0 %v4021
          %v4506 = vpop.f32.mrf.mxu0
          %v4507 = vadd.f32 %v4494, %v4506
          %v4508 = vpop.f32.mrf.mxu0
          %4509 = vdwg.mxu0
          %v4510 = vld [vmem:[%s20] sm:$0x3]
          %v4512 = vperm.slane %v4510, 0
          %v4513 = vperm.slane %v4510, 1
          %v4516 = vmul.f32 %v4455, %v4512
          %v4517 = vmul.f32 %v4507, %v4513
          %v4518 = vld [vmem:[%s21] sm:$0x3]
          %v4520 = vperm.slane %v4518, 0
          %v4521 = vperm.slane %v4518, 1
          %v4524 = vadd.f32 %v4516, %v4520
          %v4525 = vadd.f32 %v4517, %v4521
          %vm4526 = vcmp.ge.f32.partialorder %v4524, 0.0
          %vm4527 = vcmp.ge.f32.partialorder %v4525, 0.0
          %v4528 = vmul.f32 %v4524, 0.2
          %v4529 = vmul.f32 %v4525, 0.2
          %v4530 = vsel %vm4526, %v4524, %v4528
          %v4531 = vsel %vm4527, %v4525, %v4529
          %v4532 = vpack.c.bf16 %v4530, %v4530
          %v4533 = vpack.c.bf16 %v4531, %v4531
          %v4534 = vld [vmem:[%s22] sm:$0xf]
          %v4535 = vld [vmem:[%s22 + $0x4] sm:$0xf]
          %v4536 = vld [vmem:[%s22 + $0x8] sm:$0xf]
          %v4537 = vld [vmem:[%s22 + $0xc] sm:$0xf]
          %v4538 = vld [vmem:[%s22 + $0x10] sm:$0xf]
          %v4539 = vld [vmem:[%s22 + $0x14] sm:$0xf]
          %v4540 = vld [vmem:[%s22 + $0x18] sm:$0xf]
          %v4541 = vld [vmem:[%s22 + $0x1c] sm:$0xf]
          %v4542 = vld [vmem:[%s22 + $0x20] sm:$0xf]
          %v4543 = vld [vmem:[%s22 + $0x24] sm:$0xf]
          %v4544 = vld [vmem:[%s22 + $0x28] sm:$0xf]
          %v4545 = vld [vmem:[%s22 + $0x2c] sm:$0xf]
          %v4546 = vld [vmem:[%s22 + $0x30] sm:$0xf]
          %v4547 = vld [vmem:[%s22 + $0x34] sm:$0xf]
          %v4548 = vld [vmem:[%s22 + $0x38] sm:$0xf]
          %v4549 = vld [vmem:[%s22 + $0x3c] sm:$0xf]
          %v4550 = vld [vmem:[%s22 + $0x40] sm:$0xf]
          %v4551 = vld [vmem:[%s22 + $0x44] sm:$0xf]
          %v4552 = vld [vmem:[%s22 + $0x48] sm:$0xf]
          %v4553 = vld [vmem:[%s22 + $0x4c] sm:$0xf]
          %v4554 = vld [vmem:[%s22 + $0x50] sm:$0xf]
          %v4555 = vld [vmem:[%s22 + $0x54] sm:$0xf]
          %v4556 = vld [vmem:[%s22 + $0x58] sm:$0xf]
          %v4557 = vld [vmem:[%s22 + $0x5c] sm:$0xf]
          %v4558 = vld [vmem:[%s22 + $0x60] sm:$0xf]
          %v4559 = vld [vmem:[%s22 + $0x64] sm:$0xf]
          %v4560 = vld [vmem:[%s22 + $0x68] sm:$0xf]
          %v4561 = vld [vmem:[%s22 + $0x6c] sm:$0xf]
          %v4562 = vld [vmem:[%s22 + $0x70] sm:$0xf]
          %v4563 = vld [vmem:[%s22 + $0x74] sm:$0xf]
          %v4564 = vld [vmem:[%s22 + $0x78] sm:$0xf]
          %v4565 = vld [vmem:[%s22 + $0x7c] sm:$0xf]
          %v4566 = vld [vmem:[#allocation3] sm:$0x1]
          %v4599 = vunpack.c.l.b16 %v4534
          %v4600 = vunpack.c.l.b16 %v4535
          %v4601 = vunpack.c.l.b16 %v4536
          %v4602 = vunpack.c.l.b16 %v4537
          %v4603 = vunpack.c.l.b16 %v4538
          %v4604 = vunpack.c.l.b16 %v4539
          %v4605 = vunpack.c.l.b16 %v4540
          %v4606 = vunpack.c.l.b16 %v4541
          %v4607 = vunpack.c.l.b16 %v4542
          %v4608 = vunpack.c.l.b16 %v4543
          %v4609 = vunpack.c.l.b16 %v4544
          %v4610 = vunpack.c.l.b16 %v4545
          %v4611 = vunpack.c.l.b16 %v4546
          %v4612 = vunpack.c.l.b16 %v4547
          %v4613 = vunpack.c.l.b16 %v4548
          %v4614 = vunpack.c.l.b16 %v4549
          %v4615 = vunpack.c.l.b16 %v4550
          %v4616 = vunpack.c.l.b16 %v4551
          %v4617 = vunpack.c.l.b16 %v4552
          %v4618 = vunpack.c.l.b16 %v4553
          %v4619 = vunpack.c.l.b16 %v4554
          %v4620 = vunpack.c.l.b16 %v4555
          %v4621 = vunpack.c.l.b16 %v4556
          %v4622 = vunpack.c.l.b16 %v4557
          %v4623 = vunpack.c.l.b16 %v4558
          %v4624 = vunpack.c.l.b16 %v4559
          %v4625 = vunpack.c.l.b16 %v4560
          %v4626 = vunpack.c.l.b16 %v4561
          %v4627 = vunpack.c.l.b16 %v4562
          %v4628 = vunpack.c.l.b16 %v4563
          %v4629 = vunpack.c.l.b16 %v4564
          %v4630 = vunpack.c.l.b16 %v4565
          %v4631 = vpack.c.b16 %v4600, %v4599
          %v4632 = vpack.c.b16 %v4602, %v4601
          %v4633 = vpack.c.b16 %v4604, %v4603
          %v4634 = vpack.c.b16 %v4606, %v4605
          %v4635 = vpack.c.b16 %v4608, %v4607
          %v4636 = vpack.c.b16 %v4610, %v4609
          %v4637 = vpack.c.b16 %v4612, %v4611
          %v4638 = vpack.c.b16 %v4614, %v4613
          %v4639 = vpack.c.b16 %v4616, %v4615
          %v4640 = vpack.c.b16 %v4618, %v4617
          %v4641 = vpack.c.b16 %v4620, %v4619
          %v4642 = vpack.c.b16 %v4622, %v4621
          %v4643 = vpack.c.b16 %v4624, %v4623
          %v4644 = vpack.c.b16 %v4626, %v4625
          %v4645 = vpack.c.b16 %v4628, %v4627
          %v4646 = vpack.c.b16 %v4630, %v4629
          %4663 = vmatpush.bf16.msra.mxu0 %v4638
          %4664 = vmatpush.bf16.msra.mxu0 %v4637
          %4665 = vmatpush.bf16.msra.mxu0 %v4636
          %4666 = vmatpush.bf16.msra.mxu0 %v4635
          %4667 = vmatpush.bf16.msra.mxu0 %v4634
          %4668 = vmatpush.bf16.msra.mxu0 %v4633
          %4669 = vmatpush.bf16.msra.mxu0 %v4632
          %4670 = vmatpush.bf16.msra.mxu0 %v4631
          %4671 = vmatmul.bf16.gmra.mxu0 %v4532
          %v4672 = vpop.f32.mrf.mxu0
          %v4673 = vadd.f32 %v4566, %v4672
          %v4674 = vpop.f32.mrf.mxu0
          %4675 = vdwg.mxu0
          %4676 = vmatpush.bf16.msra.mxu0 %v4646
          %4677 = vmatpush.bf16.msra.mxu0 %v4645
          %4678 = vmatpush.bf16.msra.mxu0 %v4644
          %4679 = vmatpush.bf16.msra.mxu0 %v4643
          %4680 = vmatpush.bf16.msra.mxu0 %v4642
          %4681 = vmatpush.bf16.msra.mxu0 %v4641
          %4682 = vmatpush.bf16.msra.mxu0 %v4640
          %4683 = vmatpush.bf16.msra.mxu0 %v4639
          %4684 = vmatmul.bf16.gmra.mxu0 %v4533
          %v4685 = vpop.f32.mrf.mxu0
          %v4686 = vadd.f32 %v4673, %v4685
          %v4687 = vpop.f32.mrf.mxu0
          %4688 = vdwg.mxu0
          %vm4689 = vcmask 0
          %4690 = vst.msk [vmem:[%s960] sm:$0x1] %vm4689, %v4686
        $region180: #{tpu_custom_call.1} parent=115 // pred_fallthru
          _
        %p4691 = scmp.lt.s32.totalorder %s48, 1
        %s4692 = scalar_select %p4691, %s48, 1
        %s4693 = scalar_lea.vmem %s24, %s4692
        // Predicated region
        $region181: #{tpu_custom_call.1} parent=115 // pred_check
          %p4694 = pneg %p585
        $region182: #{tpu_custom_call.1} parent=115 // pred_check_branch
          %4696 = sbr.rel (%p4694) target = $region184
        $region183: #{tpu_custom_call.1} parent=115 // pred_region
          _
        $region184: #{tpu_custom_call.1} parent=115 // pred_fallthru
          _
      $region116: #{tpu_custom_call.1} parent=5 // pred_fallthru
        _
      %p4697 = scmp.le.s32.totalorder 2, %s39
      // Predicated region
      $region185: #{tpu_custom_call.1} parent=5 // pred_check
        %p4698 = pneg %p4697
      $region186: #{tpu_custom_call.1} parent=5 // pred_check_branch
        %4700 = sbr.rel (%p4698) target = $region188
      $region187: #{tpu_custom_call.1} parent=5 // pred_region
        %s4701 = ssub.s32 %s39, 2
        // Predicated region
        $region189: #{tpu_custom_call.1} parent=187 // pred_check
          %p4702 = pneg %p591
        $region190: #{tpu_custom_call.1} parent=187 // pred_check_branch
          %4704 = sbr.rel (%p4702) target = $region192
        $region191: #{tpu_custom_call.1} parent=187 // pred_region
          %p4705 = scmp.lt.s32.totalorder %s50, 1
          %s4706 = scalar_select %p4705, %s50, 1
          %s4707 = scalar_lea.vmem %s24, %s4706
        $region192: #{tpu_custom_call.1} parent=187 // pred_fallthru
          _
      $region188: #{tpu_custom_call.1} parent=5 // pred_fallthru
        _
    $region6: #{tpu_custom_call.1} parent=1 // loop_footer
      %s43 = sadd.s32 1, %s39
    $region7: #{tpu_custom_call.1} parent=1 // loop_footer_branch
      %38 = sbr.rel target = $region3
    $region8: #{tpu_custom_call.1} parent=1 // loop_exit
      _
    %4708 = vsyncpa [#allocation5], 1
    %s4709 = scalar_lea.sflag [#allocation5], 1
    %4710 = vsyncpa %s4709, 1
    %4711 = vsyncpa [#allocation7], 1
    %4712 = vsyncpa [#allocation10], 1
    %4713 = vsyncpa [#allocation13], 1
    %4714 = vsyncpa [#allocation16], 1
    %4715 = vsyncpa [#allocation19], 1
    %4716 = vsyncpa [#allocation22], 1

</llo_original>
